<compile_context>
chip_gen: v7x
topology: tpu7x:2x2x1
jax: 0.10.0
libtpu: 0.0.40
codegen_flags: <defaults>
</compile_context>

<pallas_src>
import jax
import jax.numpy as jnp
from jax import lax
from jax.experimental import pallas as pl
from jax.experimental.pallas import tpu as pltpu

_VMEM = pl.BlockSpec(memory_space=pltpu.MemorySpace.VMEM)
_SMEM = pl.BlockSpec(memory_space=pltpu.MemorySpace.SMEM)


def _f32(shape):
    return jax.ShapeDtypeStruct(shape, jnp.float32)


def _dot(a, b):
    return jnp.dot(a, b, preferred_element_type=jnp.float32)


def _dot_bt(a, b):
    """a @ b.T with the transpose folded into the contraction (no XLU copy)."""
    return lax.dot_general(a, b, (((1,), (1,)), ((), ())),
                           preferred_element_type=jnp.float32)


def _dot_at(a, b):
    """a.T @ b with the transpose folded into the contraction (no XLU copy)."""
    return lax.dot_general(a, b, (((0,), (0,)), ((), ())),
                           preferred_element_type=jnp.float32)


def _eye_mask(n):
    r = lax.broadcasted_iota(jnp.int32, (n, n), 0)
    c = lax.broadcasted_iota(jnp.int32, (n, n), 1)
    return r == c


def _pool_select(x, wp, bp, k):
    """In-kernel top-k node selection (Pool + top_k_graph gather machinery).

    Returns (S, S_scaled):
      S        (k, n): one-hot rows; row t selects the node with the t-th
               largest sigmoid score (ties -> lowest index, like torch.topk).
      S_scaled (k, n): S * sigmoid(score), so S_scaled @ X is the gathered,
               value-scaled feature matrix (new_h * values in top_k_graph).
    Rank-based construction (no sort, no dynamic indexing):
      rank[j] = #{l: s_l > s_j} + #{l < j: s_l == s_j};  S[t, j] = (rank[j]==t)
    """
    n = x.shape[0]
    s_row = lax.dot_general(wp, x, (((0,), (1,)), ((), ())),
                            preferred_element_type=jnp.float32) + bp     # (1, n)
    sig_row = 1.0 / (1.0 + jnp.exp(-s_row))                              # (1, n)
    eye = _eye_mask(n)
    # bitwise-exact column copy of the scores via masked lane-reduce
    # (avoids a sub-tile transpose and keeps the rank comparison consistent)
    sig_col = jnp.sum(jnp.where(eye, sig_row, 0.0), axis=1, keepdims=True)
    li = lax.broadcasted_iota(jnp.int32, (n, n), 0)
    ji = lax.broadcasted_iota(jnp.int32, (n, n), 1)
    before = (sig_col > sig_row) | ((sig_col == sig_row) & (li < ji))
    rank = jnp.sum(jnp.where(before, 1.0, 0.0), axis=0, keepdims=True)   # (1, n)
    t = lax.broadcasted_iota(jnp.int32, (k, n), 0).astype(jnp.float32)
    sel = jnp.where(t == rank, 1.0, 0.0)                                 # (k, n)
    return sel, sel * sig_row


def _make_unet_kernel(num_levels, keep):
    """Fused GraphUnet kernel: normalize_adj -> start / down+pool / bottom /
    unpool+up / end GCNs in a single invocation.  keep[i] = static number of
    nodes retained by pool level i."""

    def kernel(*refs):
        it = iter(refs)
        lr_ref, ws_ref, bs_ref = next(it), next(it), next(it)
        wd_refs = [next(it) for _ in range(num_levels)]
        bd_refs = [next(it) for _ in range(num_levels)]
        wp_refs = [next(it) for _ in range(num_levels)]
        bp_ref = next(it)                                    # SMEM (L,)
        wb_ref, bb_ref = next(it), next(it)
        wu_refs = [next(it) for _ in range(num_levels)]
        bu_refs = [next(it) for _ in range(num_levels)]
        wea_ref, web_ref, be_ref = next(it), next(it), next(it)
        a0_ref, x0_ref, net_ref = next(it), next(it), next(it)

        # normalize_adj_torch: ((A @ D^-1/2).T) @ D^-1/2  ==  D A^T D
        lr = lr_ref[...]
        r = lax.rsqrt(jnp.sum(lr, axis=1, keepdims=True))
        r = jnp.where(jnp.isinf(r), 0.0, r)                  # torch masks inf only
        g = (lr * r).T * r
        a0_ref[...] = g

        # start GCN with X = I:  (A @ I) @ W + b  ==  A @ W + b
        h = _dot(g, ws_ref[...]) + bs_ref[...]
        x0_ref[...] = h
        org = h

        adj_ms, down_outs, sels = [], [], []
        for i in range(num_levels):
            # down GCN (GSR-Net GCN: no activation, dropout p=0)
            h = _dot(_dot(g, h), wd_refs[i][...]) + bd_refs[i][...]
            adj_ms.append(g)
            down_outs.append(h)
            # Pool: sigmoid(proj(h)) -> top-k selection matrix
            sel, sel_scaled = _pool_select(h, wp_refs[i][...], bp_ref[i],
                                           keep[i])
            sels.append(sel)
            # canonical top_k_graph adjacency update: 2-hop densify, slice,
            # norm_g.  (pooled graph is symmetric, so torch's column-broadcast
            # division by row-degrees equals division by column sums here.)
            gb = jnp.where(g != 0.0, 1.0, 0.0)
            two_hop = jnp.where(_dot(gb, gb) != 0.0, 1.0, 0.0)
            pooled = _dot_bt(_dot(sel, two_hop), sel)        # S @ G2 @ S^T
            g = pooled / jnp.sum(pooled, axis=0, keepdims=True)
            h = _dot(sel_scaled, h)                          # gather + value scale

        # bottom GCN
        h = _dot(_dot(g, h), wb_ref[...]) + bb_ref[...]

        # up path: unpool scatter (S^T @ h) + up GCN + residual
        for i in range(num_levels):
            up = num_levels - 1 - i
            g = adj_ms[up]
            h = _dot_at(sels[up], h)
            h = _dot(_dot(g, h), wu_refs[i][...]) + bu_refs[i][...]
            h = h + down_outs[up]

        # end GCN on concat([h, org]) realized with split weights (no concat)
        net_ref[...] = (_dot(_dot(g, h), wea_ref[...]) +
                        _dot(_dot(g, org), web_ref[...]) + be_ref[...])

    return kernel


def _tail_kernel(u_ref, net_ref, gsrws_ref, gc1w_ref, gc2w_ref,
                 out_ref, z_ref):
    """GSRLayer + gc1 + gc2 + final symmetrize / unit-diagonal / relu."""
    hr = out_ref.shape[0]
    eye = _eye_mask(hr)
    # GSRLayer: (W @ [I_lr; I_lr]) @ U^T @ net ; W @ [I;I] pre-folded (gsrws).
    b = _dot_bt(gsrws_ref[...], u_ref[...])                  # (hr, lr) = ws @ U^T
    adj = jnp.where(eye, 1.0, jnp.abs(_dot(b, net_ref[...])))
    out_ref[...] = adj
    # Z = adj @ adj^T is exactly symmetric -> the (X + X.T)/2 step is elided.
    zz = jnp.where(eye, 1.0, _dot_bt(adj, adj))
    # GraphConvolution: relu(adj @ (X @ W)), no bias
    h1 = jnp.maximum(_dot(adj, _dot(zz, gc1w_ref[...])), 0.0)
    h2 = jnp.maximum(_dot(adj, _dot(h1, gc2w_ref[...])), 0.0)
    z = (h2 + h2.T) * 0.5
    z_ref[...] = jnp.maximum(jnp.where(eye, 1.0, z), 0.0)


def gsrnet_forward(prepped, lr_adj, ks, lr_dim, hr_dim):
    num_levels = len(ks)
    dim = prepped["ws"].shape[1]

    # static per-level retained-node counts (shapes of the selection matrices)
    keep, n = [], lr_dim
    for frac in ks:
        k = max(2, int(frac * n))
        keep.append(k)
        n = k

    args = [lr_adj, prepped["ws"], prepped["bs"],
            *prepped["wd"], *prepped["bd"], *prepped["wp"],
            prepped["bp"],
            prepped["wb"], prepped["bb"],
            *prepped["wu"], *prepped["bu"],
            prepped["we_a"], prepped["we_b"], prepped["be"]]
    in_specs = [_VMEM] * len(args)
    in_specs[3 + 3 * num_levels] = _SMEM          # stacked pool biases -> SMEM

    a0, start_gcn_outs, net_outs = pl.pallas_call(
        _make_unet_kernel(num_levels, tuple(keep)),
        out_shape=(_f32((lr_dim, lr_dim)), _f32((lr_dim, dim)),
                   _f32((lr_dim, hr_dim))),
        in_specs=in_specs,
        out_specs=(_VMEM, _VMEM, _VMEM),
    )(*args)

    # TODO(synk): torch.symeig has no Pallas equivalent; eigenvectors come from
    # jnp.linalg.eigh (ascending eigenvalues, columns = eigenvectors; column
    # signs are arbitrary so bitwise parity with the torch reference may flip).
    _, u = jnp.linalg.eigh(a0)

    outputs, z = pl.pallas_call(
        _tail_kernel,
        out_shape=(_f32((hr_dim, hr_dim)), _f32((hr_dim, hr_dim))),
        in_specs=[_VMEM] * 5,
        out_specs=(_VMEM, _VMEM),
    )(u, net_outs, prepped["gsr_ws"], prepped["gc1_w"], prepped["gc2_w"])

    return z, net_outs, start_gcn_outs, outputs


# ----------------------------- parameter handling ----------------------------

def _init_linear(key, in_dim, out_dim):
    kw, kb = jax.random.split(key)
    bound = 1.0 / float(in_dim) ** 0.5
    w = jax.random.uniform(kw, (in_dim, out_dim), jnp.float32, -bound, bound)
    b = jax.random.uniform(kb, (1, out_dim), jnp.float32, -bound, bound)
    return w, b


def _init_xavier(key, in_dim, out_dim):
    bound = (6.0 / (in_dim + out_dim)) ** 0.5
    return jax.random.uniform(key, (in_dim, out_dim), jnp.float32, -bound, bound)


def init_params(key, lr_dim, hr_dim, hidden_dim, ks, dim):
    keys = iter(jax.random.split(key, 6 + 3 * len(ks)))
    unet = {
        "start": _init_linear(next(keys), lr_dim, dim),
        "bottom": _init_linear(next(keys), dim, dim),
        "end": _init_linear(next(keys), 2 * dim, hr_dim),
        "down": [_init_linear(next(keys), dim, dim) for _ in ks],
        "up": [_init_linear(next(keys), dim, dim) for _ in ks],
        "pools": [_init_linear(next(keys), dim, 1) for _ in ks],
    }
    return {
        "unet": unet,
        "gsr_w": _init_xavier(next(keys), hr_dim, hr_dim),   # GSRLayer glorot
        "gc1_w": _init_xavier(next(keys), hr_dim, hidden_dim),
        "gc2_w": _init_xavier(next(keys), hidden_dim, hr_dim),
    }


def prep_params(params, lr_dim, dim):
    """One-time, input-independent weight prep (hoisted off the per-call path):
    end-GCN weight split, GSRLayer W @ [I_lr; I_lr] column fold, pool-bias
    stacking for SMEM."""
    u = params["unet"]
    we, be = u["end"]
    gsr_w = params["gsr_w"]
    return {
        "ws": u["start"][0], "bs": u["start"][1],
        "wd": [w for w, _ in u["down"]], "bd": [b for _, b in u["down"]],
        "wp": [w for w, _ in u["pools"]],                    # (dim, 1)
        "bp": jnp.concatenate([b.reshape(1) for _, b in u["pools"]]),   # (L,)
        "wb": u["bottom"][0], "bb": u["bottom"][1],
        "wu": [w for w, _ in u["up"]], "bu": [b for _, b in u["up"]],
        "we_a": we[:dim, :], "we_b": we[dim:, :], "be": be,
        "gsr_ws": gsr_w[:, :lr_dim] + gsr_w[:, lr_dim:],     # W @ [I;I]
        "gc1_w": params["gc1_w"], "gc2_w": params["gc2_w"],
    }


# ----------------------------------- main ------------------------------------

if __name__ == "__main__":
    # args: lr_dim=16, hr_dim=32 (= 2*lr_dim for GSRLayer), hidden_dim=32,
    #       ks=(0.9, 0.7), GraphUnet internal dim=32
    lr_dim, hr_dim, hidden_dim = 16, 32, 32
    ks = (0.9, 0.7)
    unet_dim = 32
    assert hr_dim == 2 * lr_dim

    key = jax.random.PRNGKey(0)
    k_in, k_p = jax.random.split(key)
    x = jax.random.uniform(k_in, (lr_dim, lr_dim), jnp.float32)
    lr_adj = (x + x.T) * 0.5                  # symmetric non-negative connectome

    params = init_params(k_p, lr_dim, hr_dim, hidden_dim, ks, unet_dim)
    prepped = prep_params(params, lr_dim, unet_dim)      # one-time weight prep

    fwd = jax.jit(gsrnet_forward, static_argnums=(2, 3, 4))
    z, net_outs, start_gcn_outs, outputs = fwd(prepped, lr_adj, ks,
                                               lr_dim, hr_dim)
    jax.block_until_ready((z, net_outs, start_gcn_outs, outputs))

    assert z.shape == (hr_dim, hr_dim)
    assert net_outs.shape == (lr_dim, hr_dim)
    assert start_gcn_outs.shape == (lr_dim, unet_dim)
    assert outputs.shape == (hr_dim, hr_dim)
    assert bool(jnp.all(jnp.isfinite(z)))
    assert bool(jnp.allclose(jnp.diagonal(z), 1.0))
    assert bool(jnp.allclose(jnp.diagonal(outputs), 1.0))
    print("KERNEL_OK")
</pallas_src>

<mosaic_0001>
module attributes {stable_mosaic.version = 11 : i64} {
  func.func @kernel(%arg0: memref<16x16xf32, #tpu.memory_space<vmem>>, %arg1: memref<16x32xf32, #tpu.memory_space<vmem>>, %arg2: memref<1x32xf32, #tpu.memory_space<vmem>>, %arg3: memref<32x32xf32, #tpu.memory_space<vmem>>, %arg4: memref<32x32xf32, #tpu.memory_space<vmem>>, %arg5: memref<1x32xf32, #tpu.memory_space<vmem>>, %arg6: memref<1x32xf32, #tpu.memory_space<vmem>>, %arg7: memref<32x1xf32, #tpu.memory_space<vmem>>, %arg8: memref<32x1xf32, #tpu.memory_space<vmem>>, %arg9: memref<2xf32, #tpu.memory_space<smem>>, %arg10: memref<32x32xf32, #tpu.memory_space<vmem>>, %arg11: memref<1x32xf32, #tpu.memory_space<vmem>>, %arg12: memref<32x32xf32, #tpu.memory_space<vmem>>, %arg13: memref<32x32xf32, #tpu.memory_space<vmem>>, %arg14: memref<1x32xf32, #tpu.memory_space<vmem>>, %arg15: memref<1x32xf32, #tpu.memory_space<vmem>>, %arg16: memref<32x32xf32, #tpu.memory_space<vmem>>, %arg17: memref<32x32xf32, #tpu.memory_space<vmem>>, %arg18: memref<1x32xf32, #tpu.memory_space<vmem>>, %arg19: memref<16x16xf32, #tpu.memory_space<vmem>>, %arg20: memref<16x32xf32, #tpu.memory_space<vmem>>, %arg21: memref<16x32xf32, #tpu.memory_space<vmem>>) attributes {dimension_semantics = [], scalar_prefetch = 0 : i64, scratch_operands = 0 : i64, tpu.core_type = #tpu.core_type<tc>} {
    %c0 = arith.constant 0 : index
    %c0_0 = arith.constant 0 : index
    %0 = vector.load %arg0[%c0, %c0_0] : memref<16x16xf32, #tpu.memory_space<vmem>>, vector<16x16xf32>
    %cst = arith.constant dense<0.000000e+00> : vector<16xf32>
    %1 = vector.multi_reduction <add>, %0, %cst [1] : vector<16x16xf32> to vector<16xf32>
    %2 = vector.shape_cast %1 : vector<16xf32> to vector<16x1xf32>
    %3 = math.rsqrt %2 : vector<16x1xf32>
    %4 = math.absf %3 : vector<16x1xf32>
    %cst_1 = arith.constant 0x7F800000 : f32
    %5 = vector.broadcast %cst_1 : f32 to vector<16x1xf32>
    %6 = arith.cmpf oeq, %4, %5 : vector<16x1xf32>
    %cst_2 = arith.constant 0.000000e+00 : f32
    %7 = vector.broadcast %cst_2 : f32 to vector<16x1xf32>
    %8 = arith.select %6, %7, %3 : vector<16x1xi1>, vector<16x1xf32>
    %9 = vector.broadcast %8 : vector<16x1xf32> to vector<16x16xf32>
    %10 = arith.mulf %0, %9 : vector<16x16xf32>
    %11 = tpu.transpose %10, [1, 0] : vector<16x16xf32> -> vector<16x16xf32>
    %12 = vector.broadcast %8 : vector<16x1xf32> to vector<16x16xf32>
    %13 = arith.mulf %11, %12 : vector<16x16xf32>
    %c0_3 = arith.constant 0 : index
    %c0_4 = arith.constant 0 : index
    %14 = vector.load %arg19[%c0_3, %c0_4] : memref<16x16xf32, #tpu.memory_space<vmem>>, vector<16x16xf32>
    tpu.vector_store %arg19[%c0_3, %c0_4], %13 {strides = array<i32>} : memref<16x16xf32, #tpu.memory_space<vmem>>, vector<16x16xf32>,
    %c0_5 = arith.constant 0 : index
    %c0_6 = arith.constant 0 : index
    %15 = vector.load %arg1[%c0_5, %c0_6] : memref<16x32xf32, #tpu.memory_space<vmem>>, vector<16x32xf32>
    %cst_7 = arith.constant dense<0.000000e+00> : vector<16x32xf32>
    %16 = tpu.matmul %13, %15, %cst_7 {dimension_numbers = #tpu.dot_dimension_numbers<[1], [0], [0], [1], [0, 0, 1, 1], [], []>} : vector<16x16xf32>, vector<16x32xf32>, vector<16x32xf32> -> vector<16x32xf32>
    %c0_8 = arith.constant 0 : index
    %c0_9 = arith.constant 0 : index
    %17 = vector.load %arg2[%c0_8, %c0_9] : memref<1x32xf32, #tpu.memory_space<vmem>>, vector<1x32xf32>
    %18 = vector.broadcast %17 : vector<1x32xf32> to vector<16x32xf32>
    %19 = arith.addf %16, %18 : vector<16x32xf32>
    %c0_10 = arith.constant 0 : index
    %c0_11 = arith.constant 0 : index
    %20 = vector.load %arg20[%c0_10, %c0_11] : memref<16x32xf32, #tpu.memory_space<vmem>>, vector<16x32xf32>
    tpu.vector_store %arg20[%c0_10, %c0_11], %19 {strides = array<i32>} : memref<16x32xf32, #tpu.memory_space<vmem>>, vector<16x32xf32>,
    %cst_12 = arith.constant dense<0.000000e+00> : vector<16x32xf32>
    %21 = tpu.matmul %13, %19, %cst_12 {dimension_numbers = #tpu.dot_dimension_numbers<[1], [0], [0], [1], [0, 0, 1, 1], [], []>} : vector<16x16xf32>, vector<16x32xf32>, vector<16x32xf32> -> vector<16x32xf32>
    %c0_13 = arith.constant 0 : index
    %c0_14 = arith.constant 0 : index
    %22 = vector.load %arg3[%c0_13, %c0_14] : memref<32x32xf32, #tpu.memory_space<vmem>>, vector<32x32xf32>
    %cst_15 = arith.constant dense<0.000000e+00> : vector<16x32xf32>
    %23 = tpu.matmul %21, %22, %cst_15 {dimension_numbers = #tpu.dot_dimension_numbers<[1], [0], [0], [1], [0, 0, 1, 1], [], []>} : vector<16x32xf32>, vector<32x32xf32>, vector<16x32xf32> -> vector<16x32xf32>
    %c0_16 = arith.constant 0 : index
    %c0_17 = arith.constant 0 : index
    %24 = vector.load %arg5[%c0_16, %c0_17] : memref<1x32xf32, #tpu.memory_space<vmem>>, vector<1x32xf32>
    %25 = vector.broadcast %24 : vector<1x32xf32> to vector<16x32xf32>
    %26 = arith.addf %23, %25 : vector<16x32xf32>
    %c0_18 = arith.constant 0 : index
    %c0_19 = arith.constant 0 : index
    %27 = vector.load %arg7[%c0_18, %c0_19] : memref<32x1xf32, #tpu.memory_space<vmem>>, vector<32x1xf32>
    %c0_20 = arith.constant 0 : index
    %28 = memref.load %arg9[%c0_20] : memref<2xf32, #tpu.memory_space<smem>>
    %cst_21 = arith.constant dense<0.000000e+00> : vector<1x16xf32>
    %29 = tpu.matmul %27, %26, %cst_21 {dimension_numbers = #tpu.dot_dimension_numbers<[0], [1], [1], [0], [0, 1, 1, 0], [], []>} : vector<32x1xf32>, vector<16x32xf32>, vector<1x16xf32> -> vector<1x16xf32>
    %30 = vector.broadcast %28 : f32 to vector<1x16xf32>
    %31 = arith.addf %29, %30 : vector<1x16xf32>
    %cst_22 = arith.constant 0.000000e+00 : f32
    %32 = vector.broadcast %cst_22 : f32 to vector<1x16xf32>
    %33 = arith.subf %32, %31 : vector<1x16xf32>
    %34 = math.exp %33 : vector<1x16xf32>
    %cst_23 = arith.constant 1.000000e+00 : f32
    %35 = vector.broadcast %cst_23 : f32 to vector<1x16xf32>
    %36 = arith.addf %35, %34 : vector<1x16xf32>
    %cst_24 = arith.constant 1.000000e+00 : f32
    %37 = vector.broadcast %cst_24 : f32 to vector<1x16xf32>
    %38 = arith.divf %37, %36 : vector<1x16xf32>
    %39 = tpu.iota {dimensions = array<i32: 0>} : vector<16x16xi32>
    %40 = tpu.iota {dimensions = array<i32: 1>} : vector<16x16xi32>
    %41 = arith.cmpi eq, %39, %40 : vector<16x16xi32>
    %cst_25 = arith.constant 0.000000e+00 : f32
    %42 = vector.shape_cast %38 : vector<1x16xf32> to vector<1x16xf32>
    %43 = vector.broadcast %42 : vector<1x16xf32> to vector<16x16xf32>
    %44 = vector.broadcast %cst_25 : f32 to vector<16x16xf32>
    %45 = arith.select %41, %43, %44 : vector<16x16xi1>, vector<16x16xf32>
    %cst_26 = arith.constant dense<0.000000e+00> : vector<16xf32>
    %46 = vector.multi_reduction <add>, %45, %cst_26 [1] : vector<16x16xf32> to vector<16xf32>
    %47 = vector.shape_cast %46 : vector<16xf32> to vector<16x1xf32>
    %48 = tpu.iota {dimensions = array<i32: 0>} : vector<16x16xi32>
    %49 = tpu.iota {dimensions = array<i32: 1>} : vector<16x16xi32>
    %50 = vector.broadcast %47 : vector<16x1xf32> to vector<16x16xf32>
    %51 = vector.broadcast %38 : vector<1x16xf32> to vector<16x16xf32>
    %52 = arith.cmpf ogt, %50, %51 : vector<16x16xf32>
    %53 = vector.broadcast %47 : vector<16x1xf32> to vector<16x16xf32>
    %54 = vector.broadcast %38 : vector<1x16xf32> to vector<16x16xf32>
    %55 = arith.cmpf oeq, %53, %54 : vector<16x16xf32>
    %56 = arith.cmpi slt, %48, %49 : vector<16x16xi32>
    %57 = arith.andi %55, %56 : vector<16x16xi1>
    %58 = arith.ori %52, %57 : vector<16x16xi1>
    %cst_27 = arith.constant 1.000000e+00 : f32
    %cst_28 = arith.constant 0.000000e+00 : f32
    %59 = vector.broadcast %cst_27 : f32 to vector<16x16xf32>
    %60 = vector.broadcast %cst_28 : f32 to vector<16x16xf32>
    %61 = arith.select %58, %59, %60 : vector<16x16xi1>, vector<16x16xf32>
    %cst_29 = arith.constant dense<0.000000e+00> : vector<16xf32>
    %62 = vector.multi_reduction <add>, %61, %cst_29 [0] : vector<16x16xf32> to vector<16xf32>
    %63 = vector.shape_cast %62 : vector<16xf32> to vector<1x16xf32>
    %64 = tpu.iota {dimensions = array<i32: 0>} : vector<14x16xi32>
    %65 = arith.sitofp %64 : vector<14x16xi32> to vector<14x16xf32>
    %66 = vector.broadcast %63 : vector<1x16xf32> to vector<14x16xf32>
    %67 = arith.cmpf oeq, %65, %66 : vector<14x16xf32>
    %cst_30 = arith.constant 1.000000e+00 : f32
    %cst_31 = arith.constant 0.000000e+00 : f32
    %68 = vector.broadcast %cst_30 : f32 to vector<14x16xf32>
    %69 = vector.broadcast %cst_31 : f32 to vector<14x16xf32>
    %70 = arith.select %67, %68, %69 : vector<14x16xi1>, vector<14x16xf32>
    %71 = vector.broadcast %38 : vector<1x16xf32> to vector<14x16xf32>
    %72 = arith.mulf %70, %71 : vector<14x16xf32>
    %cst_32 = arith.constant 0.000000e+00 : f32
    %73 = vector.broadcast %cst_32 : f32 to vector<16x16xf32>
    %74 = arith.cmpf one, %13, %73 : vector<16x16xf32>
    %cst_33 = arith.constant 1.000000e+00 : f32
    %cst_34 = arith.constant 0.000000e+00 : f32
    %75 = vector.broadcast %cst_33 : f32 to vector<16x16xf32>
    %76 = vector.broadcast %cst_34 : f32 to vector<16x16xf32>
    %77 = arith.select %74, %75, %76 : vector<16x16xi1>, vector<16x16xf32>
    %cst_35 = arith.constant dense<0.000000e+00> : vector<16x16xf32>
    %78 = tpu.matmul %77, %77, %cst_35 {dimension_numbers = #tpu.dot_dimension_numbers<[1], [0], [0], [1], [0, 0, 1, 1], [], []>} : vector<16x16xf32>, vector<16x16xf32>, vector<16x16xf32> -> vector<16x16xf32>
    %cst_36 = arith.constant 0.000000e+00 : f32
    %79 = vector.broadcast %cst_36 : f32 to vector<16x16xf32>
    %80 = arith.cmpf one, %78, %79 : vector<16x16xf32>
    %cst_37 = arith.constant 1.000000e+00 : f32
    %cst_38 = arith.constant 0.000000e+00 : f32
    %81 = vector.broadcast %cst_37 : f32 to vector<16x16xf32>
    %82 = vector.broadcast %cst_38 : f32 to vector<16x16xf32>
    %83 = arith.select %80, %81, %82 : vector<16x16xi1>, vector<16x16xf32>
    %cst_39 = arith.constant dense<0.000000e+00> : vector<14x16xf32>
    %84 = tpu.matmul %70, %83, %cst_39 {dimension_numbers = #tpu.dot_dimension_numbers<[1], [0], [0], [1], [0, 0, 1, 1], [], []>} : vector<14x16xf32>, vector<16x16xf32>, vector<14x16xf32> -> vector<14x16xf32>
    %cst_40 = arith.constant dense<0.000000e+00> : vector<14x14xf32>
    %85 = tpu.matmul %84, %70, %cst_40 {dimension_numbers = #tpu.dot_dimension_numbers<[1], [1], [0], [0], [0, 0, 1, 0], [], []>} : vector<14x16xf32>, vector<14x16xf32>, vector<14x14xf32> -> vector<14x14xf32>
    %cst_41 = arith.constant dense<0.000000e+00> : vector<14xf32>
    %86 = vector.multi_reduction <add>, %85, %cst_41 [0] : vector<14x14xf32> to vector<14xf32>
    %87 = vector.shape_cast %86 : vector<14xf32> to vector<1x14xf32>
    %88 = vector.broadcast %87 : vector<1x14xf32> to vector<14x14xf32>
    %89 = arith.divf %85, %88 : vector<14x14xf32>
    %cst_42 = arith.constant dense<0.000000e+00> : vector<14x32xf32>
    %90 = tpu.matmul %72, %26, %cst_42 {dimension_numbers = #tpu.dot_dimension_numbers<[1], [0], [0], [1], [0, 0, 1, 1], [], []>} : vector<14x16xf32>, vector<16x32xf32>, vector<14x32xf32> -> vector<14x32xf32>
    %cst_43 = arith.constant dense<0.000000e+00> : vector<14x32xf32>
    %91 = tpu.matmul %89, %90, %cst_43 {dimension_numbers = #tpu.dot_dimension_numbers<[1], [0], [0], [1], [0, 0, 1, 1], [], []>} : vector<14x14xf32>, vector<14x32xf32>, vector<14x32xf32> -> vector<14x32xf32>
    %c0_44 = arith.constant 0 : index
    %c0_45 = arith.constant 0 : index
    %92 = vector.load %arg4[%c0_44, %c0_45] : memref<32x32xf32, #tpu.memory_space<vmem>>, vector<32x32xf32>
    %cst_46 = arith.constant dense<0.000000e+00> : vector<14x32xf32>
    %93 = tpu.matmul %91, %92, %cst_46 {dimension_numbers = #tpu.dot_dimension_numbers<[1], [0], [0], [1], [0, 0, 1, 1], [], []>} : vector<14x32xf32>, vector<32x32xf32>, vector<14x32xf32> -> vector<14x32xf32>
    %c0_47 = arith.constant 0 : index
    %c0_48 = arith.constant 0 : index
    %94 = vector.load %arg6[%c0_47, %c0_48] : memref<1x32xf32, #tpu.memory_space<vmem>>, vector<1x32xf32>
    %95 = vector.broadcast %94 : vector<1x32xf32> to vector<14x32xf32>
    %96 = arith.addf %93, %95 : vector<14x32xf32>
    %c0_49 = arith.constant 0 : index
    %c0_50 = arith.constant 0 : index
    %97 = vector.load %arg8[%c0_49, %c0_50] : memref<32x1xf32, #tpu.memory_space<vmem>>, vector<32x1xf32>
    %c1 = arith.constant 1 : index
    %98 = memref.load %arg9[%c1] : memref<2xf32, #tpu.memory_space<smem>>
    %cst_51 = arith.constant dense<0.000000e+00> : vector<1x14xf32>
    %99 = tpu.matmul %97, %96, %cst_51 {dimension_numbers = #tpu.dot_dimension_numbers<[0], [1], [1], [0], [0, 1, 1, 0], [], []>} : vector<32x1xf32>, vector<14x32xf32>, vector<1x14xf32> -> vector<1x14xf32>
    %100 = vector.broadcast %98 : f32 to vector<1x14xf32>
    %101 = arith.addf %99, %100 : vector<1x14xf32>
    %cst_52 = arith.constant 0.000000e+00 : f32
    %102 = vector.broadcast %cst_52 : f32 to vector<1x14xf32>
    %103 = arith.subf %102, %101 : vector<1x14xf32>
    %104 = math.exp %103 : vector<1x14xf32>
    %cst_53 = arith.constant 1.000000e+00 : f32
    %105 = vector.broadcast %cst_53 : f32 to vector<1x14xf32>
    %106 = arith.addf %105, %104 : vector<1x14xf32>
    %cst_54 = arith.constant 1.000000e+00 : f32
    %107 = vector.broadcast %cst_54 : f32 to vector<1x14xf32>
    %108 = arith.divf %107, %106 : vector<1x14xf32>
    %109 = tpu.iota {dimensions = array<i32: 0>} : vector<14x14xi32>
    %110 = tpu.iota {dimensions = array<i32: 1>} : vector<14x14xi32>
    %111 = arith.cmpi eq, %109, %110 : vector<14x14xi32>
    %cst_55 = arith.constant 0.000000e+00 : f32
    %112 = vector.shape_cast %108 : vector<1x14xf32> to vector<1x14xf32>
    %113 = vector.broadcast %112 : vector<1x14xf32> to vector<14x14xf32>
    %114 = vector.broadcast %cst_55 : f32 to vector<14x14xf32>
    %115 = arith.select %111, %113, %114 : vector<14x14xi1>, vector<14x14xf32>
    %cst_56 = arith.constant dense<0.000000e+00> : vector<14xf32>
    %116 = vector.multi_reduction <add>, %115, %cst_56 [1] : vector<14x14xf32> to vector<14xf32>
    %117 = vector.shape_cast %116 : vector<14xf32> to vector<14x1xf32>
    %118 = tpu.iota {dimensions = array<i32: 0>} : vector<14x14xi32>
    %119 = tpu.iota {dimensions = array<i32: 1>} : vector<14x14xi32>
    %120 = vector.broadcast %117 : vector<14x1xf32> to vector<14x14xf32>
    %121 = vector.broadcast %108 : vector<1x14xf32> to vector<14x14xf32>
    %122 = arith.cmpf ogt, %120, %121 : vector<14x14xf32>
    %123 = vector.broadcast %117 : vector<14x1xf32> to vector<14x14xf32>
    %124 = vector.broadcast %108 : vector<1x14xf32> to vector<14x14xf32>
    %125 = arith.cmpf oeq, %123, %124 : vector<14x14xf32>
    %126 = arith.cmpi slt, %118, %119 : vector<14x14xi32>
    %127 = arith.andi %125, %126 : vector<14x14xi1>
    %128 = arith.ori %122, %127 : vector<14x14xi1>
    %cst_57 = arith.constant 1.000000e+00 : f32
    %cst_58 = arith.constant 0.000000e+00 : f32
    %129 = vector.broadcast %cst_57 : f32 to vector<14x14xf32>
    %130 = vector.broadcast %cst_58 : f32 to vector<14x14xf32>
    %131 = arith.select %128, %129, %130 : vector<14x14xi1>, vector<14x14xf32>
    %cst_59 = arith.constant dense<0.000000e+00> : vector<14xf32>
    %132 = vector.multi_reduction <add>, %131, %cst_59 [0] : vector<14x14xf32> to vector<14xf32>
    %133 = vector.shape_cast %132 : vector<14xf32> to vector<1x14xf32>
    %134 = tpu.iota {dimensions = array<i32: 0>} : vector<9x14xi32>
    %135 = arith.sitofp %134 : vector<9x14xi32> to vector<9x14xf32>
    %136 = vector.broadcast %133 : vector<1x14xf32> to vector<9x14xf32>
    %137 = arith.cmpf oeq, %135, %136 : vector<9x14xf32>
    %cst_60 = arith.constant 1.000000e+00 : f32
    %cst_61 = arith.constant 0.000000e+00 : f32
    %138 = vector.broadcast %cst_60 : f32 to vector<9x14xf32>
    %139 = vector.broadcast %cst_61 : f32 to vector<9x14xf32>
    %140 = arith.select %137, %138, %139 : vector<9x14xi1>, vector<9x14xf32>
    %141 = vector.broadcast %108 : vector<1x14xf32> to vector<9x14xf32>
    %142 = arith.mulf %140, %141 : vector<9x14xf32>
    %cst_62 = arith.constant 0.000000e+00 : f32
    %143 = vector.broadcast %cst_62 : f32 to vector<14x14xf32>
    %144 = arith.cmpf one, %89, %143 : vector<14x14xf32>
    %cst_63 = arith.constant 1.000000e+00 : f32
    %cst_64 = arith.constant 0.000000e+00 : f32
    %145 = vector.broadcast %cst_63 : f32 to vector<14x14xf32>
    %146 = vector.broadcast %cst_64 : f32 to vector<14x14xf32>
    %147 = arith.select %144, %145, %146 : vector<14x14xi1>, vector<14x14xf32>
    %cst_65 = arith.constant dense<0.000000e+00> : vector<14x14xf32>
    %148 = tpu.matmul %147, %147, %cst_65 {dimension_numbers = #tpu.dot_dimension_numbers<[1], [0], [0], [1], [0, 0, 1, 1], [], []>} : vector<14x14xf32>, vector<14x14xf32>, vector<14x14xf32> -> vector<14x14xf32>
    %cst_66 = arith.constant 0.000000e+00 : f32
    %149 = vector.broadcast %cst_66 : f32 to vector<14x14xf32>
    %150 = arith.cmpf one, %148, %149 : vector<14x14xf32>
    %cst_67 = arith.constant 1.000000e+00 : f32
    %cst_68 = arith.constant 0.000000e+00 : f32
    %151 = vector.broadcast %cst_67 : f32 to vector<14x14xf32>
    %152 = vector.broadcast %cst_68 : f32 to vector<14x14xf32>
    %153 = arith.select %150, %151, %152 : vector<14x14xi1>, vector<14x14xf32>
    %cst_69 = arith.constant dense<0.000000e+00> : vector<9x14xf32>
    %154 = tpu.matmul %140, %153, %cst_69 {dimension_numbers = #tpu.dot_dimension_numbers<[1], [0], [0], [1], [0, 0, 1, 1], [], []>} : vector<9x14xf32>, vector<14x14xf32>, vector<9x14xf32> -> vector<9x14xf32>
    %cst_70 = arith.constant dense<0.000000e+00> : vector<9x9xf32>
    %155 = tpu.matmul %154, %140, %cst_70 {dimension_numbers = #tpu.dot_dimension_numbers<[1], [1], [0], [0], [0, 0, 1, 0], [], []>} : vector<9x14xf32>, vector<9x14xf32>, vector<9x9xf32> -> vector<9x9xf32>
    %cst_71 = arith.constant dense<0.000000e+00> : vector<9xf32>
    %156 = vector.multi_reduction <add>, %155, %cst_71 [0] : vector<9x9xf32> to vector<9xf32>
    %157 = vector.shape_cast %156 : vector<9xf32> to vector<1x9xf32>
    %158 = vector.broadcast %157 : vector<1x9xf32> to vector<9x9xf32>
    %159 = arith.divf %155, %158 : vector<9x9xf32>
    %cst_72 = arith.constant dense<0.000000e+00> : vector<9x32xf32>
    %160 = tpu.matmul %142, %96, %cst_72 {dimension_numbers = #tpu.dot_dimension_numbers<[1], [0], [0], [1], [0, 0, 1, 1], [], []>} : vector<9x14xf32>, vector<14x32xf32>, vector<9x32xf32> -> vector<9x32xf32>
    %cst_73 = arith.constant dense<0.000000e+00> : vector<9x32xf32>
    %161 = tpu.matmul %159, %160, %cst_73 {dimension_numbers = #tpu.dot_dimension_numbers<[1], [0], [0], [1], [0, 0, 1, 1], [], []>} : vector<9x9xf32>, vector<9x32xf32>, vector<9x32xf32> -> vector<9x32xf32>
    %c0_74 = arith.constant 0 : index
    %c0_75 = arith.constant 0 : index
    %162 = vector.load %arg10[%c0_74, %c0_75] : memref<32x32xf32, #tpu.memory_space<vmem>>, vector<32x32xf32>
    %cst_76 = arith.constant dense<0.000000e+00> : vector<9x32xf32>
    %163 = tpu.matmul %161, %162, %cst_76 {dimension_numbers = #tpu.dot_dimension_numbers<[1], [0], [0], [1], [0, 0, 1, 1], [], []>} : vector<9x32xf32>, vector<32x32xf32>, vector<9x32xf32> -> vector<9x32xf32>
    %c0_77 = arith.constant 0 : index
    %c0_78 = arith.constant 0 : index
    %164 = vector.load %arg11[%c0_77, %c0_78] : memref<1x32xf32, #tpu.memory_space<vmem>>, vector<1x32xf32>
    %165 = vector.broadcast %164 : vector<1x32xf32> to vector<9x32xf32>
    %166 = arith.addf %163, %165 : vector<9x32xf32>
    %cst_79 = arith.constant dense<0.000000e+00> : vector<14x32xf32>
    %167 = tpu.matmul %140, %166, %cst_79 {dimension_numbers = #tpu.dot_dimension_numbers<[0], [0], [1], [1], [0, 1, 1, 1], [], []>} : vector<9x14xf32>, vector<9x32xf32>, vector<14x32xf32> -> vector<14x32xf32>
    %cst_80 = arith.constant dense<0.000000e+00> : vector<14x32xf32>
    %168 = tpu.matmul %89, %167, %cst_80 {dimension_numbers = #tpu.dot_dimension_numbers<[1], [0], [0], [1], [0, 0, 1, 1], [], []>} : vector<14x14xf32>, vector<14x32xf32>, vector<14x32xf32> -> vector<14x32xf32>
    %c0_81 = arith.constant 0 : index
    %c0_82 = arith.constant 0 : index
    %169 = vector.load %arg12[%c0_81, %c0_82] : memref<32x32xf32, #tpu.memory_space<vmem>>, vector<32x32xf32>
    %cst_83 = arith.constant dense<0.000000e+00> : vector<14x32xf32>
    %170 = tpu.matmul %168, %169, %cst_83 {dimension_numbers = #tpu.dot_dimension_numbers<[1], [0], [0], [1], [0, 0, 1, 1], [], []>} : vector<14x32xf32>, vector<32x32xf32>, vector<14x32xf32> -> vector<14x32xf32>
    %c0_84 = arith.constant 0 : index
    %c0_85 = arith.constant 0 : index
    %171 = vector.load %arg14[%c0_84, %c0_85] : memref<1x32xf32, #tpu.memory_space<vmem>>, vector<1x32xf32>
    %172 = vector.broadcast %171 : vector<1x32xf32> to vector<14x32xf32>
    %173 = arith.addf %170, %172 : vector<14x32xf32>
    %174 = arith.addf %173, %96 : vector<14x32xf32>
    %cst_86 = arith.constant dense<0.000000e+00> : vector<16x32xf32>
    %175 = tpu.matmul %70, %174, %cst_86 {dimension_numbers = #tpu.dot_dimension_numbers<[0], [0], [1], [1], [0, 1, 1, 1], [], []>} : vector<14x16xf32>, vector<14x32xf32>, vector<16x32xf32> -> vector<16x32xf32>
    %cst_87 = arith.constant dense<0.000000e+00> : vector<16x32xf32>
    %176 = tpu.matmul %13, %175, %cst_87 {dimension_numbers = #tpu.dot_dimension_numbers<[1], [0], [0], [1], [0, 0, 1, 1], [], []>} : vector<16x16xf32>, vector<16x32xf32>, vector<16x32xf32> -> vector<16x32xf32>
    %c0_88 = arith.constant 0 : index
    %c0_89 = arith.constant 0 : index
    %177 = vector.load %arg13[%c0_88, %c0_89] : memref<32x32xf32, #tpu.memory_space<vmem>>, vector<32x32xf32>
    %cst_90 = arith.constant dense<0.000000e+00> : vector<16x32xf32>
    %178 = tpu.matmul %176, %177, %cst_90 {dimension_numbers = #tpu.dot_dimension_numbers<[1], [0], [0], [1], [0, 0, 1, 1], [], []>} : vector<16x32xf32>, vector<32x32xf32>, vector<16x32xf32> -> vector<16x32xf32>
    %c0_91 = arith.constant 0 : index
    %c0_92 = arith.constant 0 : index
    %179 = vector.load %arg15[%c0_91, %c0_92] : memref<1x32xf32, #tpu.memory_space<vmem>>, vector<1x32xf32>
    %180 = vector.broadcast %179 : vector<1x32xf32> to vector<16x32xf32>
    %181 = arith.addf %178, %180 : vector<16x32xf32>
    %182 = arith.addf %181, %26 : vector<16x32xf32>
    %cst_93 = arith.constant dense<0.000000e+00> : vector<16x32xf32>
    %183 = tpu.matmul %13, %182, %cst_93 {dimension_numbers = #tpu.dot_dimension_numbers<[1], [0], [0], [1], [0, 0, 1, 1], [], []>} : vector<16x16xf32>, vector<16x32xf32>, vector<16x32xf32> -> vector<16x32xf32>
    %c0_94 = arith.constant 0 : index
    %c0_95 = arith.constant 0 : index
    %184 = vector.load %arg16[%c0_94, %c0_95] : memref<32x32xf32, #tpu.memory_space<vmem>>, vector<32x32xf32>
    %cst_96 = arith.constant dense<0.000000e+00> : vector<16x32xf32>
    %185 = tpu.matmul %183, %184, %cst_96 {dimension_numbers = #tpu.dot_dimension_numbers<[1], [0], [0], [1], [0, 0, 1, 1], [], []>} : vector<16x32xf32>, vector<32x32xf32>, vector<16x32xf32> -> vector<16x32xf32>
    %cst_97 = arith.constant dense<0.000000e+00> : vector<16x32xf32>
    %186 = tpu.matmul %13, %19, %cst_97 {dimension_numbers = #tpu.dot_dimension_numbers<[1], [0], [0], [1], [0, 0, 1, 1], [], []>} : vector<16x16xf32>, vector<16x32xf32>, vector<16x32xf32> -> vector<16x32xf32>
    %c0_98 = arith.constant 0 : index
    %c0_99 = arith.constant 0 : index
    %187 = vector.load %arg17[%c0_98, %c0_99] : memref<32x32xf32, #tpu.memory_space<vmem>>, vector<32x32xf32>
    %cst_100 = arith.constant dense<0.000000e+00> : vector<16x32xf32>
    %188 = tpu.matmul %186, %187, %cst_100 {dimension_numbers = #tpu.dot_dimension_numbers<[1], [0], [0], [1], [0, 0, 1, 1], [], []>} : vector<16x32xf32>, vector<32x32xf32>, vector<16x32xf32> -> vector<16x32xf32>
    %189 = arith.addf %185, %188 : vector<16x32xf32>
    %c0_101 = arith.constant 0 : index
    %c0_102 = arith.constant 0 : index
    %190 = vector.load %arg18[%c0_101, %c0_102] : memref<1x32xf32, #tpu.memory_space<vmem>>, vector<1x32xf32>
    %191 = vector.broadcast %190 : vector<1x32xf32> to vector<16x32xf32>
    %192 = arith.addf %189, %191 : vector<16x32xf32>
    %c0_103 = arith.constant 0 : index
    %c0_104 = arith.constant 0 : index
    %193 = vector.load %arg21[%c0_103, %c0_104] : memref<16x32xf32, #tpu.memory_space<vmem>>, vector<16x32xf32>
    tpu.vector_store %arg21[%c0_103, %c0_104], %192 {strides = array<i32>} : memref<16x32xf32, #tpu.memory_space<vmem>>, vector<16x32xf32>,
    return
  }
}

module attributes {stable_mosaic.version = 11 : i64} {
  func.func @_tail_kernel(%arg0: memref<16x16xf32, #tpu.memory_space<vmem>>, %arg1: memref<16x32xf32, #tpu.memory_space<vmem>>, %arg2: memref<32x16xf32, #tpu.memory_space<vmem>>, %arg3: memref<32x32xf32, #tpu.memory_space<vmem>>, %arg4: memref<32x32xf32, #tpu.memory_space<vmem>>, %arg5: memref<32x32xf32, #tpu.memory_space<vmem>>, %arg6: memref<32x32xf32, #tpu.memory_space<vmem>>) attributes {dimension_semantics = [], scalar_prefetch = 0 : i64, scratch_operands = 0 : i64, tpu.core_type = #tpu.core_type<tc>} {
    %0 = tpu.iota {dimensions = array<i32: 0>} : vector<32x32xi32>
    %1 = tpu.iota {dimensions = array<i32: 1>} : vector<32x32xi32>
    %2 = arith.cmpi eq, %0, %1 : vector<32x32xi32>
    %c0 = arith.constant 0 : index
    %c0_0 = arith.constant 0 : index
    %3 = vector.load %arg2[%c0, %c0_0] : memref<32x16xf32, #tpu.memory_space<vmem>>, vector<32x16xf32>
    %c0_1 = arith.constant 0 : index
    %c0_2 = arith.constant 0 : index
    %4 = vector.load %arg0[%c0_1, %c0_2] : memref<16x16xf32, #tpu.memory_space<vmem>>, vector<16x16xf32>
    %cst = arith.constant dense<0.000000e+00> : vector<32x16xf32>
    %5 = tpu.matmul %3, %4, %cst {dimension_numbers = #tpu.dot_dimension_numbers<[1], [1], [0], [0], [0, 0, 1, 0], [], []>} : vector<32x16xf32>, vector<16x16xf32>, vector<32x16xf32> -> vector<32x16xf32>
    %c0_3 = arith.constant 0 : index
    %c0_4 = arith.constant 0 : index
    %6 = vector.load %arg1[%c0_3, %c0_4] : memref<16x32xf32, #tpu.memory_space<vmem>>, vector<16x32xf32>
    %cst_5 = arith.constant dense<0.000000e+00> : vector<32x32xf32>
    %7 = tpu.matmul %5, %6, %cst_5 {dimension_numbers = #tpu.dot_dimension_numbers<[1], [0], [0], [1], [0, 0, 1, 1], [], []>} : vector<32x16xf32>, vector<16x32xf32>, vector<32x32xf32> -> vector<32x32xf32>
    %8 = math.absf %7 : vector<32x32xf32>
    %cst_6 = arith.constant 1.000000e+00 : f32
    %9 = vector.broadcast %cst_6 : f32 to vector<32x32xf32>
    %10 = arith.select %2, %9, %8 : vector<32x32xi1>, vector<32x32xf32>
    %c0_7 = arith.constant 0 : index
    %c0_8 = arith.constant 0 : index
    %11 = vector.load %arg5[%c0_7, %c0_8] : memref<32x32xf32, #tpu.memory_space<vmem>>, vector<32x32xf32>
    tpu.vector_store %arg5[%c0_7, %c0_8], %10 {strides = array<i32>} : memref<32x32xf32, #tpu.memory_space<vmem>>, vector<32x32xf32>,
    %cst_9 = arith.constant dense<0.000000e+00> : vector<32x32xf32>
    %12 = tpu.matmul %10, %10, %cst_9 {dimension_numbers = #tpu.dot_dimension_numbers<[1], [1], [0], [0], [0, 0, 1, 0], [], []>} : vector<32x32xf32>, vector<32x32xf32>, vector<32x32xf32> -> vector<32x32xf32>
    %cst_10 = arith.constant 1.000000e+00 : f32
    %13 = vector.broadcast %cst_10 : f32 to vector<32x32xf32>
    %14 = arith.select %2, %13, %12 : vector<32x32xi1>, vector<32x32xf32>
    %c0_11 = arith.constant 0 : index
    %c0_12 = arith.constant 0 : index
    %15 = vector.load %arg3[%c0_11, %c0_12] : memref<32x32xf32, #tpu.memory_space<vmem>>, vector<32x32xf32>
    %cst_13 = arith.constant dense<0.000000e+00> : vector<32x32xf32>
    %16 = tpu.matmul %14, %15, %cst_13 {dimension_numbers = #tpu.dot_dimension_numbers<[1], [0], [0], [1], [0, 0, 1, 1], [], []>} : vector<32x32xf32>, vector<32x32xf32>, vector<32x32xf32> -> vector<32x32xf32>
    %cst_14 = arith.constant dense<0.000000e+00> : vector<32x32xf32>
    %17 = tpu.matmul %10, %16, %cst_14 {dimension_numbers = #tpu.dot_dimension_numbers<[1], [0], [0], [1], [0, 0, 1, 1], [], []>} : vector<32x32xf32>, vector<32x32xf32>, vector<32x32xf32> -> vector<32x32xf32>
    %cst_15 = arith.constant 0.000000e+00 : f32
    %18 = vector.broadcast %cst_15 : f32 to vector<32x32xf32>
    %19 = arith.maximumf %17, %18 : vector<32x32xf32>
    %c0_16 = arith.constant 0 : index
    %c0_17 = arith.constant 0 : index
    %20 = vector.load %arg4[%c0_16, %c0_17] : memref<32x32xf32, #tpu.memory_space<vmem>>, vector<32x32xf32>
    %cst_18 = arith.constant dense<0.000000e+00> : vector<32x32xf32>
    %21 = tpu.matmul %19, %20, %cst_18 {dimension_numbers = #tpu.dot_dimension_numbers<[1], [0], [0], [1], [0, 0, 1, 1], [], []>} : vector<32x32xf32>, vector<32x32xf32>, vector<32x32xf32> -> vector<32x32xf32>
    %cst_19 = arith.constant dense<0.000000e+00> : vector<32x32xf32>
    %22 = tpu.matmul %10, %21, %cst_19 {dimension_numbers = #tpu.dot_dimension_numbers<[1], [0], [0], [1], [0, 0, 1, 1], [], []>} : vector<32x32xf32>, vector<32x32xf32>, vector<32x32xf32> -> vector<32x32xf32>
    %cst_20 = arith.constant 0.000000e+00 : f32
    %23 = vector.broadcast %cst_20 : f32 to vector<32x32xf32>
    %24 = arith.maximumf %22, %23 : vector<32x32xf32>
    %25 = tpu.transpose %24, [1, 0] : vector<32x32xf32> -> vector<32x32xf32>
    %26 = arith.addf %24, %25 : vector<32x32xf32>
    %cst_21 = arith.constant 5.000000e-01 : f32
    %27 = vector.broadcast %cst_21 : f32 to vector<32x32xf32>
    %28 = arith.mulf %26, %27 : vector<32x32xf32>
    %cst_22 = arith.constant 1.000000e+00 : f32
    %29 = vector.broadcast %cst_22 : f32 to vector<32x32xf32>
    %30 = arith.select %2, %29, %28 : vector<32x32xi1>, vector<32x32xf32>
    %cst_23 = arith.constant 0.000000e+00 : f32
    %31 = vector.broadcast %cst_23 : f32 to vector<32x32xf32>
    %32 = arith.maximumf %30, %31 : vector<32x32xf32>
    %c0_24 = arith.constant 0 : index
    %c0_25 = arith.constant 0 : index
    %33 = vector.load %arg6[%c0_24, %c0_25] : memref<32x32xf32, #tpu.memory_space<vmem>>, vector<32x32xf32>
    tpu.vector_store %arg6[%c0_24, %c0_25], %32 {strides = array<i32>} : memref<32x32xf32, #tpu.memory_space<vmem>>, vector<32x32xf32>,
    return
  }
}

</mosaic_0001>

<llo_original>
// kernel: custom-call.2
$region0: #{custom-call.2}
  %s0 = inlined_call_operand.vmem [shape: f32[8,8], index: 0, kind: input, shape index: {}]
  %s1 = inlined_call_operand.vmem [shape: f32[8,8], index: 1, kind: input, shape index: {}]
  %s2 = inlined_call_operand.vmem [shape: f32[8,8], index: 2, kind: input, shape index: {}]
  %s3 = inlined_call_operand.vmem [shape: f32[8,8], index: 3, kind: input, shape index: {}]
  %s4 = inlined_call_operand.vmem [shape: f32[8], index: 4, kind: output, shape index: {0}]
  %s5 = inlined_call_operand.vmem [shape: f32[8], index: 5, kind: output, shape index: {1}]
  %s6 = inlined_call_operand.vmem [shape: f32[8,8], index: 6, kind: output, shape index: {2}]
  %s7 = inlined_call_operand.vmem [shape: f32[8,8], index: 7, kind: output, shape index: {3}]
  %s8 = inlined_call_operand.vmem [shape: f32[8,8], index: 8, kind: output, shape index: {4}]
  %s9 = inlined_call_operand.vmem [shape: f32[8,8], index: 9, kind: output, shape index: {5}]
  %10 = xla_tuple %s4, %s5, %s6, %s7, %s8, %s9
  $region1: #{custom-call.2} parent=0
    #allocation0 [shape = 'u8[4096]{0}', space=vmem, size = 0x1000, scoped, tag = 'operand span for operand 0']
    #allocation1 [shape = 'u8[4096]{0}', space=vmem, size = 0x1000, scoped, tag = 'operand span for operand 1']
    #allocation2 [shape = 'u8[4096]{0}', space=vmem, size = 0x1000, scoped, tag = 'operand span for operand 2']
    #allocation3 [shape = 'u8[4096]{0}', space=vmem, size = 0x1000, scoped, tag = 'operand span for operand 3']
    #allocation4 [shape = 'u8[4096]{0}', space=vmem, size = 0x1000, scoped, tag = 'operand span for operand 4']
    #allocation5 [shape = 'u8[512]{0}', space=vmem, size = 0x400, scoped, tag = 'packed  for operand 4']
    #allocation6 [shape = 'u8[4096]{0}', space=vmem, size = 0x1000, scoped, tag = 'operand span for operand 5']
    #allocation7 [shape = 'u8[512]{0}', space=vmem, size = 0x400, scoped, tag = 'packed  for operand 5']
    #allocation8 [shape = 'u8[4096]{0}', space=vmem, size = 0x1000, scoped, tag = 'operand span for operand 6']
    #allocation9 [shape = 'u8[4096]{0}', space=vmem, size = 0x1000, scoped, tag = 'operand span for operand 7']
    #allocation10 [shape = 'u8[4096]{0}', space=vmem, size = 0x1000, scoped, tag = 'operand span for operand 8']
    #allocation11 [shape = 'u8[4096]{0}', space=vmem, size = 0x1000, scoped, tag = 'operand span for operand 9']
    #allocation12 [shape = 'f32[8,8]{1,0}', space=vmem, size = 0x1000, scoped, tag = 'a top-left matrix']
    #allocation13 [shape = 'f32[8,8]{1,0}', space=vmem, size = 0x1000, scoped, tag = 'a top-right matrix']
    #allocation14 [shape = 'f32[8,8]{1,0}', space=vmem, size = 0x1000, scoped, tag = 'a bottom-left matrix']
    #allocation15 [shape = 'f32[8,8]{1,0}', space=vmem, size = 0x1000, scoped, tag = 'a bottom-right matrix']
    %p12 = scmp.gt.s32.totalorder 8, 0
    // Predicated region
    $region2: #{custom-call.2} parent=1 // pred_check
      %p13 = pneg %p12
    $region3: #{custom-call.2} parent=1 // pred_check_branch
      %15 = sbr.rel (%p13) target = $region5
    $region4: #{custom-call.2} parent=1 // pred_region
      %s16 = sshra.s32 8, 3
      %p17 = scmp.gt.s32.totalorder %s16, 0
      // Predicated region
      $region6: #{custom-call.2} parent=4 // pred_check
        %p18 = pneg %p17
      $region7: #{custom-call.2} parent=4 // pred_check_branch
        %20 = sbr.rel (%p18) target = $region9
      $region8: #{custom-call.2} parent=4 // pred_region
        %s21 = ssub.s32 %s16, 1
        %s22 = smul.u32 %s21, 128
        %s23 = sshra.s32 %s22, 4
        %s24 = scalar_lea.vmem %s0, %s23
        %v25 = vld [vmem:[%s0] sm:$0xff]
        // While loop
        $region10: #{custom-call.2} parent=8 // loop_pre_header
          _
        $region11: #{custom-call.2} parent=8 // loop_header
          %s26 = sphi %s0, %s48
          %s27 = sphi [#allocation0], %s49
          %v28 = vphi %v25, %v50
          %s29 = ssub.s32 %s24, 64
          %p30 = scmp.gt.s32.totalorder %s26, %s29
        $region12: #{custom-call.2} parent=8 // loop_header_branch
          %32 = sbr.rel (%p30) target = $region16
        $region13: #{custom-call.2} parent=8 // loop_body
          %33 = vst [vmem:[%s27] sm:$0xff] %v28
          %v34 = vld [vmem:[%s26 + $0x8] sm:$0xff]
          %35 = vst [vmem:[%s27 + $0x8] sm:$0xff] %v34
          %v36 = vld [vmem:[%s26 + $0x10] sm:$0xff]
          %37 = vst [vmem:[%s27 + $0x10] sm:$0xff] %v36
          %v38 = vld [vmem:[%s26 + $0x18] sm:$0xff]
          %39 = vst [vmem:[%s27 + $0x18] sm:$0xff] %v38
          %v40 = vld [vmem:[%s26 + $0x20] sm:$0xff]
          %41 = vst [vmem:[%s27 + $0x20] sm:$0xff] %v40
          %v42 = vld [vmem:[%s26 + $0x28] sm:$0xff]
          %43 = vst [vmem:[%s27 + $0x28] sm:$0xff] %v42
          %v44 = vld [vmem:[%s26 + $0x30] sm:$0xff]
          %45 = vst [vmem:[%s27 + $0x30] sm:$0xff] %v44
          %v46 = vld [vmem:[%s26 + $0x38] sm:$0xff]
          %47 = vst [vmem:[%s27 + $0x38] sm:$0xff] %v46
        $region14: #{custom-call.2} parent=8 // loop_footer
          %s48 = scalar_lea.vmem %s26, 64
          %s49 = scalar_lea.vmem %s27, 64
          %v50 = vld [vmem:[%s26 + $0x40] sm:$0xff]
        $region15: #{custom-call.2} parent=8 // loop_footer_branch
          %51 = sbr.rel target = $region11
        $region16: #{custom-call.2} parent=8 // loop_exit
          _
        // While loop
        $region17: #{custom-call.2} parent=8 // loop_pre_header
          _
        $region18: #{custom-call.2} parent=8 // loop_header
          %s52 = sphi %s26, %s60
          %s53 = sphi %s27, %s61
          %v54 = vphi %v28, %v54
          %p55 = scmp.gt.s32.totalorder %s52, %s24
        $region19: #{custom-call.2} parent=8 // loop_header_branch
          %57 = sbr.rel (%p55) target = $region23
        $region20: #{custom-call.2} parent=8 // loop_body
          %v58 = vld [vmem:[%s52] sm:$0xff]
          %59 = vst [vmem:[%s53] sm:$0xff] %v58
        $region21: #{custom-call.2} parent=8 // loop_footer
          %s60 = scalar_lea.vmem %s52, 8
          %s61 = scalar_lea.vmem %s53, 8
        $region22: #{custom-call.2} parent=8 // loop_footer_branch
          %62 = sbr.rel target = $region18
        $region23: #{custom-call.2} parent=8 // loop_exit
          _
      $region9: #{custom-call.2} parent=4 // pred_fallthru
        _
      %s63 = sand.u32 8, 7
      %s64 = sshllo.u32 0, %s63
      %s65 = smul.u32 %s16, 128
      %s66 = sshra.s32 %s65, 4
      %s67 = scalar_lea.vmem [#allocation0], %s66
      %s68 = smul.u32 %s16, 128
      %s69 = sshra.s32 %s68, 4
      %s70 = scalar_lea.vmem %s0, %s69
      %v71 = vld [vmem:[%s70] sm:%s64]
      %72 = vst [vmem:[%s67] sm:%s64] %v71
    $region5: #{custom-call.2} parent=1 // pred_fallthru
      _
    %p74 = scmp.gt.s32.totalorder 8, 0
    // Predicated region
    $region24: #{custom-call.2} parent=1 // pred_check
      %p75 = pneg %p74
    $region25: #{custom-call.2} parent=1 // pred_check_branch
      %77 = sbr.rel (%p75) target = $region27
    $region26: #{custom-call.2} parent=1 // pred_region
      %s78 = sshra.s32 8, 3
      %p79 = scmp.gt.s32.totalorder %s78, 0
      // Predicated region
      $region28: #{custom-call.2} parent=26 // pred_check
        %p80 = pneg %p79
      $region29: #{custom-call.2} parent=26 // pred_check_branch
        %82 = sbr.rel (%p80) target = $region31
      $region30: #{custom-call.2} parent=26 // pred_region
        %s83 = ssub.s32 %s78, 1
        %s84 = smul.u32 %s83, 128
        %s85 = sshra.s32 %s84, 4
        %s86 = scalar_lea.vmem %s1, %s85
        %v87 = vld [vmem:[%s1] sm:$0xff]
        // While loop
        $region32: #{custom-call.2} parent=30 // loop_pre_header
          _
        $region33: #{custom-call.2} parent=30 // loop_header
          %s88 = sphi %s1, %s110
          %s89 = sphi [#allocation1], %s111
          %v90 = vphi %v87, %v112
          %s91 = ssub.s32 %s86, 64
          %p92 = scmp.gt.s32.totalorder %s88, %s91
        $region34: #{custom-call.2} parent=30 // loop_header_branch
          %94 = sbr.rel (%p92) target = $region38
        $region35: #{custom-call.2} parent=30 // loop_body
          %95 = vst [vmem:[%s89] sm:$0xff] %v90
          %v96 = vld [vmem:[%s88 + $0x8] sm:$0xff]
          %97 = vst [vmem:[%s89 + $0x8] sm:$0xff] %v96
          %v98 = vld [vmem:[%s88 + $0x10] sm:$0xff]
          %99 = vst [vmem:[%s89 + $0x10] sm:$0xff] %v98
          %v100 = vld [vmem:[%s88 + $0x18] sm:$0xff]
          %101 = vst [vmem:[%s89 + $0x18] sm:$0xff] %v100
          %v102 = vld [vmem:[%s88 + $0x20] sm:$0xff]
          %103 = vst [vmem:[%s89 + $0x20] sm:$0xff] %v102
          %v104 = vld [vmem:[%s88 + $0x28] sm:$0xff]
          %105 = vst [vmem:[%s89 + $0x28] sm:$0xff] %v104
          %v106 = vld [vmem:[%s88 + $0x30] sm:$0xff]
          %107 = vst [vmem:[%s89 + $0x30] sm:$0xff] %v106
          %v108 = vld [vmem:[%s88 + $0x38] sm:$0xff]
          %109 = vst [vmem:[%s89 + $0x38] sm:$0xff] %v108
        $region36: #{custom-call.2} parent=30 // loop_footer
          %s110 = scalar_lea.vmem %s88, 64
          %s111 = scalar_lea.vmem %s89, 64
          %v112 = vld [vmem:[%s88 + $0x40] sm:$0xff]
        $region37: #{custom-call.2} parent=30 // loop_footer_branch
          %113 = sbr.rel target = $region33
        $region38: #{custom-call.2} parent=30 // loop_exit
          _
        // While loop
        $region39: #{custom-call.2} parent=30 // loop_pre_header
          _
        $region40: #{custom-call.2} parent=30 // loop_header
          %s114 = sphi %s88, %s122
          %s115 = sphi %s89, %s123
          %v116 = vphi %v90, %v116
          %p117 = scmp.gt.s32.totalorder %s114, %s86
        $region41: #{custom-call.2} parent=30 // loop_header_branch
          %119 = sbr.rel (%p117) target = $region45
        $region42: #{custom-call.2} parent=30 // loop_body
          %v120 = vld [vmem:[%s114] sm:$0xff]
          %121 = vst [vmem:[%s115] sm:$0xff] %v120
        $region43: #{custom-call.2} parent=30 // loop_footer
          %s122 = scalar_lea.vmem %s114, 8
          %s123 = scalar_lea.vmem %s115, 8
        $region44: #{custom-call.2} parent=30 // loop_footer_branch
          %124 = sbr.rel target = $region40
        $region45: #{custom-call.2} parent=30 // loop_exit
          _
      $region31: #{custom-call.2} parent=26 // pred_fallthru
        _
      %s125 = sand.u32 8, 7
      %s126 = sshllo.u32 0, %s125
      %s127 = smul.u32 %s78, 128
      %s128 = sshra.s32 %s127, 4
      %s129 = scalar_lea.vmem [#allocation1], %s128
      %s130 = smul.u32 %s78, 128
      %s131 = sshra.s32 %s130, 4
      %s132 = scalar_lea.vmem %s1, %s131
      %v133 = vld [vmem:[%s132] sm:%s126]
      %134 = vst [vmem:[%s129] sm:%s126] %v133
    $region27: #{custom-call.2} parent=1 // pred_fallthru
      _
    %p136 = scmp.gt.s32.totalorder 8, 0
    // Predicated region
    $region46: #{custom-call.2} parent=1 // pred_check
      %p137 = pneg %p136
    $region47: #{custom-call.2} parent=1 // pred_check_branch
      %139 = sbr.rel (%p137) target = $region49
    $region48: #{custom-call.2} parent=1 // pred_region
      %s140 = sshra.s32 8, 3
      %p141 = scmp.gt.s32.totalorder %s140, 0
      // Predicated region
      $region50: #{custom-call.2} parent=48 // pred_check
        %p142 = pneg %p141
      $region51: #{custom-call.2} parent=48 // pred_check_branch
        %144 = sbr.rel (%p142) target = $region53
      $region52: #{custom-call.2} parent=48 // pred_region
        %s145 = ssub.s32 %s140, 1
        %s146 = smul.u32 %s145, 128
        %s147 = sshra.s32 %s146, 4
        %s148 = scalar_lea.vmem %s2, %s147
        %v149 = vld [vmem:[%s2] sm:$0xff]
        // While loop
        $region54: #{custom-call.2} parent=52 // loop_pre_header
          _
        $region55: #{custom-call.2} parent=52 // loop_header
          %s150 = sphi %s2, %s172
          %s151 = sphi [#allocation2], %s173
          %v152 = vphi %v149, %v174
          %s153 = ssub.s32 %s148, 64
          %p154 = scmp.gt.s32.totalorder %s150, %s153
        $region56: #{custom-call.2} parent=52 // loop_header_branch
          %156 = sbr.rel (%p154) target = $region60
        $region57: #{custom-call.2} parent=52 // loop_body
          %157 = vst [vmem:[%s151] sm:$0xff] %v152
          %v158 = vld [vmem:[%s150 + $0x8] sm:$0xff]
          %159 = vst [vmem:[%s151 + $0x8] sm:$0xff] %v158
          %v160 = vld [vmem:[%s150 + $0x10] sm:$0xff]
          %161 = vst [vmem:[%s151 + $0x10] sm:$0xff] %v160
          %v162 = vld [vmem:[%s150 + $0x18] sm:$0xff]
          %163 = vst [vmem:[%s151 + $0x18] sm:$0xff] %v162
          %v164 = vld [vmem:[%s150 + $0x20] sm:$0xff]
          %165 = vst [vmem:[%s151 + $0x20] sm:$0xff] %v164
          %v166 = vld [vmem:[%s150 + $0x28] sm:$0xff]
          %167 = vst [vmem:[%s151 + $0x28] sm:$0xff] %v166
          %v168 = vld [vmem:[%s150 + $0x30] sm:$0xff]
          %169 = vst [vmem:[%s151 + $0x30] sm:$0xff] %v168
          %v170 = vld [vmem:[%s150 + $0x38] sm:$0xff]
          %171 = vst [vmem:[%s151 + $0x38] sm:$0xff] %v170
        $region58: #{custom-call.2} parent=52 // loop_footer
          %s172 = scalar_lea.vmem %s150, 64
          %s173 = scalar_lea.vmem %s151, 64
          %v174 = vld [vmem:[%s150 + $0x40] sm:$0xff]
        $region59: #{custom-call.2} parent=52 // loop_footer_branch
          %175 = sbr.rel target = $region55
        $region60: #{custom-call.2} parent=52 // loop_exit
          _
        // While loop
        $region61: #{custom-call.2} parent=52 // loop_pre_header
          _
        $region62: #{custom-call.2} parent=52 // loop_header
          %s176 = sphi %s150, %s184
          %s177 = sphi %s151, %s185
          %v178 = vphi %v152, %v178
          %p179 = scmp.gt.s32.totalorder %s176, %s148
        $region63: #{custom-call.2} parent=52 // loop_header_branch
          %181 = sbr.rel (%p179) target = $region67
        $region64: #{custom-call.2} parent=52 // loop_body
          %v182 = vld [vmem:[%s176] sm:$0xff]
          %183 = vst [vmem:[%s177] sm:$0xff] %v182
        $region65: #{custom-call.2} parent=52 // loop_footer
          %s184 = scalar_lea.vmem %s176, 8
          %s185 = scalar_lea.vmem %s177, 8
        $region66: #{custom-call.2} parent=52 // loop_footer_branch
          %186 = sbr.rel target = $region62
        $region67: #{custom-call.2} parent=52 // loop_exit
          _
      $region53: #{custom-call.2} parent=48 // pred_fallthru
        _
      %s187 = sand.u32 8, 7
      %s188 = sshllo.u32 0, %s187
      %s189 = smul.u32 %s140, 128
      %s190 = sshra.s32 %s189, 4
      %s191 = scalar_lea.vmem [#allocation2], %s190
      %s192 = smul.u32 %s140, 128
      %s193 = sshra.s32 %s192, 4
      %s194 = scalar_lea.vmem %s2, %s193
      %v195 = vld [vmem:[%s194] sm:%s188]
      %196 = vst [vmem:[%s191] sm:%s188] %v195
    $region49: #{custom-call.2} parent=1 // pred_fallthru
      _
    %p198 = scmp.gt.s32.totalorder 8, 0
    // Predicated region
    $region68: #{custom-call.2} parent=1 // pred_check
      %p199 = pneg %p198
    $region69: #{custom-call.2} parent=1 // pred_check_branch
      %201 = sbr.rel (%p199) target = $region71
    $region70: #{custom-call.2} parent=1 // pred_region
      %s202 = sshra.s32 8, 3
      %p203 = scmp.gt.s32.totalorder %s202, 0
      // Predicated region
      $region72: #{custom-call.2} parent=70 // pred_check
        %p204 = pneg %p203
      $region73: #{custom-call.2} parent=70 // pred_check_branch
        %206 = sbr.rel (%p204) target = $region75
      $region74: #{custom-call.2} parent=70 // pred_region
        %s207 = ssub.s32 %s202, 1
        %s208 = smul.u32 %s207, 128
        %s209 = sshra.s32 %s208, 4
        %s210 = scalar_lea.vmem %s3, %s209
        %v211 = vld [vmem:[%s3] sm:$0xff]
        // While loop
        $region76: #{custom-call.2} parent=74 // loop_pre_header
          _
        $region77: #{custom-call.2} parent=74 // loop_header
          %s212 = sphi %s3, %s234
          %s213 = sphi [#allocation3], %s235
          %v214 = vphi %v211, %v236
          %s215 = ssub.s32 %s210, 64
          %p216 = scmp.gt.s32.totalorder %s212, %s215
        $region78: #{custom-call.2} parent=74 // loop_header_branch
          %218 = sbr.rel (%p216) target = $region82
        $region79: #{custom-call.2} parent=74 // loop_body
          %219 = vst [vmem:[%s213] sm:$0xff] %v214
          %v220 = vld [vmem:[%s212 + $0x8] sm:$0xff]
          %221 = vst [vmem:[%s213 + $0x8] sm:$0xff] %v220
          %v222 = vld [vmem:[%s212 + $0x10] sm:$0xff]
          %223 = vst [vmem:[%s213 + $0x10] sm:$0xff] %v222
          %v224 = vld [vmem:[%s212 + $0x18] sm:$0xff]
          %225 = vst [vmem:[%s213 + $0x18] sm:$0xff] %v224
          %v226 = vld [vmem:[%s212 + $0x20] sm:$0xff]
          %227 = vst [vmem:[%s213 + $0x20] sm:$0xff] %v226
          %v228 = vld [vmem:[%s212 + $0x28] sm:$0xff]
          %229 = vst [vmem:[%s213 + $0x28] sm:$0xff] %v228
          %v230 = vld [vmem:[%s212 + $0x30] sm:$0xff]
          %231 = vst [vmem:[%s213 + $0x30] sm:$0xff] %v230
          %v232 = vld [vmem:[%s212 + $0x38] sm:$0xff]
          %233 = vst [vmem:[%s213 + $0x38] sm:$0xff] %v232
        $region80: #{custom-call.2} parent=74 // loop_footer
          %s234 = scalar_lea.vmem %s212, 64
          %s235 = scalar_lea.vmem %s213, 64
          %v236 = vld [vmem:[%s212 + $0x40] sm:$0xff]
        $region81: #{custom-call.2} parent=74 // loop_footer_branch
          %237 = sbr.rel target = $region77
        $region82: #{custom-call.2} parent=74 // loop_exit
          _
        // While loop
        $region83: #{custom-call.2} parent=74 // loop_pre_header
          _
        $region84: #{custom-call.2} parent=74 // loop_header
          %s238 = sphi %s212, %s246
          %s239 = sphi %s213, %s247
          %v240 = vphi %v214, %v240
          %p241 = scmp.gt.s32.totalorder %s238, %s210
        $region85: #{custom-call.2} parent=74 // loop_header_branch
          %243 = sbr.rel (%p241) target = $region89
        $region86: #{custom-call.2} parent=74 // loop_body
          %v244 = vld [vmem:[%s238] sm:$0xff]
          %245 = vst [vmem:[%s239] sm:$0xff] %v244
        $region87: #{custom-call.2} parent=74 // loop_footer
          %s246 = scalar_lea.vmem %s238, 8
          %s247 = scalar_lea.vmem %s239, 8
        $region88: #{custom-call.2} parent=74 // loop_footer_branch
          %248 = sbr.rel target = $region84
        $region89: #{custom-call.2} parent=74 // loop_exit
          _
      $region75: #{custom-call.2} parent=70 // pred_fallthru
        _
      %s249 = sand.u32 8, 7
      %s250 = sshllo.u32 0, %s249
      %s251 = smul.u32 %s202, 128
      %s252 = sshra.s32 %s251, 4
      %s253 = scalar_lea.vmem [#allocation3], %s252
      %s254 = smul.u32 %s202, 128
      %s255 = sshra.s32 %s254, 4
      %s256 = scalar_lea.vmem %s3, %s255
      %v257 = vld [vmem:[%s256] sm:%s250]
      %258 = vst [vmem:[%s253] sm:%s250] %v257
    $region71: #{custom-call.2} parent=1 // pred_fallthru
      _
    %s259 = smov [#allocation12]
    %v260 = vld [vmem:[#allocation0] sm:$0xff]
    %261 = vst [vmem:[%s259] sm:$0xff] %v260
    %s262 = smov [#allocation13]
    %v263 = vld [vmem:[#allocation1] sm:$0xff]
    %264 = vst [vmem:[%s262] sm:$0xff] %v263
    %s265 = smov [#allocation14]
    %v266 = vld [vmem:[#allocation2] sm:$0xff]
    %267 = vst [vmem:[%s265] sm:$0xff] %v266
    %s268 = smov [#allocation15]
    %v269 = vld [vmem:[#allocation3] sm:$0xff]
    %270 = vst [vmem:[%s268] sm:$0xff] %v269
    %271 = vst [vmem:[#allocation8] sm:$0xff] 0.0
    %272 = vst [vmem:[#allocation9] sm:$0xff] 0.0
    %273 = vst [vmem:[#allocation10] sm:$0xff] 0.0
    %274 = vst [vmem:[#allocation11] sm:$0xff] 0.0
    %s275 = smov [#allocation8]
    %v276 = vlaneseq
    %v277 = vand.u32 %v276, 127
    %v278 = vmov %v277
    %v279 = vlaneseq
    %v280 = vshrl.u32 %v279, 7
    %v281 = vmov %v280
    %v282 = vld [vmem:[%s275] sm:$0xff]
    %vm285 = vcmp.eq.s32.totalorder %v281, %v278
    %v286 = vsel %vm285, 1.0, %v282
    %287 = vst [vmem:[%s275] sm:$0xff] %v286
    %s288 = smov [#allocation11]
    %v289 = vlaneseq
    %v290 = vand.u32 %v289, 127
    %v291 = vmov %v290
    %v292 = vlaneseq
    %v293 = vshrl.u32 %v292, 7
    %v294 = vmov %v293
    %v295 = vld [vmem:[%s288] sm:$0xff]
    %vm298 = vcmp.eq.s32.totalorder %v294, %v291
    %v299 = vsel %vm298, 1.0, %v295
    %300 = vst [vmem:[%s288] sm:$0xff] %v299
    // While loop
    $region90: #{custom-call.2} parent=1 // loop_pre_header
      _
    $region91: #{custom-call.2} parent=1 // loop_header
      %s302 = sphi 0, %s844
      %v303 = vlaneseq
      %v304 = vand.u32 %v303, 127
      %v305 = vmov %v304
      %v306 = vlaneseq
      %v307 = vshrl.u32 %v306, 7
      %v308 = vmov %v307
      %s309 = smov [#allocation12]
      %v310 = vlaneseq
      %v311 = vand.u32 %v310, 127
      %vm312 = vcmp.ge.s32.totalorder %v311, 0
      %vm313 = vcmp.lt.s32.totalorder %v311, 8
      %vm314 = vmand %vm312, %vm313
      %v315 = vld [vmem:[%s309] sm:$0xff]
      %v316 = vsel %vm314, %v315, 0.0
      %v317 = vmul.f32 %v316, %v316
      %vm320 = vcmp.eq.s32.totalorder %v308, %v305
      %v321 = vsel %vm320, 0.0, %v317
      %v322 = vlaneseq
      %v323 = vand.u32 %v322, 127
      %v324 = vmov %v323
      %v325 = vlaneseq
      %v326 = vshrl.u32 %v325, 7
      %v327 = vmov %v326
      %s328 = smov [#allocation13]
      %v329 = vlaneseq
      %v330 = vand.u32 %v329, 127
      %vm331 = vcmp.ge.s32.totalorder %v330, 0
      %vm332 = vcmp.lt.s32.totalorder %v330, 8
      %vm333 = vmand %vm331, %vm332
      %v334 = vld [vmem:[%s328] sm:$0xff]
      %v335 = vsel %vm333, %v334, 0.0
      %v336 = vmul.f32 %v335, %v335
      %v337 = vadd.f32 %v321, %v336
      %v338 = vadd.f32 %v317, %v336
      %v339 = vlaneseq
      %v340 = vand.u32 %v339, 127
      %v341 = vmov %v340
      %v342 = vlaneseq
      %v343 = vshrl.u32 %v342, 7
      %v344 = vmov %v343
      %s345 = smov [#allocation14]
      %v346 = vlaneseq
      %v347 = vand.u32 %v346, 127
      %vm348 = vcmp.ge.s32.totalorder %v347, 0
      %vm349 = vcmp.lt.s32.totalorder %v347, 8
      %vm350 = vmand %vm348, %vm349
      %v351 = vld [vmem:[%s345] sm:$0xff]
      %v352 = vsel %vm350, %v351, 0.0
      %v353 = vmul.f32 %v352, %v352
      %v354 = vadd.f32 %v337, %v353
      %v355 = vadd.f32 %v338, %v353
      %v356 = vlaneseq
      %v357 = vand.u32 %v356, 127
      %v358 = vmov %v357
      %v359 = vlaneseq
      %v360 = vshrl.u32 %v359, 7
      %v361 = vmov %v360
      %s362 = smov [#allocation15]
      %v363 = vlaneseq
      %v364 = vand.u32 %v363, 127
      %vm365 = vcmp.ge.s32.totalorder %v364, 0
      %vm366 = vcmp.lt.s32.totalorder %v364, 8
      %vm367 = vmand %vm365, %vm366
      %v368 = vld [vmem:[%s362] sm:$0xff]
      %v369 = vsel %vm367, %v368, 0.0
      %v370 = vmul.f32 %v369, %v369
      %vm373 = vcmp.eq.s32.totalorder %v361, %v358
      %v374 = vsel %vm373, 0.0, %v370
      %v375 = vadd.f32 %v354, %v374
      %v376 = vadd.f32 %v355, %v370
      %377 = vadd.xlane.f32.xlu0 %v376
      %v378 = vpop.xlane.xlu0 %377
      %v379 = vrot.slane %v378, 4
      %v380 = vadd.f32 %v378, %v379
      %v381 = vrot.slane %v380, 2
      %v382 = vadd.f32 %v380, %v381
      %v383 = vrot.slane %v382, 1
      %v384 = vadd.f32 %v382, %v383
      %385 = vadd.xlane.f32.xlu0 %v375
      %v386 = vpop.xlane.xlu0 %385
      %v387 = vrot.slane %v386, 4
      %v388 = vadd.f32 %v386, %v387
      %v389 = vrot.slane %v388, 2
      %v390 = vadd.f32 %v388, %v389
      %v391 = vrot.slane %v390, 1
      %v392 = vadd.f32 %v390, %v391
      %s393 = vtos %v392
      %s394 = vtos %v384
      %s395 = smul.f32 1e-10, %s394
      %p396 = scmp.le.f32.partialorder %s393, %s395
      %p397 = scmp.ge.s32.totalorder %s302, 15
      %p398 = por %p396, %p397
    $region92: #{custom-call.2} parent=1 // loop_header_branch
      %846 = sbr.rel (%p398) target = $region96
    $region93: #{custom-call.2} parent=1 // loop_body
      loop: start=0, step=1, limit=15
      $region97: #{custom-call.2} parent=93 // loop_pre_header
        _
      $region98: #{custom-call.2} parent=93 // loop_header
        %s400 = sphi 0, %s404
        %p401 = scmp.ge.s32.totalorder %s400, 15
      $region99: #{custom-call.2} parent=93 // loop_header_branch
        %403 = sbr.rel (%p401) target = $region103
      $region100: #{custom-call.2} parent=93 // loop_body
        #allocation16 [shape = 'f32[1024]{0}', space=vmem, size = 0x1000, scoped, tag = 'a_tl_diag vmem']
        #allocation17 [shape = 'f32[1024]{0}', space=vmem, size = 0x1000, scoped, tag = 'a_tr_diag vmem']
        #allocation18 [shape = 'f32[1024]{0}', space=vmem, size = 0x1000, scoped, tag = 'a_br_diag vmem']
        #allocation19 [shape = 'f32[1024]{0}', space=vmem, size = 0x1000, scoped, tag = 'rt1 vmem']
        #allocation20 [shape = 'f32[1024]{0}', space=vmem, size = 0x1000, scoped, tag = 'rt2 vmem']
        #allocation21 [shape = 'f32[1024]{0}', space=vmem, size = 0x1000, scoped, tag = 'c vmem']
        #allocation22 [shape = 'f32[1024]{0}', space=vmem, size = 0x1000, scoped, tag = 's vmem']
        #allocation23 [shape = 'f32[4096]{0}', space=vmem, size = 0x4000, scoped, tag = 'c broadcast']
        #allocation24 [shape = 'f32[4096]{0}', space=vmem, size = 0x4000, scoped, tag = 's broadcast']
        %s405 = smov [#allocation12]
        %s406 = smov [#allocation16]
        %v407 = vlaneseq
        %v408 = vand.u32 %v407, 127
        %v409 = vmov %v408
        %v410 = vlaneseq
        %v411 = vshrl.u32 %v410, 7
        %v412 = vmov %v411
        %v413 = vld [vmem:[%s405] sm:$0xff]
        %vm416 = vcmp.eq.s32.totalorder %v412, %v409
        %v417 = vsel %vm416, %v413, 0.0
        %v418 = vrot.slane %v417, 4
        %v419 = vadd.f32 %v417, %v418
        %v420 = vrot.slane %v419, 2
        %v421 = vadd.f32 %v419, %v420
        %v422 = vrot.slane %v421, 1
        %v423 = vadd.f32 %v421, %v422
        %424 = vst [vmem:[%s406] sm:$0x1] %v423
        %s425 = smov [#allocation13]
        %s426 = smov [#allocation17]
        %v427 = vlaneseq
        %v428 = vand.u32 %v427, 127
        %v429 = vmov %v428
        %v430 = vlaneseq
        %v431 = vshrl.u32 %v430, 7
        %v432 = vmov %v431
        %v433 = vld [vmem:[%s425] sm:$0xff]
        %vm436 = vcmp.eq.s32.totalorder %v432, %v429
        %v437 = vsel %vm436, %v433, 0.0
        %v438 = vrot.slane %v437, 4
        %v439 = vadd.f32 %v437, %v438
        %v440 = vrot.slane %v439, 2
        %v441 = vadd.f32 %v439, %v440
        %v442 = vrot.slane %v441, 1
        %v443 = vadd.f32 %v441, %v442
        %444 = vst [vmem:[%s426] sm:$0x1] %v443
        %s445 = smov [#allocation15]
        %s446 = smov [#allocation18]
        %v447 = vlaneseq
        %v448 = vand.u32 %v447, 127
        %v449 = vmov %v448
        %v450 = vlaneseq
        %v451 = vshrl.u32 %v450, 7
        %v452 = vmov %v451
        %v453 = vld [vmem:[%s445] sm:$0xff]
        %vm456 = vcmp.eq.s32.totalorder %v452, %v449
        %v457 = vsel %vm456, %v453, 0.0
        %v458 = vrot.slane %v457, 4
        %v459 = vadd.f32 %v457, %v458
        %v460 = vrot.slane %v459, 2
        %v461 = vadd.f32 %v459, %v460
        %v462 = vrot.slane %v461, 1
        %v463 = vadd.f32 %v461, %v462
        %464 = vst [vmem:[%s446] sm:$0x1] %v463
        %s465 = smov [#allocation21]
        %s466 = smov [#allocation22]
        %s467 = smov [#allocation16]
        %v468 = vld [vmem:[%s467] sm:$0xff]
        %s469 = smov [#allocation17]
        %v470 = vld [vmem:[%s469] sm:$0xff]
        %s471 = smov [#allocation18]
        %v472 = vld [vmem:[%s471] sm:$0xff]
        %v473 = vsub.f32 %v472, %v468
        %v474 = vmul.f32 2.0, %v470
        %v475 = vrcp.pop %v474
        %v476 = vmul.f32 %v473, %v475
        %vm477 = vcmp.ge.f32.partialorder %v476, 0.0
        %v478 = vmul.f32 %v476, %v476
        %v479 = vadd.f32 1.0, %v478
        %v480 = vrsqrt.pop %v479
        %v481 = vmul.f32 %v479, %v480
        %vm482 = vcmp.eq.f32.partialorder %v479, inf
        %v483 = vsel %vm482, %v479, %v481
        %vm484 = vcmp.eq.f32.partialorder %v479, 0.0
        %v485 = vand.u32 %v479, 2147483648
        %v486 = vsel %vm484, %v485, %v483
        %v487 = vxor.u32 %v486, 2147483648
        %v488 = vsel %vm477, %v486, %v487
        %v489 = vadd.f32 %v476, %v488
        %v490 = vrcp.pop %v489
        %v491 = vand.u32 2147483647, %v468
        %v492 = vand.u32 2147483647, %v470
        %v493 = vand.u32 2147483647, %v472
        %v494 = vmin.f32 %v491, %v493
        %v495 = vmul.f32 1.1920929e-08, %v494
        %vm496 = vcmp.le.f32.partialorder %v492, %v495
        %v497 = vsel %vm496, 0.0, %v490
        %v498 = vmul.f32 %v497, %v497
        %v499 = vadd.f32 1.0, %v498
        %v500 = vrsqrt.pop %v499
        %v501 = vmul.f32 %v497, %v500
        %v502 = vmul.f32 %v497, %v470
        %v503 = vsub.f32 %v468, %v502
        %v504 = vmul.f32 %v497, %v470
        %v505 = vadd.f32 %v472, %v504
        %s506 = smov [#allocation19]
        %507 = vst [vmem:[%s506] sm:$0xff] %v503
        %s508 = smov [#allocation20]
        %509 = vst [vmem:[%s508] sm:$0xff] %v505
        %s510 = smov %s465
        %511 = vst [vmem:[%s510] sm:$0xff] %v500
        %s512 = smov %s466
        %513 = vst [vmem:[%s512] sm:$0xff] %v501
        %s514 = smov [#allocation21]
        %v515 = vld [vmem:[%s514] ss:$0 sm:$0xff]
        %v516 = vlaneseq
        %v517 = vand.u32 %v516, 127
        %v518 = vmov %v517
        %v519 = vlaneseq
        %v520 = vshrl.u32 %v519, 7
        %v521 = vmov %v520
        %vm523 = vcmp.eq.s32.totalorder %v521, %v518
        %v524 = vsel %vm523, %v515, 0.0
        %525 = vadd.xlane.f32.xlu0 %v524
        %v526 = vpop.xlane.xlu0 %525
        %s527 = smov [#allocation23]
        %528 = vst [vmem:[%s527] sm:$0xff] %v526
        %s529 = smov [#allocation22]
        %v530 = vld [vmem:[%s529] ss:$0 sm:$0xff]
        %v531 = vlaneseq
        %v532 = vand.u32 %v531, 127
        %v533 = vmov %v532
        %v534 = vlaneseq
        %v535 = vshrl.u32 %v534, 7
        %v536 = vmov %v535
        %vm538 = vcmp.eq.s32.totalorder %v536, %v533
        %v539 = vsel %vm538, %v530, 0.0
        %540 = vadd.xlane.f32.xlu0 %v539
        %v541 = vpop.xlane.xlu0 %540
        %s542 = smov [#allocation24]
        %543 = vst [vmem:[%s542] sm:$0xff] %v541
        %s544 = smov [#allocation23]
        %v545 = vld [vmem:[%s544] sm:$0xff]
        %s546 = smov [#allocation24]
        %v547 = vld [vmem:[%s546] sm:$0xff]
        %s548 = smov [#allocation12]
        %s549 = smov [#allocation13]
        %s550 = smov [#allocation14]
        %s551 = smov [#allocation15]
        %v552 = vld [vmem:[%s548] sm:$0xff]
        %v553 = vld [vmem:[%s549] sm:$0xff]
        %v554 = vld [vmem:[%s550] sm:$0xff]
        %v555 = vld [vmem:[%s551] sm:$0xff]
        %v556 = vmul.f32 %v545, %v552
        %v557 = vmul.f32 %v547, %v554
        %v558 = vsub.f32 %v556, %v557
        %v559 = vmul.f32 %v545, %v553
        %v560 = vmul.f32 %v547, %v555
        %v561 = vsub.f32 %v559, %v560
        %v562 = vmul.f32 %v547, %v552
        %v563 = vmul.f32 %v545, %v554
        %v564 = vadd.f32 %v562, %v563
        %v565 = vmul.f32 %v547, %v553
        %v566 = vmul.f32 %v545, %v555
        %v567 = vadd.f32 %v565, %v566
        %568 = vst [vmem:[%s548] sm:$0xff] %v558
        %569 = vst [vmem:[%s549] sm:$0xff] %v561
        %570 = vst [vmem:[%s550] sm:$0xff] %v564
        %571 = vst [vmem:[%s551] sm:$0xff] %v567
        %s572 = smov [#allocation21]
        %v573 = vld [vmem:[%s572] ss:$0 sm:$0xff]
        %s574 = smov [#allocation22]
        %v575 = vld [vmem:[%s574] ss:$0 sm:$0xff]
        %s576 = smov [#allocation12]
        %s577 = smov [#allocation13]
        %s578 = smov [#allocation14]
        %s579 = smov [#allocation15]
        %v580 = vld [vmem:[%s576] sm:$0xff]
        %v581 = vld [vmem:[%s577] sm:$0xff]
        %v582 = vld [vmem:[%s578] sm:$0xff]
        %v583 = vld [vmem:[%s579] sm:$0xff]
        %v584 = vmul.f32 %v573, %v580
        %v585 = vmul.f32 %v575, %v581
        %v586 = vsub.f32 %v584, %v585
        %v587 = vmul.f32 %v575, %v580
        %v588 = vmul.f32 %v573, %v581
        %v589 = vadd.f32 %v587, %v588
        %v590 = vmul.f32 %v573, %v582
        %v591 = vmul.f32 %v575, %v583
        %v592 = vsub.f32 %v590, %v591
        %v593 = vmul.f32 %v575, %v582
        %v594 = vmul.f32 %v573, %v583
        %v595 = vadd.f32 %v593, %v594
        %596 = vst [vmem:[%s576] sm:$0xff] %v586
        %597 = vst [vmem:[%s577] sm:$0xff] %v589
        %598 = vst [vmem:[%s578] sm:$0xff] %v592
        %599 = vst [vmem:[%s579] sm:$0xff] %v595
        %s600 = smov [#allocation12]
        %s601 = smov [#allocation19]
        %v602 = vlaneseq
        %v603 = vand.u32 %v602, 127
        %v604 = vmov %v603
        %v605 = vlaneseq
        %v606 = vshrl.u32 %v605, 7
        %v607 = vmov %v606
        %v608 = vld [vmem:[%s601] ss:$0 sm:$0xff]
        %v609 = vld [vmem:[%s600] sm:$0xff]
        %vm612 = vcmp.eq.s32.totalorder %v607, %v604
        %v613 = vsel %vm612, %v608, %v609
        %614 = vst [vmem:[%s600] sm:$0xff] %v613
        %s615 = smov [#allocation13]
        %v616 = vlaneseq
        %v617 = vand.u32 %v616, 127
        %v618 = vmov %v617
        %v619 = vlaneseq
        %v620 = vshrl.u32 %v619, 7
        %v621 = vmov %v620
        %v622 = vld [vmem:[%s615] sm:$0xff]
        %vm625 = vcmp.eq.s32.totalorder %v621, %v618
        %v626 = vsel %vm625, 0.0, %v622
        %627 = vst [vmem:[%s615] sm:$0xff] %v626
        %s628 = smov [#allocation14]
        %v629 = vlaneseq
        %v630 = vand.u32 %v629, 127
        %v631 = vmov %v630
        %v632 = vlaneseq
        %v633 = vshrl.u32 %v632, 7
        %v634 = vmov %v633
        %v635 = vld [vmem:[%s628] sm:$0xff]
        %vm638 = vcmp.eq.s32.totalorder %v634, %v631
        %v639 = vsel %vm638, 0.0, %v635
        %640 = vst [vmem:[%s628] sm:$0xff] %v639
        %s641 = smov [#allocation15]
        %s642 = smov [#allocation20]
        %v643 = vlaneseq
        %v644 = vand.u32 %v643, 127
        %v645 = vmov %v644
        %v646 = vlaneseq
        %v647 = vshrl.u32 %v646, 7
        %v648 = vmov %v647
        %v649 = vld [vmem:[%s642] ss:$0 sm:$0xff]
        %v650 = vld [vmem:[%s641] sm:$0xff]
        %vm653 = vcmp.eq.s32.totalorder %v648, %v645
        %v654 = vsel %vm653, %v649, %v650
        %655 = vst [vmem:[%s641] sm:$0xff] %v654
        %s656 = smov [#allocation12]
        %s657 = smov [#allocation13]
        %v658 = vld [vmem:[%s657] sm:$0xff]
        %659 = vrot.lane.b32.xlu0 %v658, 1
        %v660 = vpop.permute.xlu0 %659
        %v661 = vld [vmem:[%s656] sm:$0xff]
        %v662 = vld [vmem:[%s656] sm:$0xff]
        %663 = vrot.lane.b32.xlu0 %v662, 1
        %v664 = vpop.permute.xlu0 %663
        %v665 = vlaneseq
        %v666 = vand.u32 %v665, 127
        %vm667 = vcmp.eq.s32.totalorder %v666, 0
        %v668 = vsel %vm667, %v662, %v664
        %v669 = vlaneseq
        %v670 = vand.u32 %v669, 127
        %vm671 = vcmp.eq.s32.totalorder %v670, 1
        %v672 = vsel %vm671, %v660, %v668
        %v673 = vlaneseq
        %v674 = vand.u32 %v673, 127
        %vm675 = vcmp.ge.s32.totalorder %v674, 0
        %vm676 = vcmp.lt.s32.totalorder %v674, 8
        %vm677 = vmand %vm675, %vm676
        %v678 = vsel %vm677, %v672, 0.0
        %v679 = vld [vmem:[%s657] sm:$0xff]
        %680 = vrot.lane.b32.xlu0 %v679, 127
        %v681 = vpop.permute.xlu0 %680
        %v682 = vlaneseq
        %v683 = vand.u32 %v682, 127
        %vm684 = vcmp.eq.s32.totalorder %v683, 7
        %v685 = vsel %vm684, %v661, %v681
        %686 = vst [vmem:[%s656] sm:$0xff] %v678
        %687 = vst [vmem:[%s657] sm:$0xff] %v685
        %s688 = smov [#allocation14]
        %s689 = smov [#allocation15]
        %v690 = vld [vmem:[%s689] sm:$0xff]
        %691 = vrot.lane.b32.xlu0 %v690, 1
        %v692 = vpop.permute.xlu0 %691
        %v693 = vld [vmem:[%s688] sm:$0xff]
        %v694 = vld [vmem:[%s688] sm:$0xff]
        %695 = vrot.lane.b32.xlu0 %v694, 1
        %v696 = vpop.permute.xlu0 %695
        %v697 = vlaneseq
        %v698 = vand.u32 %v697, 127
        %vm699 = vcmp.eq.s32.totalorder %v698, 0
        %v700 = vsel %vm699, %v694, %v696
        %v701 = vlaneseq
        %v702 = vand.u32 %v701, 127
        %vm703 = vcmp.eq.s32.totalorder %v702, 1
        %v704 = vsel %vm703, %v692, %v700
        %v705 = vlaneseq
        %v706 = vand.u32 %v705, 127
        %vm707 = vcmp.ge.s32.totalorder %v706, 0
        %vm708 = vcmp.lt.s32.totalorder %v706, 8
        %vm709 = vmand %vm707, %vm708
        %v710 = vsel %vm709, %v704, 0.0
        %v711 = vld [vmem:[%s689] sm:$0xff]
        %712 = vrot.lane.b32.xlu0 %v711, 127
        %v713 = vpop.permute.xlu0 %712
        %v714 = vlaneseq
        %v715 = vand.u32 %v714, 127
        %vm716 = vcmp.eq.s32.totalorder %v715, 7
        %v717 = vsel %vm716, %v693, %v713
        %718 = vst [vmem:[%s688] sm:$0xff] %v710
        %719 = vst [vmem:[%s689] sm:$0xff] %v717
        %s720 = smov [#allocation12]
        %s721 = smov [#allocation14]
        %v722 = vld [vmem:[%s720] ss:$0 sm:$0xff]
        %s724 = scalar_lea.vmem %s720, 4294967295
        %v725 = vld [vmem:[%s724] sm:$0xfe]
        %v726 = vlaneseq
        %v727 = vshrl.u32 %v726, 7
        %vm728 = vcmp.eq.s32.totalorder %v727, 0
        %v729 = vsel %vm728, %v722, %v725
        %s730 = scalar_lea.vmem %s720, 7
        %v731 = vld [vmem:[%s730] ss:$0 sm:$0xff]
        %732 = vst [vmem:[%s720] sm:$0xff] %v729
        %v733 = vld [vmem:[%s721] ss:$0 sm:$0xff]
        %s734 = scalar_lea.vmem %s720, 1
        %735 = vst [vmem:[%s734] sm:$0x1] %v733
        %s736 = scalar_lea.vmem %s721, 1
        %v737 = vld [vmem:[%s736] sm:$0x7f]
        %v738 = vlaneseq
        %v739 = vshrl.u32 %v738, 7
        %vm740 = vcmp.eq.s32.totalorder %v739, 7
        %v741 = vsel %vm740, %v731, %v737
        %v742 = vld [vmem:[%s721] ss:$0 sm:$0xff]
        %743 = vst [vmem:[%s721] sm:$0xff] %v741
        %s744 = smov [#allocation13]
        %s745 = smov [#allocation15]
        %v746 = vld [vmem:[%s744] ss:$0 sm:$0xff]
        %s748 = scalar_lea.vmem %s744, 4294967295
        %v749 = vld [vmem:[%s748] sm:$0xfe]
        %v750 = vlaneseq
        %v751 = vshrl.u32 %v750, 7
        %vm752 = vcmp.eq.s32.totalorder %v751, 0
        %v753 = vsel %vm752, %v746, %v749
        %s754 = scalar_lea.vmem %s744, 7
        %v755 = vld [vmem:[%s754] ss:$0 sm:$0xff]
        %756 = vst [vmem:[%s744] sm:$0xff] %v753
        %v757 = vld [vmem:[%s745] ss:$0 sm:$0xff]
        %s758 = scalar_lea.vmem %s744, 1
        %759 = vst [vmem:[%s758] sm:$0x1] %v757
        %s760 = scalar_lea.vmem %s745, 1
        %v761 = vld [vmem:[%s760] sm:$0x7f]
        %v762 = vlaneseq
        %v763 = vshrl.u32 %v762, 7
        %vm764 = vcmp.eq.s32.totalorder %v763, 7
        %v765 = vsel %vm764, %v755, %v761
        %v766 = vld [vmem:[%s745] ss:$0 sm:$0xff]
        %767 = vst [vmem:[%s745] sm:$0xff] %v765
        %s768 = smov [#allocation23]
        %v769 = vld [vmem:[%s768] sm:$0xff]
        %s770 = smov [#allocation24]
        %v771 = vld [vmem:[%s770] sm:$0xff]
        %s772 = smov [#allocation8]
        %s773 = smov [#allocation9]
        %s774 = smov [#allocation10]
        %s775 = smov [#allocation11]
        %v776 = vld [vmem:[%s772] sm:$0xff]
        %v777 = vld [vmem:[%s773] sm:$0xff]
        %v778 = vld [vmem:[%s774] sm:$0xff]
        %v779 = vld [vmem:[%s775] sm:$0xff]
        %v780 = vmul.f32 %v769, %v776
        %v781 = vmul.f32 %v771, %v778
        %v782 = vsub.f32 %v780, %v781
        %v783 = vmul.f32 %v769, %v777
        %v784 = vmul.f32 %v771, %v779
        %v785 = vsub.f32 %v783, %v784
        %v786 = vmul.f32 %v771, %v776
        %v787 = vmul.f32 %v769, %v778
        %v788 = vadd.f32 %v786, %v787
        %v789 = vmul.f32 %v771, %v777
        %v790 = vmul.f32 %v769, %v779
        %v791 = vadd.f32 %v789, %v790
        %792 = vst [vmem:[%s772] sm:$0xff] %v782
        %793 = vst [vmem:[%s773] sm:$0xff] %v785
        %794 = vst [vmem:[%s774] sm:$0xff] %v788
        %795 = vst [vmem:[%s775] sm:$0xff] %v791
        %s796 = smov [#allocation8]
        %s797 = smov [#allocation10]
        %v798 = vld [vmem:[%s796] ss:$0 sm:$0xff]
        %s800 = scalar_lea.vmem %s796, 4294967295
        %v801 = vld [vmem:[%s800] sm:$0xfe]
        %v802 = vlaneseq
        %v803 = vshrl.u32 %v802, 7
        %vm804 = vcmp.eq.s32.totalorder %v803, 0
        %v805 = vsel %vm804, %v798, %v801
        %s806 = scalar_lea.vmem %s796, 7
        %v807 = vld [vmem:[%s806] ss:$0 sm:$0xff]
        %808 = vst [vmem:[%s796] sm:$0xff] %v805
        %v809 = vld [vmem:[%s797] ss:$0 sm:$0xff]
        %s810 = scalar_lea.vmem %s796, 1
        %811 = vst [vmem:[%s810] sm:$0x1] %v809
        %s812 = scalar_lea.vmem %s797, 1
        %v813 = vld [vmem:[%s812] sm:$0x7f]
        %v814 = vlaneseq
        %v815 = vshrl.u32 %v814, 7
        %vm816 = vcmp.eq.s32.totalorder %v815, 7
        %v817 = vsel %vm816, %v807, %v813
        %v818 = vld [vmem:[%s797] ss:$0 sm:$0xff]
        %819 = vst [vmem:[%s797] sm:$0xff] %v817
        %s820 = smov [#allocation9]
        %s821 = smov [#allocation11]
        %v822 = vld [vmem:[%s820] ss:$0 sm:$0xff]
        %s824 = scalar_lea.vmem %s820, 4294967295
        %v825 = vld [vmem:[%s824] sm:$0xfe]
        %v826 = vlaneseq
        %v827 = vshrl.u32 %v826, 7
        %vm828 = vcmp.eq.s32.totalorder %v827, 0
        %v829 = vsel %vm828, %v822, %v825
        %s830 = scalar_lea.vmem %s820, 7
        %v831 = vld [vmem:[%s830] ss:$0 sm:$0xff]
        %832 = vst [vmem:[%s820] sm:$0xff] %v829
        %v833 = vld [vmem:[%s821] ss:$0 sm:$0xff]
        %s834 = scalar_lea.vmem %s820, 1
        %835 = vst [vmem:[%s834] sm:$0x1] %v833
        %s836 = scalar_lea.vmem %s821, 1
        %v837 = vld [vmem:[%s836] sm:$0x7f]
        %v838 = vlaneseq
        %v839 = vshrl.u32 %v838, 7
        %vm840 = vcmp.eq.s32.totalorder %v839, 7
        %v841 = vsel %vm840, %v831, %v837
        %v842 = vld [vmem:[%s821] ss:$0 sm:$0xff]
        %843 = vst [vmem:[%s821] sm:$0xff] %v841
      $region101: #{custom-call.2} parent=93 // loop_footer
        %s404 = sadd.s32 1, %s400
      $region102: #{custom-call.2} parent=93 // loop_footer_branch
        %399 = sbr.rel target = $region98
      $region103: #{custom-call.2} parent=93 // loop_exit
        _
      %s844 = sadd.s32 %s302, 1
    $region94: #{custom-call.2} parent=1 // loop_footer
      _
    $region95: #{custom-call.2} parent=1 // loop_footer_branch
      %301 = sbr.rel target = $region91
    $region96: #{custom-call.2} parent=1 // loop_exit
      _
    %s847 = smov [#allocation12]
    %s848 = smov [#allocation4]
    %v849 = vlaneseq
    %v850 = vand.u32 %v849, 127
    %v851 = vmov %v850
    %v852 = vlaneseq
    %v853 = vshrl.u32 %v852, 7
    %v854 = vmov %v853
    %v855 = vld [vmem:[%s847] sm:$0xff]
    %vm858 = vcmp.eq.s32.totalorder %v854, %v851
    %v859 = vsel %vm858, %v855, 0.0
    %v860 = vrot.slane %v859, 4
    %v861 = vadd.f32 %v859, %v860
    %v862 = vrot.slane %v861, 2
    %v863 = vadd.f32 %v861, %v862
    %v864 = vrot.slane %v863, 1
    %v865 = vadd.f32 %v863, %v864
    %866 = vst [vmem:[%s848] sm:$0x1] %v865
    %s867 = smov [#allocation15]
    %s868 = smov [#allocation6]
    %v869 = vlaneseq
    %v870 = vand.u32 %v869, 127
    %v871 = vmov %v870
    %v872 = vlaneseq
    %v873 = vshrl.u32 %v872, 7
    %v874 = vmov %v873
    %v875 = vld [vmem:[%s867] sm:$0xff]
    %vm878 = vcmp.eq.s32.totalorder %v874, %v871
    %v879 = vsel %vm878, %v875, 0.0
    %v880 = vrot.slane %v879, 4
    %v881 = vadd.f32 %v879, %v880
    %v882 = vrot.slane %v881, 2
    %v883 = vadd.f32 %v881, %v882
    %v884 = vrot.slane %v883, 1
    %v885 = vadd.f32 %v883, %v884
    %886 = vst [vmem:[%s868] sm:$0x1] %v885
    %s888 = sshllo.u32 0, 1
    %v890 = vld [vmem:[#allocation4] sm:%s888]
    %s891 = sshllo.u32 0, 1
    %892 = vst [vmem:[#allocation5] sm:%s891] %v890
    %s894 = sshllo.u32 0, 1
    %v896 = vld [vmem:[#allocation6] sm:%s894]
    %s897 = sshllo.u32 0, 1
    %898 = vst [vmem:[#allocation7] sm:%s897] %v896
    // Predicated region
    $region104: #{custom-call.2} parent=1 // pred_check
      _
    $region105: #{custom-call.2} parent=1 // pred_check_branch
      %900 = sbr.rel (0) target = $region107
    $region106: #{custom-call.2} parent=1 // pred_region
      %p902 = scmp.gt.s32.totalorder 1, 0
      // Predicated region
      $region108: #{custom-call.2} parent=106 // pred_check
        %p903 = pneg %p902
      $region109: #{custom-call.2} parent=106 // pred_check_branch
        %905 = sbr.rel (%p903) target = $region111
      $region110: #{custom-call.2} parent=106 // pred_region
        %s906 = sshra.s32 1, 3
        %p907 = scmp.gt.s32.totalorder %s906, 0
        // Predicated region
        $region112: #{custom-call.2} parent=110 // pred_check
          %p908 = pneg %p907
        $region113: #{custom-call.2} parent=110 // pred_check_branch
          %910 = sbr.rel (%p908) target = $region115
        $region114: #{custom-call.2} parent=110 // pred_region
          %s911 = ssub.s32 %s906, 1
          %s912 = smul.u32 %s911, 128
          %s913 = sshra.s32 %s912, 4
          %s914 = scalar_lea.vmem [#allocation5], %s913
          %v915 = vld [vmem:[#allocation5] sm:$0xff]
          // While loop
          $region116: #{custom-call.2} parent=114 // loop_pre_header
            _
          $region117: #{custom-call.2} parent=114 // loop_header
            %s916 = sphi [#allocation5], %s938
            %s917 = sphi %s4, %s939
            %v918 = vphi %v915, %v940
            %s919 = ssub.s32 %s914, 64
            %p920 = scmp.gt.s32.totalorder %s916, %s919
          $region118: #{custom-call.2} parent=114 // loop_header_branch
            %922 = sbr.rel (%p920) target = $region122
          $region119: #{custom-call.2} parent=114 // loop_body
            %923 = vst [vmem:[%s917] sm:$0xff] %v918
            %v924 = vld [vmem:[%s916 + $0x8] sm:$0xff]
            %925 = vst [vmem:[%s917 + $0x8] sm:$0xff] %v924
            %v926 = vld [vmem:[%s916 + $0x10] sm:$0xff]
            %927 = vst [vmem:[%s917 + $0x10] sm:$0xff] %v926
            %v928 = vld [vmem:[%s916 + $0x18] sm:$0xff]
            %929 = vst [vmem:[%s917 + $0x18] sm:$0xff] %v928
            %v930 = vld [vmem:[%s916 + $0x20] sm:$0xff]
            %931 = vst [vmem:[%s917 + $0x20] sm:$0xff] %v930
            %v932 = vld [vmem:[%s916 + $0x28] sm:$0xff]
            %933 = vst [vmem:[%s917 + $0x28] sm:$0xff] %v932
            %v934 = vld [vmem:[%s916 + $0x30] sm:$0xff]
            %935 = vst [vmem:[%s917 + $0x30] sm:$0xff] %v934
            %v936 = vld [vmem:[%s916 + $0x38] sm:$0xff]
            %937 = vst [vmem:[%s917 + $0x38] sm:$0xff] %v936
          $region120: #{custom-call.2} parent=114 // loop_footer
            %s938 = scalar_lea.vmem %s916, 64
            %s939 = scalar_lea.vmem %s917, 64
            %v940 = vld [vmem:[%s916 + $0x40] sm:$0xff]
          $region121: #{custom-call.2} parent=114 // loop_footer_branch
            %941 = sbr.rel target = $region117
          $region122: #{custom-call.2} parent=114 // loop_exit
            _
          // While loop
          $region123: #{custom-call.2} parent=114 // loop_pre_header
            _
          $region124: #{custom-call.2} parent=114 // loop_header
            %s942 = sphi %s916, %s950
            %s943 = sphi %s917, %s951
            %v944 = vphi %v918, %v944
            %p945 = scmp.gt.s32.totalorder %s942, %s914
          $region125: #{custom-call.2} parent=114 // loop_header_branch
            %947 = sbr.rel (%p945) target = $region129
          $region126: #{custom-call.2} parent=114 // loop_body
            %v948 = vld [vmem:[%s942] sm:$0xff]
            %949 = vst [vmem:[%s943] sm:$0xff] %v948
          $region127: #{custom-call.2} parent=114 // loop_footer
            %s950 = scalar_lea.vmem %s942, 8
            %s951 = scalar_lea.vmem %s943, 8
          $region128: #{custom-call.2} parent=114 // loop_footer_branch
            %952 = sbr.rel target = $region124
          $region129: #{custom-call.2} parent=114 // loop_exit
            _
        $region115: #{custom-call.2} parent=110 // pred_fallthru
          _
        %s953 = sand.u32 1, 7
        %s954 = sshllo.u32 0, %s953
        %s955 = smul.u32 %s906, 128
        %s956 = sshra.s32 %s955, 4
        %s957 = scalar_lea.vmem %s4, %s956
        %s958 = smul.u32 %s906, 128
        %s959 = sshra.s32 %s958, 4
        %s960 = scalar_lea.vmem [#allocation5], %s959
        %v961 = vld [vmem:[%s960] sm:%s954]
        %962 = vst [vmem:[%s957] sm:%s954] %v961
      $region111: #{custom-call.2} parent=106 // pred_fallthru
        _
    $region107: #{custom-call.2} parent=1 // pred_fallthru
      _
    // Predicated region
    $region130: #{custom-call.2} parent=1 // pred_check
      _
    $region131: #{custom-call.2} parent=1 // pred_check_branch
      %964 = sbr.rel (0) target = $region133
    $region132: #{custom-call.2} parent=1 // pred_region
      %p966 = scmp.gt.s32.totalorder 1, 0
      // Predicated region
      $region134: #{custom-call.2} parent=132 // pred_check
        %p967 = pneg %p966
      $region135: #{custom-call.2} parent=132 // pred_check_branch
        %969 = sbr.rel (%p967) target = $region137
      $region136: #{custom-call.2} parent=132 // pred_region
        %s970 = sshra.s32 1, 3
        %p971 = scmp.gt.s32.totalorder %s970, 0
        // Predicated region
        $region138: #{custom-call.2} parent=136 // pred_check
          %p972 = pneg %p971
        $region139: #{custom-call.2} parent=136 // pred_check_branch
          %974 = sbr.rel (%p972) target = $region141
        $region140: #{custom-call.2} parent=136 // pred_region
          %s975 = ssub.s32 %s970, 1
          %s976 = smul.u32 %s975, 128
          %s977 = sshra.s32 %s976, 4
          %s978 = scalar_lea.vmem [#allocation7], %s977
          %v979 = vld [vmem:[#allocation7] sm:$0xff]
          // While loop
          $region142: #{custom-call.2} parent=140 // loop_pre_header
            _
          $region143: #{custom-call.2} parent=140 // loop_header
            %s980 = sphi [#allocation7], %s1002
            %s981 = sphi %s5, %s1003
            %v982 = vphi %v979, %v1004
            %s983 = ssub.s32 %s978, 64
            %p984 = scmp.gt.s32.totalorder %s980, %s983
          $region144: #{custom-call.2} parent=140 // loop_header_branch
            %986 = sbr.rel (%p984) target = $region148
          $region145: #{custom-call.2} parent=140 // loop_body
            %987 = vst [vmem:[%s981] sm:$0xff] %v982
            %v988 = vld [vmem:[%s980 + $0x8] sm:$0xff]
            %989 = vst [vmem:[%s981 + $0x8] sm:$0xff] %v988
            %v990 = vld [vmem:[%s980 + $0x10] sm:$0xff]
            %991 = vst [vmem:[%s981 + $0x10] sm:$0xff] %v990
            %v992 = vld [vmem:[%s980 + $0x18] sm:$0xff]
            %993 = vst [vmem:[%s981 + $0x18] sm:$0xff] %v992
            %v994 = vld [vmem:[%s980 + $0x20] sm:$0xff]
            %995 = vst [vmem:[%s981 + $0x20] sm:$0xff] %v994
            %v996 = vld [vmem:[%s980 + $0x28] sm:$0xff]
            %997 = vst [vmem:[%s981 + $0x28] sm:$0xff] %v996
            %v998 = vld [vmem:[%s980 + $0x30] sm:$0xff]
            %999 = vst [vmem:[%s981 + $0x30] sm:$0xff] %v998
            %v1000 = vld [vmem:[%s980 + $0x38] sm:$0xff]
            %1001 = vst [vmem:[%s981 + $0x38] sm:$0xff] %v1000
          $region146: #{custom-call.2} parent=140 // loop_footer
            %s1002 = scalar_lea.vmem %s980, 64
            %s1003 = scalar_lea.vmem %s981, 64
            %v1004 = vld [vmem:[%s980 + $0x40] sm:$0xff]
          $region147: #{custom-call.2} parent=140 // loop_footer_branch
            %1005 = sbr.rel target = $region143
          $region148: #{custom-call.2} parent=140 // loop_exit
            _
          // While loop
          $region149: #{custom-call.2} parent=140 // loop_pre_header
            _
          $region150: #{custom-call.2} parent=140 // loop_header
            %s1006 = sphi %s980, %s1014
            %s1007 = sphi %s981, %s1015
            %v1008 = vphi %v982, %v1008
            %p1009 = scmp.gt.s32.totalorder %s1006, %s978
          $region151: #{custom-call.2} parent=140 // loop_header_branch
            %1011 = sbr.rel (%p1009) target = $region155
          $region152: #{custom-call.2} parent=140 // loop_body
            %v1012 = vld [vmem:[%s1006] sm:$0xff]
            %1013 = vst [vmem:[%s1007] sm:$0xff] %v1012
          $region153: #{custom-call.2} parent=140 // loop_footer
            %s1014 = scalar_lea.vmem %s1006, 8
            %s1015 = scalar_lea.vmem %s1007, 8
          $region154: #{custom-call.2} parent=140 // loop_footer_branch
            %1016 = sbr.rel target = $region150
          $region155: #{custom-call.2} parent=140 // loop_exit
            _
        $region141: #{custom-call.2} parent=136 // pred_fallthru
          _
        %s1017 = sand.u32 1, 7
        %s1018 = sshllo.u32 0, %s1017
        %s1019 = smul.u32 %s970, 128
        %s1020 = sshra.s32 %s1019, 4
        %s1021 = scalar_lea.vmem %s5, %s1020
        %s1022 = smul.u32 %s970, 128
        %s1023 = sshra.s32 %s1022, 4
        %s1024 = scalar_lea.vmem [#allocation7], %s1023
        %v1025 = vld [vmem:[%s1024] sm:%s1018]
        %1026 = vst [vmem:[%s1021] sm:%s1018] %v1025
      $region137: #{custom-call.2} parent=132 // pred_fallthru
        _
    $region133: #{custom-call.2} parent=1 // pred_fallthru
      _
    %p1028 = scmp.gt.s32.totalorder 8, 0
    // Predicated region
    $region156: #{custom-call.2} parent=1 // pred_check
      %p1029 = pneg %p1028
    $region157: #{custom-call.2} parent=1 // pred_check_branch
      %1031 = sbr.rel (%p1029) target = $region159
    $region158: #{custom-call.2} parent=1 // pred_region
      %s1032 = sshra.s32 8, 3
      %p1033 = scmp.gt.s32.totalorder %s1032, 0
      // Predicated region
      $region160: #{custom-call.2} parent=158 // pred_check
        %p1034 = pneg %p1033
      $region161: #{custom-call.2} parent=158 // pred_check_branch
        %1036 = sbr.rel (%p1034) target = $region163
      $region162: #{custom-call.2} parent=158 // pred_region
        %s1037 = ssub.s32 %s1032, 1
        %s1038 = smul.u32 %s1037, 128
        %s1039 = sshra.s32 %s1038, 4
        %s1040 = scalar_lea.vmem [#allocation8], %s1039
        %v1041 = vld [vmem:[#allocation8] sm:$0xff]
        // While loop
        $region164: #{custom-call.2} parent=162 // loop_pre_header
          _
        $region165: #{custom-call.2} parent=162 // loop_header
          %s1042 = sphi [#allocation8], %s1064
          %s1043 = sphi %s6, %s1065
          %v1044 = vphi %v1041, %v1066
          %s1045 = ssub.s32 %s1040, 64
          %p1046 = scmp.gt.s32.totalorder %s1042, %s1045
        $region166: #{custom-call.2} parent=162 // loop_header_branch
          %1048 = sbr.rel (%p1046) target = $region170
        $region167: #{custom-call.2} parent=162 // loop_body
          %1049 = vst [vmem:[%s1043] sm:$0xff] %v1044
          %v1050 = vld [vmem:[%s1042 + $0x8] sm:$0xff]
          %1051 = vst [vmem:[%s1043 + $0x8] sm:$0xff] %v1050
          %v1052 = vld [vmem:[%s1042 + $0x10] sm:$0xff]
          %1053 = vst [vmem:[%s1043 + $0x10] sm:$0xff] %v1052
          %v1054 = vld [vmem:[%s1042 + $0x18] sm:$0xff]
          %1055 = vst [vmem:[%s1043 + $0x18] sm:$0xff] %v1054
          %v1056 = vld [vmem:[%s1042 + $0x20] sm:$0xff]
          %1057 = vst [vmem:[%s1043 + $0x20] sm:$0xff] %v1056
          %v1058 = vld [vmem:[%s1042 + $0x28] sm:$0xff]
          %1059 = vst [vmem:[%s1043 + $0x28] sm:$0xff] %v1058
          %v1060 = vld [vmem:[%s1042 + $0x30] sm:$0xff]
          %1061 = vst [vmem:[%s1043 + $0x30] sm:$0xff] %v1060
          %v1062 = vld [vmem:[%s1042 + $0x38] sm:$0xff]
          %1063 = vst [vmem:[%s1043 + $0x38] sm:$0xff] %v1062
        $region168: #{custom-call.2} parent=162 // loop_footer
          %s1064 = scalar_lea.vmem %s1042, 64
          %s1065 = scalar_lea.vmem %s1043, 64
          %v1066 = vld [vmem:[%s1042 + $0x40] sm:$0xff]
        $region169: #{custom-call.2} parent=162 // loop_footer_branch
          %1067 = sbr.rel target = $region165
        $region170: #{custom-call.2} parent=162 // loop_exit
          _
        // While loop
        $region171: #{custom-call.2} parent=162 // loop_pre_header
          _
        $region172: #{custom-call.2} parent=162 // loop_header
          %s1068 = sphi %s1042, %s1076
          %s1069 = sphi %s1043, %s1077
          %v1070 = vphi %v1044, %v1070
          %p1071 = scmp.gt.s32.totalorder %s1068, %s1040
        $region173: #{custom-call.2} parent=162 // loop_header_branch
          %1073 = sbr.rel (%p1071) target = $region177
        $region174: #{custom-call.2} parent=162 // loop_body
          %v1074 = vld [vmem:[%s1068] sm:$0xff]
          %1075 = vst [vmem:[%s1069] sm:$0xff] %v1074
        $region175: #{custom-call.2} parent=162 // loop_footer
          %s1076 = scalar_lea.vmem %s1068, 8
          %s1077 = scalar_lea.vmem %s1069, 8
        $region176: #{custom-call.2} parent=162 // loop_footer_branch
          %1078 = sbr.rel target = $region172
        $region177: #{custom-call.2} parent=162 // loop_exit
          _
      $region163: #{custom-call.2} parent=158 // pred_fallthru
        _
      %s1079 = sand.u32 8, 7
      %s1080 = sshllo.u32 0, %s1079
      %s1081 = smul.u32 %s1032, 128
      %s1082 = sshra.s32 %s1081, 4
      %s1083 = scalar_lea.vmem %s6, %s1082
      %s1084 = smul.u32 %s1032, 128
      %s1085 = sshra.s32 %s1084, 4
      %s1086 = scalar_lea.vmem [#allocation8], %s1085
      %v1087 = vld [vmem:[%s1086] sm:%s1080]
      %1088 = vst [vmem:[%s1083] sm:%s1080] %v1087
    $region159: #{custom-call.2} parent=1 // pred_fallthru
      _
    %p1090 = scmp.gt.s32.totalorder 8, 0
    // Predicated region
    $region178: #{custom-call.2} parent=1 // pred_check
      %p1091 = pneg %p1090
    $region179: #{custom-call.2} parent=1 // pred_check_branch
      %1093 = sbr.rel (%p1091) target = $region181
    $region180: #{custom-call.2} parent=1 // pred_region
      %s1094 = sshra.s32 8, 3
      %p1095 = scmp.gt.s32.totalorder %s1094, 0
      // Predicated region
      $region182: #{custom-call.2} parent=180 // pred_check
        %p1096 = pneg %p1095
      $region183: #{custom-call.2} parent=180 // pred_check_branch
        %1098 = sbr.rel (%p1096) target = $region185
      $region184: #{custom-call.2} parent=180 // pred_region
        %s1099 = ssub.s32 %s1094, 1
        %s1100 = smul.u32 %s1099, 128
        %s1101 = sshra.s32 %s1100, 4
        %s1102 = scalar_lea.vmem [#allocation9], %s1101
        %v1103 = vld [vmem:[#allocation9] sm:$0xff]
        // While loop
        $region186: #{custom-call.2} parent=184 // loop_pre_header
          _
        $region187: #{custom-call.2} parent=184 // loop_header
          %s1104 = sphi [#allocation9], %s1126
          %s1105 = sphi %s7, %s1127
          %v1106 = vphi %v1103, %v1128
          %s1107 = ssub.s32 %s1102, 64
          %p1108 = scmp.gt.s32.totalorder %s1104, %s1107
        $region188: #{custom-call.2} parent=184 // loop_header_branch
          %1110 = sbr.rel (%p1108) target = $region192
        $region189: #{custom-call.2} parent=184 // loop_body
          %1111 = vst [vmem:[%s1105] sm:$0xff] %v1106
          %v1112 = vld [vmem:[%s1104 + $0x8] sm:$0xff]
          %1113 = vst [vmem:[%s1105 + $0x8] sm:$0xff] %v1112
          %v1114 = vld [vmem:[%s1104 + $0x10] sm:$0xff]
          %1115 = vst [vmem:[%s1105 + $0x10] sm:$0xff] %v1114
          %v1116 = vld [vmem:[%s1104 + $0x18] sm:$0xff]
          %1117 = vst [vmem:[%s1105 + $0x18] sm:$0xff] %v1116
          %v1118 = vld [vmem:[%s1104 + $0x20] sm:$0xff]
          %1119 = vst [vmem:[%s1105 + $0x20] sm:$0xff] %v1118
          %v1120 = vld [vmem:[%s1104 + $0x28] sm:$0xff]
          %1121 = vst [vmem:[%s1105 + $0x28] sm:$0xff] %v1120
          %v1122 = vld [vmem:[%s1104 + $0x30] sm:$0xff]
          %1123 = vst [vmem:[%s1105 + $0x30] sm:$0xff] %v1122
          %v1124 = vld [vmem:[%s1104 + $0x38] sm:$0xff]
          %1125 = vst [vmem:[%s1105 + $0x38] sm:$0xff] %v1124
        $region190: #{custom-call.2} parent=184 // loop_footer
          %s1126 = scalar_lea.vmem %s1104, 64
          %s1127 = scalar_lea.vmem %s1105, 64
          %v1128 = vld [vmem:[%s1104 + $0x40] sm:$0xff]
        $region191: #{custom-call.2} parent=184 // loop_footer_branch
          %1129 = sbr.rel target = $region187
        $region192: #{custom-call.2} parent=184 // loop_exit
          _
        // While loop
        $region193: #{custom-call.2} parent=184 // loop_pre_header
          _
        $region194: #{custom-call.2} parent=184 // loop_header
          %s1130 = sphi %s1104, %s1138
          %s1131 = sphi %s1105, %s1139
          %v1132 = vphi %v1106, %v1132
          %p1133 = scmp.gt.s32.totalorder %s1130, %s1102
        $region195: #{custom-call.2} parent=184 // loop_header_branch
          %1135 = sbr.rel (%p1133) target = $region199
        $region196: #{custom-call.2} parent=184 // loop_body
          %v1136 = vld [vmem:[%s1130] sm:$0xff]
          %1137 = vst [vmem:[%s1131] sm:$0xff] %v1136
        $region197: #{custom-call.2} parent=184 // loop_footer
          %s1138 = scalar_lea.vmem %s1130, 8
          %s1139 = scalar_lea.vmem %s1131, 8
        $region198: #{custom-call.2} parent=184 // loop_footer_branch
          %1140 = sbr.rel target = $region194
        $region199: #{custom-call.2} parent=184 // loop_exit
          _
      $region185: #{custom-call.2} parent=180 // pred_fallthru
        _
      %s1141 = sand.u32 8, 7
      %s1142 = sshllo.u32 0, %s1141
      %s1143 = smul.u32 %s1094, 128
      %s1144 = sshra.s32 %s1143, 4
      %s1145 = scalar_lea.vmem %s7, %s1144
      %s1146 = smul.u32 %s1094, 128
      %s1147 = sshra.s32 %s1146, 4
      %s1148 = scalar_lea.vmem [#allocation9], %s1147
      %v1149 = vld [vmem:[%s1148] sm:%s1142]
      %1150 = vst [vmem:[%s1145] sm:%s1142] %v1149
    $region181: #{custom-call.2} parent=1 // pred_fallthru
      _
    %p1152 = scmp.gt.s32.totalorder 8, 0
    // Predicated region
    $region200: #{custom-call.2} parent=1 // pred_check
      %p1153 = pneg %p1152
    $region201: #{custom-call.2} parent=1 // pred_check_branch
      %1155 = sbr.rel (%p1153) target = $region203
    $region202: #{custom-call.2} parent=1 // pred_region
      %s1156 = sshra.s32 8, 3
      %p1157 = scmp.gt.s32.totalorder %s1156, 0
      // Predicated region
      $region204: #{custom-call.2} parent=202 // pred_check
        %p1158 = pneg %p1157
      $region205: #{custom-call.2} parent=202 // pred_check_branch
        %1160 = sbr.rel (%p1158) target = $region207
      $region206: #{custom-call.2} parent=202 // pred_region
        %s1161 = ssub.s32 %s1156, 1
        %s1162 = smul.u32 %s1161, 128
        %s1163 = sshra.s32 %s1162, 4
        %s1164 = scalar_lea.vmem [#allocation10], %s1163
        %v1165 = vld [vmem:[#allocation10] sm:$0xff]
        // While loop
        $region208: #{custom-call.2} parent=206 // loop_pre_header
          _
        $region209: #{custom-call.2} parent=206 // loop_header
          %s1166 = sphi [#allocation10], %s1188
          %s1167 = sphi %s8, %s1189
          %v1168 = vphi %v1165, %v1190
          %s1169 = ssub.s32 %s1164, 64
          %p1170 = scmp.gt.s32.totalorder %s1166, %s1169
        $region210: #{custom-call.2} parent=206 // loop_header_branch
          %1172 = sbr.rel (%p1170) target = $region214
        $region211: #{custom-call.2} parent=206 // loop_body
          %1173 = vst [vmem:[%s1167] sm:$0xff] %v1168
          %v1174 = vld [vmem:[%s1166 + $0x8] sm:$0xff]
          %1175 = vst [vmem:[%s1167 + $0x8] sm:$0xff] %v1174
          %v1176 = vld [vmem:[%s1166 + $0x10] sm:$0xff]
          %1177 = vst [vmem:[%s1167 + $0x10] sm:$0xff] %v1176
          %v1178 = vld [vmem:[%s1166 + $0x18] sm:$0xff]
          %1179 = vst [vmem:[%s1167 + $0x18] sm:$0xff] %v1178
          %v1180 = vld [vmem:[%s1166 + $0x20] sm:$0xff]
          %1181 = vst [vmem:[%s1167 + $0x20] sm:$0xff] %v1180
          %v1182 = vld [vmem:[%s1166 + $0x28] sm:$0xff]
          %1183 = vst [vmem:[%s1167 + $0x28] sm:$0xff] %v1182
          %v1184 = vld [vmem:[%s1166 + $0x30] sm:$0xff]
          %1185 = vst [vmem:[%s1167 + $0x30] sm:$0xff] %v1184
          %v1186 = vld [vmem:[%s1166 + $0x38] sm:$0xff]
          %1187 = vst [vmem:[%s1167 + $0x38] sm:$0xff] %v1186
        $region212: #{custom-call.2} parent=206 // loop_footer
          %s1188 = scalar_lea.vmem %s1166, 64
          %s1189 = scalar_lea.vmem %s1167, 64
          %v1190 = vld [vmem:[%s1166 + $0x40] sm:$0xff]
        $region213: #{custom-call.2} parent=206 // loop_footer_branch
          %1191 = sbr.rel target = $region209
        $region214: #{custom-call.2} parent=206 // loop_exit
          _
        // While loop
        $region215: #{custom-call.2} parent=206 // loop_pre_header
          _
        $region216: #{custom-call.2} parent=206 // loop_header
          %s1192 = sphi %s1166, %s1200
          %s1193 = sphi %s1167, %s1201
          %v1194 = vphi %v1168, %v1194
          %p1195 = scmp.gt.s32.totalorder %s1192, %s1164
        $region217: #{custom-call.2} parent=206 // loop_header_branch
          %1197 = sbr.rel (%p1195) target = $region221
        $region218: #{custom-call.2} parent=206 // loop_body
          %v1198 = vld [vmem:[%s1192] sm:$0xff]
          %1199 = vst [vmem:[%s1193] sm:$0xff] %v1198
        $region219: #{custom-call.2} parent=206 // loop_footer
          %s1200 = scalar_lea.vmem %s1192, 8
          %s1201 = scalar_lea.vmem %s1193, 8
        $region220: #{custom-call.2} parent=206 // loop_footer_branch
          %1202 = sbr.rel target = $region216
        $region221: #{custom-call.2} parent=206 // loop_exit
          _
      $region207: #{custom-call.2} parent=202 // pred_fallthru
        _
      %s1203 = sand.u32 8, 7
      %s1204 = sshllo.u32 0, %s1203
      %s1205 = smul.u32 %s1156, 128
      %s1206 = sshra.s32 %s1205, 4
      %s1207 = scalar_lea.vmem %s8, %s1206
      %s1208 = smul.u32 %s1156, 128
      %s1209 = sshra.s32 %s1208, 4
      %s1210 = scalar_lea.vmem [#allocation10], %s1209
      %v1211 = vld [vmem:[%s1210] sm:%s1204]
      %1212 = vst [vmem:[%s1207] sm:%s1204] %v1211
    $region203: #{custom-call.2} parent=1 // pred_fallthru
      _
    %p1214 = scmp.gt.s32.totalorder 8, 0
    // Predicated region
    $region222: #{custom-call.2} parent=1 // pred_check
      %p1215 = pneg %p1214
    $region223: #{custom-call.2} parent=1 // pred_check_branch
      %1217 = sbr.rel (%p1215) target = $region225
    $region224: #{custom-call.2} parent=1 // pred_region
      %s1218 = sshra.s32 8, 3
      %p1219 = scmp.gt.s32.totalorder %s1218, 0
      // Predicated region
      $region226: #{custom-call.2} parent=224 // pred_check
        %p1220 = pneg %p1219
      $region227: #{custom-call.2} parent=224 // pred_check_branch
        %1222 = sbr.rel (%p1220) target = $region229
      $region228: #{custom-call.2} parent=224 // pred_region
        %s1223 = ssub.s32 %s1218, 1
        %s1224 = smul.u32 %s1223, 128
        %s1225 = sshra.s32 %s1224, 4
        %s1226 = scalar_lea.vmem [#allocation11], %s1225
        %v1227 = vld [vmem:[#allocation11] sm:$0xff]
        // While loop
        $region230: #{custom-call.2} parent=228 // loop_pre_header
          _
        $region231: #{custom-call.2} parent=228 // loop_header
          %s1228 = sphi [#allocation11], %s1250
          %s1229 = sphi %s9, %s1251
          %v1230 = vphi %v1227, %v1252
          %s1231 = ssub.s32 %s1226, 64
          %p1232 = scmp.gt.s32.totalorder %s1228, %s1231
        $region232: #{custom-call.2} parent=228 // loop_header_branch
          %1234 = sbr.rel (%p1232) target = $region236
        $region233: #{custom-call.2} parent=228 // loop_body
          %1235 = vst [vmem:[%s1229] sm:$0xff] %v1230
          %v1236 = vld [vmem:[%s1228 + $0x8] sm:$0xff]
          %1237 = vst [vmem:[%s1229 + $0x8] sm:$0xff] %v1236
          %v1238 = vld [vmem:[%s1228 + $0x10] sm:$0xff]
          %1239 = vst [vmem:[%s1229 + $0x10] sm:$0xff] %v1238
          %v1240 = vld [vmem:[%s1228 + $0x18] sm:$0xff]
          %1241 = vst [vmem:[%s1229 + $0x18] sm:$0xff] %v1240
          %v1242 = vld [vmem:[%s1228 + $0x20] sm:$0xff]
          %1243 = vst [vmem:[%s1229 + $0x20] sm:$0xff] %v1242
          %v1244 = vld [vmem:[%s1228 + $0x28] sm:$0xff]
          %1245 = vst [vmem:[%s1229 + $0x28] sm:$0xff] %v1244
          %v1246 = vld [vmem:[%s1228 + $0x30] sm:$0xff]
          %1247 = vst [vmem:[%s1229 + $0x30] sm:$0xff] %v1246
          %v1248 = vld [vmem:[%s1228 + $0x38] sm:$0xff]
          %1249 = vst [vmem:[%s1229 + $0x38] sm:$0xff] %v1248
        $region234: #{custom-call.2} parent=228 // loop_footer
          %s1250 = scalar_lea.vmem %s1228, 64
          %s1251 = scalar_lea.vmem %s1229, 64
          %v1252 = vld [vmem:[%s1228 + $0x40] sm:$0xff]
        $region235: #{custom-call.2} parent=228 // loop_footer_branch
          %1253 = sbr.rel target = $region231
        $region236: #{custom-call.2} parent=228 // loop_exit
          _
        // While loop
        $region237: #{custom-call.2} parent=228 // loop_pre_header
          _
        $region238: #{custom-call.2} parent=228 // loop_header
          %s1254 = sphi %s1228, %s1262
          %s1255 = sphi %s1229, %s1263
          %v1256 = vphi %v1230, %v1256
          %p1257 = scmp.gt.s32.totalorder %s1254, %s1226
        $region239: #{custom-call.2} parent=228 // loop_header_branch
          %1259 = sbr.rel (%p1257) target = $region243
        $region240: #{custom-call.2} parent=228 // loop_body
          %v1260 = vld [vmem:[%s1254] sm:$0xff]
          %1261 = vst [vmem:[%s1255] sm:$0xff] %v1260
        $region241: #{custom-call.2} parent=228 // loop_footer
          %s1262 = scalar_lea.vmem %s1254, 8
          %s1263 = scalar_lea.vmem %s1255, 8
        $region242: #{custom-call.2} parent=228 // loop_footer_branch
          %1264 = sbr.rel target = $region238
        $region243: #{custom-call.2} parent=228 // loop_exit
          _
      $region229: #{custom-call.2} parent=224 // pred_fallthru
        _
      %s1265 = sand.u32 8, 7
      %s1266 = sshllo.u32 0, %s1265
      %s1267 = smul.u32 %s1218, 128
      %s1268 = sshra.s32 %s1267, 4
      %s1269 = scalar_lea.vmem %s9, %s1268
      %s1270 = smul.u32 %s1218, 128
      %s1271 = sshra.s32 %s1270, 4
      %s1272 = scalar_lea.vmem [#allocation11], %s1271
      %v1273 = vld [vmem:[%s1272] sm:%s1266]
      %1274 = vst [vmem:[%s1269] sm:%s1266] %v1273
    $region225: #{custom-call.2} parent=1 // pred_fallthru
      _
    // Predicated region
    $region244: #{custom-call.2} parent=1 // pred_check
      _
    $region245: #{custom-call.2} parent=1 // pred_check_branch
      %1276 = sbr.rel (0) target = $region247
    $region246: #{custom-call.2} parent=1 // pred_region
      _
    $region247: #{custom-call.2} parent=1 // pred_fallthru
      _
    // Predicated region
    $region248: #{custom-call.2} parent=1 // pred_check
      _
    $region249: #{custom-call.2} parent=1 // pred_check_branch
      %1278 = sbr.rel (0) target = $region251
    $region250: #{custom-call.2} parent=1 // pred_region
      _
    $region251: #{custom-call.2} parent=1 // pred_fallthru
      _

// kernel: gsrnet_forward.3
$region0: #{gsrnet_forward.3}
  #allocation0 [shape = 'u32[]', space=smem, size = 0x4, offset = 0x4, fixed_abs, tag = 'smem constant byte address 0x4 - core index']
  #allocation1 [shape = 'u32[144,128]{1,0:T(1,128)}', space=vmem, size = 0x12000, scoped, tag = 'internal scratch']
  %s0 = inlined_call_operand.vmem [shape: f32[16,16], index: 0, kind: input, shape index: {}]
  %s1 = inlined_call_operand.vmem [shape: f32[16,32], index: 1, kind: input, shape index: {}]
  %s2 = inlined_call_operand.vmem [shape: f32[32,16], index: 2, kind: input, shape index: {}]
  %s3 = inlined_call_operand.vmem [shape: f32[32,32], index: 3, kind: input, shape index: {}]
  %s4 = inlined_call_operand.vmem [shape: f32[32,32], index: 4, kind: input, shape index: {}]
  %s5 = inlined_call_operand.hbm [shape: f32[32,32], index: 5, kind: output, shape index: {0}]
  %s6 = inlined_call_operand.hbm [shape: f32[32,32], index: 6, kind: output, shape index: {1}]
  %7 = xla_tuple %s5, %s6
  %s8 = sld [smem:[#allocation0]]
  $region38: #{gsrnet_forward.3} parent=0
    _
  %s10 = ssub.s32 1, %s8
  %s11 = scalar_select 0, %s10, %s8
  $region1: #{gsrnet_forward.3} parent=0
    #allocation2 [shape = 'u8[16384]{0}', space=vmem, size = 0x4000, scoped, tag = 'output window, operand 0, single buffered']
    #allocation3 [shape = 's32[1]{0}', space=sflag, size = 0x4, scoped, tag = 'scoped memory for gsrnet_forward.3']
    #allocation4 [shape = 'u8[16384]{0}', space=vmem, size = 0x4000, scoped, tag = 'output window, operand 1, single buffered']
    #allocation5 [shape = 's32[1]{0}', space=sflag, size = 0x4, scoped, tag = 'scoped memory for gsrnet_forward.3']
    %12 = vsyncpa [#allocation3], 0
    %13 = vsyncpa [#allocation5], 0
    // Predicated region
    $region2: #{gsrnet_forward.3} parent=1 // pred_check
      _
    $region3: #{gsrnet_forward.3} parent=1 // pred_check_branch
      %15 = sbr.rel (0) target = $region5
    $region4: #{gsrnet_forward.3} parent=1 // pred_region
      _
    $region5: #{gsrnet_forward.3} parent=1 // pred_fallthru
      _
    // Predicated region
    $region6: #{gsrnet_forward.3} parent=1 // pred_check
      _
    $region7: #{gsrnet_forward.3} parent=1 // pred_check_branch
      %17 = sbr.rel (0) target = $region9
    $region8: #{gsrnet_forward.3} parent=1 // pred_region
      _
    $region9: #{gsrnet_forward.3} parent=1 // pred_fallthru
      _
    // Predicated region
    $region10: #{gsrnet_forward.3} parent=1 // pred_check
      _
    $region11: #{gsrnet_forward.3} parent=1 // pred_check_branch
      %19 = sbr.rel (0) target = $region13
    $region12: #{gsrnet_forward.3} parent=1 // pred_region
      _
    $region13: #{gsrnet_forward.3} parent=1 // pred_fallthru
      _
    // Predicated region
    $region14: #{gsrnet_forward.3} parent=1 // pred_check
      _
    $region15: #{gsrnet_forward.3} parent=1 // pred_check_branch
      %21 = sbr.rel (0) target = $region17
    $region16: #{gsrnet_forward.3} parent=1 // pred_region
      _
    $region17: #{gsrnet_forward.3} parent=1 // pred_fallthru
      _
    // Predicated region
    $region18: #{gsrnet_forward.3} parent=1 // pred_check
      _
    $region19: #{gsrnet_forward.3} parent=1 // pred_check_branch
      %23 = sbr.rel (0) target = $region21
    $region20: #{gsrnet_forward.3} parent=1 // pred_region
      _
    $region21: #{gsrnet_forward.3} parent=1 // pred_fallthru
      _
    %v24 = vlaneseq
    %v25 = vshrl.u32 %v24, 7
    %v26 = vadd.s32 %v25, 8
    %v27 = vadd.s32 %v25, 16
    %v28 = vadd.s32 %v25, 24
    %v29 = vlaneseq
    %v30 = vand.u32 %v29, 127
    %vm31 = vcmp.eq.s32.totalorder %v25, %v30
    %vm32 = vcmp.eq.s32.totalorder %v26, %v30
    %vm33 = vcmp.eq.s32.totalorder %v27, %v30
    %vm34 = vcmp.eq.s32.totalorder %v28, %v30
    %v35 = vld [vmem:[%s2] sm:$0xff]
    %v36 = vld [vmem:[%s2 + $0x8] sm:$0xff]
    %v37 = vld [vmem:[%s2 + $0x10] sm:$0xff]
    %v38 = vld [vmem:[%s2 + $0x18] sm:$0xff]
    %v39 = vld [vmem:[%s0] sm:$0xff]
    %v40 = vld [vmem:[%s0 + $0x8] sm:$0xff]
    %vm41 = vcmask 130048
    %v43 = vsel %vm41, %v35, 0
    %v46 = vsel %vm41, %v36, 0
    %v49 = vsel %vm41, %v37, 0
    %v52 = vsel %vm41, %v38, 0
    %v55 = vsel %vm41, %v39, 0
    %v58 = vsel %vm41, %v40, 0
    %60 = vmatprep.subr.mxu0 0.0
    %61 = vmatpush1.xpose.msra.mxu0 %v55
    %62 = vmatprep.subr.mxu0 0.0
    %63 = vmatpush1.xpose.msra.mxu0 %v58
    %64 = vmatprep.subr.mxu0 0.0
    %65 = vmatpush1.xpose.msra.mxu0 0.0
    %66 = vmatprep.subr.mxu0 0.0
    %67 = vmatpush1.xpose.msra.mxu0 0.0
    %68 = vmatprep.subr.mxu0 0.0
    %69 = vmatpush1.xpose.msra.mxu0 0.0
    %70 = vmatprep.subr.mxu0 0.0
    %71 = vmatpush1.xpose.msra.mxu0 0.0
    %72 = vmatprep.subr.mxu0 0.0
    %73 = vmatpush1.xpose.msra.mxu0 0.0
    %74 = vmatprep.subr.mxu0 0.0
    %75 = vmatpush1.xpose.msra.mxu0 0.0
    %76 = vmatprep.subr.mxu0 0.0
    %77 = vmatpush1.xpose.msra.mxu0 0.0
    %78 = vmatprep.subr.mxu0 0.0
    %79 = vmatpush1.xpose.msra.mxu0 0.0
    %80 = vmatprep.subr.mxu0 0.0
    %81 = vmatpush1.xpose.msra.mxu0 0.0
    %82 = vmatprep.subr.mxu0 0.0
    %83 = vmatpush1.xpose.msra.mxu0 0.0
    %84 = vmatprep.subr.mxu0 0.0
    %85 = vmatpush1.xpose.msra.mxu0 0.0
    %86 = vmatprep.subr.mxu0 0.0
    %87 = vmatpush1.xpose.msra.mxu0 0.0
    %88 = vmatprep.subr.mxu0 0.0
    %89 = vmatpush1.xpose.msra.mxu0 0.0
    %90 = vmatprep.subr.mxu0 0.0
    %91 = vmatpush1.xpose.msra.mxu0 0.0
    %92 = vmatprep.subr.mxu0 0.0
    %93 = vmatpush1.xpose.msra.mxu0 0.0
    %94 = vmatprep.subr.mxu0 0.0
    %95 = vmatpush1.xpose.msra.mxu0 0.0
    %96 = vmatprep.subr.mxu0 0.0
    %97 = vmatpush1.xpose.msra.mxu0 0.0
    %98 = vmatprep.subr.mxu0 0.0
    %99 = vmatpush1.xpose.msra.mxu0 0.0
    %100 = vmatprep.subr.mxu0 0.0
    %101 = vmatpush1.xpose.msra.mxu0 0.0
    %102 = vmatprep.subr.mxu0 0.0
    %103 = vmatpush1.xpose.msra.mxu0 0.0
    %104 = vmatprep.subr.mxu0 0.0
    %105 = vmatpush1.xpose.msra.mxu0 0.0
    %106 = vmatprep.subr.mxu0 0.0
    %107 = vmatpush1.xpose.msra.mxu0 0.0
    %108 = vmatprep.subr.mxu0 0.0
    %109 = vmatpush1.xpose.msra.mxu0 0.0
    %110 = vmatprep.subr.mxu0 0.0
    %111 = vmatpush1.xpose.msra.mxu0 0.0
    %112 = vmatprep.subr.mxu0 0.0
    %113 = vmatpush1.xpose.msra.mxu0 0.0
    %114 = vmatprep.subr.mxu0 0.0
    %115 = vmatpush1.xpose.msra.mxu0 0.0
    %116 = vmatprep.subr.mxu0 0.0
    %117 = vmatpush1.xpose.msra.mxu0 0.0
    %118 = vmatprep.subr.mxu0 0.0
    %119 = vmatpush1.xpose.msra.mxu0 0.0
    %120 = vmatprep.subr.mxu0 0.0
    %121 = vmatpush1.xpose.msra.mxu0 0.0
    %122 = vmatprep.subr.mxu0 0.0
    %123 = vmatpush1.xpose.msra.mxu0 0.0
    %124 = vmatprep.mubr.f32.mxu0 0.0
    %125 = vmatmul.mubr.f32.gmra.mrb[0].mxu0 %v43
    %v126 = vpop.f32.mrb[0].mxu0
    %v127 = vadd.f32 0.0, %v126
    %v128 = vpop.f32.mrb[0].mxu0
    %129 = vmatprep.mubr.f32.mxu0 0.0
    %130 = vmatmul.mubr.f32.gmra.mrb[0].mxu0 %v46
    %v131 = vpop.f32.mrb[0].mxu0
    %v132 = vadd.f32 0.0, %v131
    %v133 = vpop.f32.mrb[0].mxu0
    %134 = vmatprep.mubr.f32.mxu0 0.0
    %135 = vmatmul.mubr.f32.gmra.mrb[0].mxu0 %v49
    %v136 = vpop.f32.mrb[0].mxu0
    %v137 = vadd.f32 0.0, %v136
    %v138 = vpop.f32.mrb[0].mxu0
    %139 = vmatprep.mubr.f32.mxu0 0.0
    %140 = vmatmul.mubr.f32.gmra.mrb[0].mxu0 %v52
    %v141 = vpop.f32.mrb[0].mxu0
    %v142 = vadd.f32 0.0, %v141
    %v143 = vpop.f32.mrb[0].mxu0
    %144 = vdwg.mxu0
    %v145 = vld [vmem:[%s1] sm:$0xff]
    %v146 = vld [vmem:[%s1 + $0x8] sm:$0xff]
    %v148 = vsel %vm41, %v127, 0
    %v151 = vsel %vm41, %v132, 0
    %v154 = vsel %vm41, %v137, 0
    %v157 = vsel %vm41, %v142, 0
    %159 = vmatprep.subr.mxu0 0.0
    %160 = vmatpush1.msra.mxu0 %v145
    %161 = vmatprep.subr.mxu0 0.0
    %162 = vmatpush1.msra.mxu0 %v146
    %163 = vmatprep.subr.mxu0 0.0
    %164 = vmatpush1.msra.mxu0 0.0
    %165 = vmatprep.subr.mxu0 0.0
    %166 = vmatpush1.msra.mxu0 0.0
    %167 = vmatprep.subr.mxu0 0.0
    %168 = vmatpush1.msra.mxu0 0.0
    %169 = vmatprep.subr.mxu0 0.0
    %170 = vmatpush1.msra.mxu0 0.0
    %171 = vmatprep.subr.mxu0 0.0
    %172 = vmatpush1.msra.mxu0 0.0
    %173 = vmatprep.subr.mxu0 0.0
    %174 = vmatpush1.msra.mxu0 0.0
    %175 = vmatprep.subr.mxu0 0.0
    %176 = vmatpush1.msra.mxu0 0.0
    %177 = vmatprep.subr.mxu0 0.0
    %178 = vmatpush1.msra.mxu0 0.0
    %179 = vmatprep.subr.mxu0 0.0
    %180 = vmatpush1.msra.mxu0 0.0
    %181 = vmatprep.subr.mxu0 0.0
    %182 = vmatpush1.msra.mxu0 0.0
    %183 = vmatprep.subr.mxu0 0.0
    %184 = vmatpush1.msra.mxu0 0.0
    %185 = vmatprep.subr.mxu0 0.0
    %186 = vmatpush1.msra.mxu0 0.0
    %187 = vmatprep.subr.mxu0 0.0
    %188 = vmatpush1.msra.mxu0 0.0
    %189 = vmatprep.subr.mxu0 0.0
    %190 = vmatpush1.msra.mxu0 0.0
    %191 = vmatprep.subr.mxu0 0.0
    %192 = vmatpush1.msra.mxu0 0.0
    %193 = vmatprep.subr.mxu0 0.0
    %194 = vmatpush1.msra.mxu0 0.0
    %195 = vmatprep.subr.mxu0 0.0
    %196 = vmatpush1.msra.mxu0 0.0
    %197 = vmatprep.subr.mxu0 0.0
    %198 = vmatpush1.msra.mxu0 0.0
    %199 = vmatprep.subr.mxu0 0.0
    %200 = vmatpush1.msra.mxu0 0.0
    %201 = vmatprep.subr.mxu0 0.0
    %202 = vmatpush1.msra.mxu0 0.0
    %203 = vmatprep.subr.mxu0 0.0
    %204 = vmatpush1.msra.mxu0 0.0
    %205 = vmatprep.subr.mxu0 0.0
    %206 = vmatpush1.msra.mxu0 0.0
    %207 = vmatprep.subr.mxu0 0.0
    %208 = vmatpush1.msra.mxu0 0.0
    %209 = vmatprep.subr.mxu0 0.0
    %210 = vmatpush1.msra.mxu0 0.0
    %211 = vmatprep.subr.mxu0 0.0
    %212 = vmatpush1.msra.mxu0 0.0
    %213 = vmatprep.subr.mxu0 0.0
    %214 = vmatpush1.msra.mxu0 0.0
    %215 = vmatprep.subr.mxu0 0.0
    %216 = vmatpush1.msra.mxu0 0.0
    %217 = vmatprep.subr.mxu0 0.0
    %218 = vmatpush1.msra.mxu0 0.0
    %219 = vmatprep.subr.mxu0 0.0
    %220 = vmatpush1.msra.mxu0 0.0
    %221 = vmatprep.subr.mxu0 0.0
    %222 = vmatpush1.msra.mxu0 0.0
    %223 = vmatprep.mubr.f32.mxu0 0.0
    %224 = vmatmul.mubr.f32.gmra.mrb[0].mxu0 %v148
    %v225 = vpop.f32.mrb[0].mxu0
    %v226 = vadd.f32 0.0, %v225
    %v227 = vpop.f32.mrb[0].mxu0
    %228 = vmatprep.mubr.f32.mxu0 0.0
    %229 = vmatmul.mubr.f32.gmra.mrb[0].mxu0 %v151
    %v230 = vpop.f32.mrb[0].mxu0
    %v231 = vadd.f32 0.0, %v230
    %v232 = vpop.f32.mrb[0].mxu0
    %233 = vmatprep.mubr.f32.mxu0 0.0
    %234 = vmatmul.mubr.f32.gmra.mrb[0].mxu0 %v154
    %v235 = vpop.f32.mrb[0].mxu0
    %v236 = vadd.f32 0.0, %v235
    %v237 = vpop.f32.mrb[0].mxu0
    %238 = vmatprep.mubr.f32.mxu0 0.0
    %239 = vmatmul.mubr.f32.gmra.mrb[0].mxu0 %v157
    %v240 = vpop.f32.mrb[0].mxu0
    %v241 = vadd.f32 0.0, %v240
    %v242 = vpop.f32.mrb[0].mxu0
    %243 = vdwg.mxu0
    %v244 = vand.u32 2147483647, %v226
    %v245 = vand.u32 2147483647, %v231
    %v246 = vand.u32 2147483647, %v236
    %v247 = vand.u32 2147483647, %v241
    %v248 = vsel %vm31, 1.0, %v244
    %v249 = vsel %vm32, 1.0, %v245
    %v250 = vsel %vm33, 1.0, %v246
    %v251 = vsel %vm34, 1.0, %v247
    %vm252 = vcmask 261120
    %253 = vst.msk [vmem:[#allocation2] sm:$0xff] %vm252, %v248
    %254 = vst.msk [vmem:[#allocation2 + $0x8] sm:$0xff] %vm252, %v249
    %255 = vst.msk [vmem:[#allocation2 + $0x10] sm:$0xff] %vm252, %v250
    %256 = vst.msk [vmem:[#allocation2 + $0x18] sm:$0xff] %vm252, %v251
    %v258 = vsel %vm252, %v248, 0
    %v261 = vsel %vm252, %v249, 0
    %v264 = vsel %vm252, %v250, 0
    %v267 = vsel %vm252, %v251, 0
    %269 = vmatprep.subr.mxu0 0.0
    %270 = vmatpush1.xpose.msra.mxu0 %v258
    %271 = vmatprep.subr.mxu0 0.0
    %272 = vmatpush1.xpose.msra.mxu0 %v261
    %273 = vmatprep.subr.mxu0 0.0
    %274 = vmatpush1.xpose.msra.mxu0 %v264
    %275 = vmatprep.subr.mxu0 0.0
    %276 = vmatpush1.xpose.msra.mxu0 %v267
    %277 = vmatprep.subr.mxu0 0.0
    %278 = vmatpush1.xpose.msra.mxu0 0.0
    %279 = vmatprep.subr.mxu0 0.0
    %280 = vmatpush1.xpose.msra.mxu0 0.0
    %281 = vmatprep.subr.mxu0 0.0
    %282 = vmatpush1.xpose.msra.mxu0 0.0
    %283 = vmatprep.subr.mxu0 0.0
    %284 = vmatpush1.xpose.msra.mxu0 0.0
    %285 = vmatprep.subr.mxu0 0.0
    %286 = vmatpush1.xpose.msra.mxu0 0.0
    %287 = vmatprep.subr.mxu0 0.0
    %288 = vmatpush1.xpose.msra.mxu0 0.0
    %289 = vmatprep.subr.mxu0 0.0
    %290 = vmatpush1.xpose.msra.mxu0 0.0
    %291 = vmatprep.subr.mxu0 0.0
    %292 = vmatpush1.xpose.msra.mxu0 0.0
    %293 = vmatprep.subr.mxu0 0.0
    %294 = vmatpush1.xpose.msra.mxu0 0.0
    %295 = vmatprep.subr.mxu0 0.0
    %296 = vmatpush1.xpose.msra.mxu0 0.0
    %297 = vmatprep.subr.mxu0 0.0
    %298 = vmatpush1.xpose.msra.mxu0 0.0
    %299 = vmatprep.subr.mxu0 0.0
    %300 = vmatpush1.xpose.msra.mxu0 0.0
    %301 = vmatprep.subr.mxu0 0.0
    %302 = vmatpush1.xpose.msra.mxu0 0.0
    %303 = vmatprep.subr.mxu0 0.0
    %304 = vmatpush1.xpose.msra.mxu0 0.0
    %305 = vmatprep.subr.mxu0 0.0
    %306 = vmatpush1.xpose.msra.mxu0 0.0
    %307 = vmatprep.subr.mxu0 0.0
    %308 = vmatpush1.xpose.msra.mxu0 0.0
    %309 = vmatprep.subr.mxu0 0.0
    %310 = vmatpush1.xpose.msra.mxu0 0.0
    %311 = vmatprep.subr.mxu0 0.0
    %312 = vmatpush1.xpose.msra.mxu0 0.0
    %313 = vmatprep.subr.mxu0 0.0
    %314 = vmatpush1.xpose.msra.mxu0 0.0
    %315 = vmatprep.subr.mxu0 0.0
    %316 = vmatpush1.xpose.msra.mxu0 0.0
    %317 = vmatprep.subr.mxu0 0.0
    %318 = vmatpush1.xpose.msra.mxu0 0.0
    %319 = vmatprep.subr.mxu0 0.0
    %320 = vmatpush1.xpose.msra.mxu0 0.0
    %321 = vmatprep.subr.mxu0 0.0
    %322 = vmatpush1.xpose.msra.mxu0 0.0
    %323 = vmatprep.subr.mxu0 0.0
    %324 = vmatpush1.xpose.msra.mxu0 0.0
    %325 = vmatprep.subr.mxu0 0.0
    %326 = vmatpush1.xpose.msra.mxu0 0.0
    %327 = vmatprep.subr.mxu0 0.0
    %328 = vmatpush1.xpose.msra.mxu0 0.0
    %329 = vmatprep.subr.mxu0 0.0
    %330 = vmatpush1.xpose.msra.mxu0 0.0
    %331 = vmatprep.subr.mxu0 0.0
    %332 = vmatpush1.xpose.msra.mxu0 0.0
    %333 = vmatprep.mubr.f32.mxu0 0.0
    %334 = vmatmul.mubr.f32.gmra.mrb[0].mxu0 %v258
    %v335 = vpop.f32.mrb[0].mxu0
    %v336 = vadd.f32 0.0, %v335
    %v337 = vpop.f32.mrb[0].mxu0
    %338 = vmatprep.mubr.f32.mxu0 0.0
    %339 = vmatmul.mubr.f32.gmra.mrb[0].mxu0 %v261
    %v340 = vpop.f32.mrb[0].mxu0
    %v341 = vadd.f32 0.0, %v340
    %v342 = vpop.f32.mrb[0].mxu0
    %343 = vmatprep.mubr.f32.mxu0 0.0
    %344 = vmatmul.mubr.f32.gmra.mrb[0].mxu0 %v264
    %v345 = vpop.f32.mrb[0].mxu0
    %v346 = vadd.f32 0.0, %v345
    %v347 = vpop.f32.mrb[0].mxu0
    %348 = vmatprep.mubr.f32.mxu0 0.0
    %349 = vmatmul.mubr.f32.gmra.mrb[0].mxu0 %v267
    %v350 = vpop.f32.mrb[0].mxu0
    %v351 = vadd.f32 0.0, %v350
    %v352 = vpop.f32.mrb[0].mxu0
    %353 = vdwg.mxu0
    %v354 = vsel %vm31, 1.0, %v336
    %v355 = vsel %vm32, 1.0, %v341
    %v356 = vsel %vm33, 1.0, %v346
    %v357 = vsel %vm34, 1.0, %v351
    %v358 = vld [vmem:[%s3] sm:$0xff]
    %v359 = vld [vmem:[%s3 + $0x8] sm:$0xff]
    %v360 = vld [vmem:[%s3 + $0x10] sm:$0xff]
    %v361 = vld [vmem:[%s3 + $0x18] sm:$0xff]
    %v363 = vsel %vm252, %v354, 0
    %v366 = vsel %vm252, %v355, 0
    %v369 = vsel %vm252, %v356, 0
    %v372 = vsel %vm252, %v357, 0
    %374 = vmatprep.subr.mxu0 0.0
    %375 = vmatpush1.msra.mxu0 %v358
    %376 = vmatprep.subr.mxu0 0.0
    %377 = vmatpush1.msra.mxu0 %v359
    %378 = vmatprep.subr.mxu0 0.0
    %379 = vmatpush1.msra.mxu0 %v360
    %380 = vmatprep.subr.mxu0 0.0
    %381 = vmatpush1.msra.mxu0 %v361
    %382 = vmatprep.subr.mxu0 0.0
    %383 = vmatpush1.msra.mxu0 0.0
    %384 = vmatprep.subr.mxu0 0.0
    %385 = vmatpush1.msra.mxu0 0.0
    %386 = vmatprep.subr.mxu0 0.0
    %387 = vmatpush1.msra.mxu0 0.0
    %388 = vmatprep.subr.mxu0 0.0
    %389 = vmatpush1.msra.mxu0 0.0
    %390 = vmatprep.subr.mxu0 0.0
    %391 = vmatpush1.msra.mxu0 0.0
    %392 = vmatprep.subr.mxu0 0.0
    %393 = vmatpush1.msra.mxu0 0.0
    %394 = vmatprep.subr.mxu0 0.0
    %395 = vmatpush1.msra.mxu0 0.0
    %396 = vmatprep.subr.mxu0 0.0
    %397 = vmatpush1.msra.mxu0 0.0
    %398 = vmatprep.subr.mxu0 0.0
    %399 = vmatpush1.msra.mxu0 0.0
    %400 = vmatprep.subr.mxu0 0.0
    %401 = vmatpush1.msra.mxu0 0.0
    %402 = vmatprep.subr.mxu0 0.0
    %403 = vmatpush1.msra.mxu0 0.0
    %404 = vmatprep.subr.mxu0 0.0
    %405 = vmatpush1.msra.mxu0 0.0
    %406 = vmatprep.subr.mxu0 0.0
    %407 = vmatpush1.msra.mxu0 0.0
    %408 = vmatprep.subr.mxu0 0.0
    %409 = vmatpush1.msra.mxu0 0.0
    %410 = vmatprep.subr.mxu0 0.0
    %411 = vmatpush1.msra.mxu0 0.0
    %412 = vmatprep.subr.mxu0 0.0
    %413 = vmatpush1.msra.mxu0 0.0
    %414 = vmatprep.subr.mxu0 0.0
    %415 = vmatpush1.msra.mxu0 0.0
    %416 = vmatprep.subr.mxu0 0.0
    %417 = vmatpush1.msra.mxu0 0.0
    %418 = vmatprep.subr.mxu0 0.0
    %419 = vmatpush1.msra.mxu0 0.0
    %420 = vmatprep.subr.mxu0 0.0
    %421 = vmatpush1.msra.mxu0 0.0
    %422 = vmatprep.subr.mxu0 0.0
    %423 = vmatpush1.msra.mxu0 0.0
    %424 = vmatprep.subr.mxu0 0.0
    %425 = vmatpush1.msra.mxu0 0.0
    %426 = vmatprep.subr.mxu0 0.0
    %427 = vmatpush1.msra.mxu0 0.0
    %428 = vmatprep.subr.mxu0 0.0
    %429 = vmatpush1.msra.mxu0 0.0
    %430 = vmatprep.subr.mxu0 0.0
    %431 = vmatpush1.msra.mxu0 0.0
    %432 = vmatprep.subr.mxu0 0.0
    %433 = vmatpush1.msra.mxu0 0.0
    %434 = vmatprep.subr.mxu0 0.0
    %435 = vmatpush1.msra.mxu0 0.0
    %436 = vmatprep.subr.mxu0 0.0
    %437 = vmatpush1.msra.mxu0 0.0
    %438 = vmatprep.mubr.f32.mxu0 0.0
    %439 = vmatmul.mubr.f32.gmra.mrb[0].mxu0 %v363
    %v440 = vpop.f32.mrb[0].mxu0
    %v441 = vadd.f32 0.0, %v440
    %v442 = vpop.f32.mrb[0].mxu0
    %443 = vmatprep.mubr.f32.mxu0 0.0
    %444 = vmatmul.mubr.f32.gmra.mrb[0].mxu0 %v366
    %v445 = vpop.f32.mrb[0].mxu0
    %v446 = vadd.f32 0.0, %v445
    %v447 = vpop.f32.mrb[0].mxu0
    %448 = vmatprep.mubr.f32.mxu0 0.0
    %449 = vmatmul.mubr.f32.gmra.mrb[0].mxu0 %v369
    %v450 = vpop.f32.mrb[0].mxu0
    %v451 = vadd.f32 0.0, %v450
    %v452 = vpop.f32.mrb[0].mxu0
    %453 = vmatprep.mubr.f32.mxu0 0.0
    %454 = vmatmul.mubr.f32.gmra.mrb[0].mxu0 %v372
    %v455 = vpop.f32.mrb[0].mxu0
    %v456 = vadd.f32 0.0, %v455
    %v457 = vpop.f32.mrb[0].mxu0
    %458 = vdwg.mxu0
    %459 = vmatprep.subr.mxu0 0.0
    %460 = vmatpush1.msra.mxu0 %v441
    %461 = vmatprep.subr.mxu0 0.0
    %462 = vmatpush1.msra.mxu0 %v446
    %463 = vmatprep.subr.mxu0 0.0
    %464 = vmatpush1.msra.mxu0 %v451
    %465 = vmatprep.subr.mxu0 0.0
    %466 = vmatpush1.msra.mxu0 %v456
    %467 = vmatprep.subr.mxu0 0.0
    %468 = vmatpush1.msra.mxu0 0.0
    %469 = vmatprep.subr.mxu0 0.0
    %470 = vmatpush1.msra.mxu0 0.0
    %471 = vmatprep.subr.mxu0 0.0
    %472 = vmatpush1.msra.mxu0 0.0
    %473 = vmatprep.subr.mxu0 0.0
    %474 = vmatpush1.msra.mxu0 0.0
    %475 = vmatprep.subr.mxu0 0.0
    %476 = vmatpush1.msra.mxu0 0.0
    %477 = vmatprep.subr.mxu0 0.0
    %478 = vmatpush1.msra.mxu0 0.0
    %479 = vmatprep.subr.mxu0 0.0
    %480 = vmatpush1.msra.mxu0 0.0
    %481 = vmatprep.subr.mxu0 0.0
    %482 = vmatpush1.msra.mxu0 0.0
    %483 = vmatprep.subr.mxu0 0.0
    %484 = vmatpush1.msra.mxu0 0.0
    %485 = vmatprep.subr.mxu0 0.0
    %486 = vmatpush1.msra.mxu0 0.0
    %487 = vmatprep.subr.mxu0 0.0
    %488 = vmatpush1.msra.mxu0 0.0
    %489 = vmatprep.subr.mxu0 0.0
    %490 = vmatpush1.msra.mxu0 0.0
    %491 = vmatprep.subr.mxu0 0.0
    %492 = vmatpush1.msra.mxu0 0.0
    %493 = vmatprep.subr.mxu0 0.0
    %494 = vmatpush1.msra.mxu0 0.0
    %495 = vmatprep.subr.mxu0 0.0
    %496 = vmatpush1.msra.mxu0 0.0
    %497 = vmatprep.subr.mxu0 0.0
    %498 = vmatpush1.msra.mxu0 0.0
    %499 = vmatprep.subr.mxu0 0.0
    %500 = vmatpush1.msra.mxu0 0.0
    %501 = vmatprep.subr.mxu0 0.0
    %502 = vmatpush1.msra.mxu0 0.0
    %503 = vmatprep.subr.mxu0 0.0
    %504 = vmatpush1.msra.mxu0 0.0
    %505 = vmatprep.subr.mxu0 0.0
    %506 = vmatpush1.msra.mxu0 0.0
    %507 = vmatprep.subr.mxu0 0.0
    %508 = vmatpush1.msra.mxu0 0.0
    %509 = vmatprep.subr.mxu0 0.0
    %510 = vmatpush1.msra.mxu0 0.0
    %511 = vmatprep.subr.mxu0 0.0
    %512 = vmatpush1.msra.mxu0 0.0
    %513 = vmatprep.subr.mxu0 0.0
    %514 = vmatpush1.msra.mxu0 0.0
    %515 = vmatprep.subr.mxu0 0.0
    %516 = vmatpush1.msra.mxu0 0.0
    %517 = vmatprep.subr.mxu0 0.0
    %518 = vmatpush1.msra.mxu0 0.0
    %519 = vmatprep.subr.mxu0 0.0
    %520 = vmatpush1.msra.mxu0 0.0
    %521 = vmatprep.subr.mxu0 0.0
    %522 = vmatpush1.msra.mxu0 0.0
    %523 = vmatprep.mubr.f32.mxu0 0.0
    %524 = vmatmul.mubr.f32.gmra.mrb[0].mxu0 %v258
    %v525 = vpop.f32.mrb[0].mxu0
    %v526 = vadd.f32 0.0, %v525
    %v527 = vpop.f32.mrb[0].mxu0
    %528 = vmatprep.mubr.f32.mxu0 0.0
    %529 = vmatmul.mubr.f32.gmra.mrb[0].mxu0 %v261
    %v530 = vpop.f32.mrb[0].mxu0
    %v531 = vadd.f32 0.0, %v530
    %v532 = vpop.f32.mrb[0].mxu0
    %533 = vmatprep.mubr.f32.mxu0 0.0
    %534 = vmatmul.mubr.f32.gmra.mrb[0].mxu0 %v264
    %v535 = vpop.f32.mrb[0].mxu0
    %v536 = vadd.f32 0.0, %v535
    %v537 = vpop.f32.mrb[0].mxu0
    %538 = vmatprep.mubr.f32.mxu0 0.0
    %539 = vmatmul.mubr.f32.gmra.mrb[0].mxu0 %v267
    %v540 = vpop.f32.mrb[0].mxu0
    %v541 = vadd.f32 0.0, %v540
    %v542 = vpop.f32.mrb[0].mxu0
    %543 = vdwg.mxu0
    %v544 = vmax.f32 %v526, 0.0
    %v545 = vmax.f32 %v531, 0.0
    %v546 = vmax.f32 %v536, 0.0
    %v547 = vmax.f32 %v541, 0.0
    %v548 = vld [vmem:[%s4] sm:$0xff]
    %v549 = vld [vmem:[%s4 + $0x8] sm:$0xff]
    %v550 = vld [vmem:[%s4 + $0x10] sm:$0xff]
    %v551 = vld [vmem:[%s4 + $0x18] sm:$0xff]
    %v553 = vsel %vm252, %v544, 0
    %v556 = vsel %vm252, %v545, 0
    %v559 = vsel %vm252, %v546, 0
    %v562 = vsel %vm252, %v547, 0
    %564 = vmatprep.subr.mxu0 0.0
    %565 = vmatpush1.msra.mxu0 %v548
    %566 = vmatprep.subr.mxu0 0.0
    %567 = vmatpush1.msra.mxu0 %v549
    %568 = vmatprep.subr.mxu0 0.0
    %569 = vmatpush1.msra.mxu0 %v550
    %570 = vmatprep.subr.mxu0 0.0
    %571 = vmatpush1.msra.mxu0 %v551
    %572 = vmatprep.subr.mxu0 0.0
    %573 = vmatpush1.msra.mxu0 0.0
    %574 = vmatprep.subr.mxu0 0.0
    %575 = vmatpush1.msra.mxu0 0.0
    %576 = vmatprep.subr.mxu0 0.0
    %577 = vmatpush1.msra.mxu0 0.0
    %578 = vmatprep.subr.mxu0 0.0
    %579 = vmatpush1.msra.mxu0 0.0
    %580 = vmatprep.subr.mxu0 0.0
    %581 = vmatpush1.msra.mxu0 0.0
    %582 = vmatprep.subr.mxu0 0.0
    %583 = vmatpush1.msra.mxu0 0.0
    %584 = vmatprep.subr.mxu0 0.0
    %585 = vmatpush1.msra.mxu0 0.0
    %586 = vmatprep.subr.mxu0 0.0
    %587 = vmatpush1.msra.mxu0 0.0
    %588 = vmatprep.subr.mxu0 0.0
    %589 = vmatpush1.msra.mxu0 0.0
    %590 = vmatprep.subr.mxu0 0.0
    %591 = vmatpush1.msra.mxu0 0.0
    %592 = vmatprep.subr.mxu0 0.0
    %593 = vmatpush1.msra.mxu0 0.0
    %594 = vmatprep.subr.mxu0 0.0
    %595 = vmatpush1.msra.mxu0 0.0
    %596 = vmatprep.subr.mxu0 0.0
    %597 = vmatpush1.msra.mxu0 0.0
    %598 = vmatprep.subr.mxu0 0.0
    %599 = vmatpush1.msra.mxu0 0.0
    %600 = vmatprep.subr.mxu0 0.0
    %601 = vmatpush1.msra.mxu0 0.0
    %602 = vmatprep.subr.mxu0 0.0
    %603 = vmatpush1.msra.mxu0 0.0
    %604 = vmatprep.subr.mxu0 0.0
    %605 = vmatpush1.msra.mxu0 0.0
    %606 = vmatprep.subr.mxu0 0.0
    %607 = vmatpush1.msra.mxu0 0.0
    %608 = vmatprep.subr.mxu0 0.0
    %609 = vmatpush1.msra.mxu0 0.0
    %610 = vmatprep.subr.mxu0 0.0
    %611 = vmatpush1.msra.mxu0 0.0
    %612 = vmatprep.subr.mxu0 0.0
    %613 = vmatpush1.msra.mxu0 0.0
    %614 = vmatprep.subr.mxu0 0.0
    %615 = vmatpush1.msra.mxu0 0.0
    %616 = vmatprep.subr.mxu0 0.0
    %617 = vmatpush1.msra.mxu0 0.0
    %618 = vmatprep.subr.mxu0 0.0
    %619 = vmatpush1.msra.mxu0 0.0
    %620 = vmatprep.subr.mxu0 0.0
    %621 = vmatpush1.msra.mxu0 0.0
    %622 = vmatprep.subr.mxu0 0.0
    %623 = vmatpush1.msra.mxu0 0.0
    %624 = vmatprep.subr.mxu0 0.0
    %625 = vmatpush1.msra.mxu0 0.0
    %626 = vmatprep.subr.mxu0 0.0
    %627 = vmatpush1.msra.mxu0 0.0
    %628 = vmatprep.mubr.f32.mxu0 0.0
    %629 = vmatmul.mubr.f32.gmra.mrb[0].mxu0 %v553
    %v630 = vpop.f32.mrb[0].mxu0
    %v631 = vadd.f32 0.0, %v630
    %v632 = vpop.f32.mrb[0].mxu0
    %633 = vmatprep.mubr.f32.mxu0 0.0
    %634 = vmatmul.mubr.f32.gmra.mrb[0].mxu0 %v556
    %v635 = vpop.f32.mrb[0].mxu0
    %v636 = vadd.f32 0.0, %v635
    %v637 = vpop.f32.mrb[0].mxu0
    %638 = vmatprep.mubr.f32.mxu0 0.0
    %639 = vmatmul.mubr.f32.gmra.mrb[0].mxu0 %v559
    %v640 = vpop.f32.mrb[0].mxu0
    %v641 = vadd.f32 0.0, %v640
    %v642 = vpop.f32.mrb[0].mxu0
    %643 = vmatprep.mubr.f32.mxu0 0.0
    %644 = vmatmul.mubr.f32.gmra.mrb[0].mxu0 %v562
    %v645 = vpop.f32.mrb[0].mxu0
    %v646 = vadd.f32 0.0, %v645
    %v647 = vpop.f32.mrb[0].mxu0
    %648 = vdwg.mxu0
    %649 = vmatprep.subr.mxu0 0.0
    %650 = vmatpush1.msra.mxu0 %v631
    %651 = vmatprep.subr.mxu0 0.0
    %652 = vmatpush1.msra.mxu0 %v636
    %653 = vmatprep.subr.mxu0 0.0
    %654 = vmatpush1.msra.mxu0 %v641
    %655 = vmatprep.subr.mxu0 0.0
    %656 = vmatpush1.msra.mxu0 %v646
    %657 = vmatprep.subr.mxu0 0.0
    %658 = vmatpush1.msra.mxu0 0.0
    %659 = vmatprep.subr.mxu0 0.0
    %660 = vmatpush1.msra.mxu0 0.0
    %661 = vmatprep.subr.mxu0 0.0
    %662 = vmatpush1.msra.mxu0 0.0
    %663 = vmatprep.subr.mxu0 0.0
    %664 = vmatpush1.msra.mxu0 0.0
    %665 = vmatprep.subr.mxu0 0.0
    %666 = vmatpush1.msra.mxu0 0.0
    %667 = vmatprep.subr.mxu0 0.0
    %668 = vmatpush1.msra.mxu0 0.0
    %669 = vmatprep.subr.mxu0 0.0
    %670 = vmatpush1.msra.mxu0 0.0
    %671 = vmatprep.subr.mxu0 0.0
    %672 = vmatpush1.msra.mxu0 0.0
    %673 = vmatprep.subr.mxu0 0.0
    %674 = vmatpush1.msra.mxu0 0.0
    %675 = vmatprep.subr.mxu0 0.0
    %676 = vmatpush1.msra.mxu0 0.0
    %677 = vmatprep.subr.mxu0 0.0
    %678 = vmatpush1.msra.mxu0 0.0
    %679 = vmatprep.subr.mxu0 0.0
    %680 = vmatpush1.msra.mxu0 0.0
    %681 = vmatprep.subr.mxu0 0.0
    %682 = vmatpush1.msra.mxu0 0.0
    %683 = vmatprep.subr.mxu0 0.0
    %684 = vmatpush1.msra.mxu0 0.0
    %685 = vmatprep.subr.mxu0 0.0
    %686 = vmatpush1.msra.mxu0 0.0
    %687 = vmatprep.subr.mxu0 0.0
    %688 = vmatpush1.msra.mxu0 0.0
    %689 = vmatprep.subr.mxu0 0.0
    %690 = vmatpush1.msra.mxu0 0.0
    %691 = vmatprep.subr.mxu0 0.0
    %692 = vmatpush1.msra.mxu0 0.0
    %693 = vmatprep.subr.mxu0 0.0
    %694 = vmatpush1.msra.mxu0 0.0
    %695 = vmatprep.subr.mxu0 0.0
    %696 = vmatpush1.msra.mxu0 0.0
    %697 = vmatprep.subr.mxu0 0.0
    %698 = vmatpush1.msra.mxu0 0.0
    %699 = vmatprep.subr.mxu0 0.0
    %700 = vmatpush1.msra.mxu0 0.0
    %701 = vmatprep.subr.mxu0 0.0
    %702 = vmatpush1.msra.mxu0 0.0
    %703 = vmatprep.subr.mxu0 0.0
    %704 = vmatpush1.msra.mxu0 0.0
    %705 = vmatprep.subr.mxu0 0.0
    %706 = vmatpush1.msra.mxu0 0.0
    %707 = vmatprep.subr.mxu0 0.0
    %708 = vmatpush1.msra.mxu0 0.0
    %709 = vmatprep.subr.mxu0 0.0
    %710 = vmatpush1.msra.mxu0 0.0
    %711 = vmatprep.subr.mxu0 0.0
    %712 = vmatpush1.msra.mxu0 0.0
    %713 = vmatprep.mubr.f32.mxu0 0.0
    %714 = vmatmul.mubr.f32.gmra.mrb[0].mxu0 %v258
    %v715 = vpop.f32.mrb[0].mxu0
    %v716 = vadd.f32 0.0, %v715
    %v717 = vpop.f32.mrb[0].mxu0
    %718 = vmatprep.mubr.f32.mxu0 0.0
    %719 = vmatmul.mubr.f32.gmra.mrb[0].mxu0 %v261
    %v720 = vpop.f32.mrb[0].mxu0
    %v721 = vadd.f32 0.0, %v720
    %v722 = vpop.f32.mrb[0].mxu0
    %723 = vmatprep.mubr.f32.mxu0 0.0
    %724 = vmatmul.mubr.f32.gmra.mrb[0].mxu0 %v264
    %v725 = vpop.f32.mrb[0].mxu0
    %v726 = vadd.f32 0.0, %v725
    %v727 = vpop.f32.mrb[0].mxu0
    %728 = vmatprep.mubr.f32.mxu0 0.0
    %729 = vmatmul.mubr.f32.gmra.mrb[0].mxu0 %v267
    %v730 = vpop.f32.mrb[0].mxu0
    %v731 = vadd.f32 0.0, %v730
    %v732 = vpop.f32.mrb[0].mxu0
    %733 = vdwg.mxu0
    %v734 = vmax.f32 %v716, 0.0
    %v735 = vmax.f32 %v721, 0.0
    %v736 = vmax.f32 %v726, 0.0
    %v737 = vmax.f32 %v731, 0.0
    %738 = vxpose.xlu0.b32.start [1/16] %v734, 128
    %739 = vxpose.xlu0.b32.cont [2/16] %v735, 128
    %740 = vxpose.xlu0.b32.cont [3/16] %v736, 128
    %741 = vxpose.xlu0.b32.cont [4/16] %v737, 128
    %742 = vxpose.xlu0.b32.cont [5/16] 0.0, 128
    %743 = vxpose.xlu0.b32.cont [6/16] 0.0, 128
    %744 = vxpose.xlu0.b32.cont [7/16] 0.0, 128
    %745 = vxpose.xlu0.b32.cont [8/16] 0.0, 128
    %746 = vxpose.xlu0.b32.cont [9/16] 0.0, 128
    %747 = vxpose.xlu0.b32.cont [10/16] 0.0, 128
    %748 = vxpose.xlu0.b32.cont [11/16] 0.0, 128
    %749 = vxpose.xlu0.b32.cont [12/16] 0.0, 128
    %750 = vxpose.xlu0.b32.cont [13/16] 0.0, 128
    %751 = vxpose.xlu0.b32.cont [14/16] 0.0, 128
    %752 = vxpose.xlu0.b32.cont [15/16] 0.0, 128
    %753 = vxpose.xlu0.b32.end [16/16] 0.0, 128
    %v754 = vpop.trf.xlu0
    %v755 = vpop.trf.xlu0
    %v756 = vpop.trf.xlu0
    %v757 = vpop.trf.xlu0
    %v758 = vpop.trf.xlu0
    %v759 = vpop.trf.xlu0
    %v760 = vpop.trf.xlu0
    %v761 = vpop.trf.xlu0
    %v762 = vpop.trf.xlu0
    %v763 = vpop.trf.xlu0
    %v764 = vpop.trf.xlu0
    %v765 = vpop.trf.xlu0
    %v766 = vpop.trf.xlu0
    %v767 = vpop.trf.xlu0
    %v768 = vpop.trf.xlu0
    %v769 = vpop.trf.xlu0
    %v770 = vadd.f32 %v734, %v754
    %v771 = vadd.f32 %v735, %v755
    %v772 = vadd.f32 %v736, %v756
    %v773 = vadd.f32 %v737, %v757
    %v774 = vmul.f32 %v770, 0.5
    %v775 = vmul.f32 %v771, 0.5
    %v776 = vmul.f32 %v772, 0.5
    %v777 = vmul.f32 %v773, 0.5
    %v778 = vsel %vm31, 1.0, %v774
    %v779 = vsel %vm32, 1.0, %v775
    %v780 = vsel %vm33, 1.0, %v776
    %v781 = vsel %vm34, 1.0, %v777
    %v782 = vmax.f32 %v778, 0.0
    %v783 = vmax.f32 %v779, 0.0
    %v784 = vmax.f32 %v780, 0.0
    %v785 = vmax.f32 %v781, 0.0
    %786 = vst.msk [vmem:[#allocation4] sm:$0xff] %vm252, %v782
    %787 = vst.msk [vmem:[#allocation4 + $0x8] sm:$0xff] %vm252, %v783
    %788 = vst.msk [vmem:[#allocation4 + $0x10] sm:$0xff] %vm252, %v784
    %789 = vst.msk [vmem:[#allocation4 + $0x18] sm:$0xff] %vm252, %v785
    // Predicated region
    $region22: #{gsrnet_forward.3} parent=1 // pred_check
      _
    $region23: #{gsrnet_forward.3} parent=1 // pred_check_branch
      %791 = sbr.rel (0) target = $region25
    $region24: #{gsrnet_forward.3} parent=1 // pred_region
      %s793 = ssub.s32 512, 512
      %794 = vsyncadd [#allocation3], %s793
      %s795 = sshll.u32 [#allocation2], 4
      %s796 = int_to_ptr.vmem [resolvable:$true] %s795
      %801 = dma.vmem_to_hbm [thread:$0]  %s796, 512, %s5, [#allocation3], 128, 128, 8
    $region25: #{gsrnet_forward.3} parent=1 // pred_fallthru
      _
    // Predicated region
    $region26: #{gsrnet_forward.3} parent=1 // pred_check
      _
    $region27: #{gsrnet_forward.3} parent=1 // pred_check_branch
      %803 = sbr.rel (0) target = $region29
    $region28: #{gsrnet_forward.3} parent=1 // pred_region
      %s805 = ssub.s32 512, 512
      %806 = vsyncadd [#allocation5], %s805
      %s807 = sshll.u32 [#allocation4], 4
      %s808 = int_to_ptr.vmem [resolvable:$true] %s807
      %813 = dma.vmem_to_hbm [thread:$0]  %s808, 512, %s6, [#allocation5], 128, 128, 8
    $region29: #{gsrnet_forward.3} parent=1 // pred_fallthru
      _
    // Predicated region
    $region30: #{gsrnet_forward.3} parent=1 // pred_check
      _
    $region31: #{gsrnet_forward.3} parent=1 // pred_check_branch
      %815 = sbr.rel (0) target = $region33
    $region32: #{gsrnet_forward.3} parent=1 // pred_region
      %816 = dma.done [#allocation3], 512
    $region33: #{gsrnet_forward.3} parent=1 // pred_fallthru
      _
    // Predicated region
    $region34: #{gsrnet_forward.3} parent=1 // pred_check
      _
    $region35: #{gsrnet_forward.3} parent=1 // pred_check_branch
      %818 = sbr.rel (0) target = $region37
    $region36: #{gsrnet_forward.3} parent=1 // pred_region
      %819 = dma.done [#allocation5], 512
    $region37: #{gsrnet_forward.3} parent=1 // pred_fallthru
      _
    %820 = vsyncpa [#allocation3], 1
    %821 = vsyncpa [#allocation5], 1

// kernel: gsrnet_forward.2
$region0: #{gsrnet_forward.2}
  #allocation0 [shape = 'u32[]', space=smem, size = 0x4, offset = 0x4, fixed_abs, tag = 'smem constant byte address 0x4 - core index']
  #allocation1 [shape = 'u32[144,128]{1,0:T(1,128)}', space=vmem, size = 0x12000, scoped, tag = 'internal scratch']
  %s0 = inlined_call_operand.vmem [shape: f32[16,16], index: 0, kind: input, shape index: {}]
  %s1 = inlined_call_operand.hbm [shape: f32[16,32], index: 1, kind: input, shape index: {}]
  %s2 = inlined_call_operand.vmem [shape: f32[1,32], index: 2, kind: input, shape index: {}]
  %s3 = inlined_call_operand.vmem [shape: f32[32,32], index: 3, kind: input, shape index: {}]
  %s4 = inlined_call_operand.vmem [shape: f32[32,32], index: 4, kind: input, shape index: {}]
  %s5 = inlined_call_operand.hbm [shape: f32[1,32], index: 5, kind: input, shape index: {}]
  %s6 = inlined_call_operand.hbm [shape: f32[1,32], index: 6, kind: input, shape index: {}]
  %s7 = inlined_call_operand.vmem [shape: f32[32,1], index: 7, kind: input, shape index: {}]
  %s8 = inlined_call_operand.vmem [shape: f32[32,1], index: 8, kind: input, shape index: {}]
  %s9 = inlined_call_operand.hbm [shape: f32[2], index: 9, kind: input, shape index: {}]
  %s10 = inlined_call_operand.vmem [shape: f32[32,32], index: 10, kind: input, shape index: {}]
  %s11 = inlined_call_operand.hbm [shape: f32[1,32], index: 11, kind: input, shape index: {}]
  %s12 = inlined_call_operand.vmem [shape: f32[32,32], index: 12, kind: input, shape index: {}]
  %s13 = inlined_call_operand.vmem [shape: f32[32,32], index: 13, kind: input, shape index: {}]
  %s14 = inlined_call_operand.vmem [shape: f32[1,32], index: 14, kind: input, shape index: {}]
  %s15 = inlined_call_operand.hbm [shape: f32[1,32], index: 15, kind: input, shape index: {}]
  %s16 = inlined_call_operand.hbm [shape: f32[32,32], index: 16, kind: input, shape index: {}]
  %s17 = inlined_call_operand.hbm [shape: f32[32,32], index: 17, kind: input, shape index: {}]
  %s18 = inlined_call_operand.hbm [shape: f32[1,32], index: 18, kind: input, shape index: {}]
  %s19 = inlined_call_operand.vmem [shape: f32[16,16], index: 19, kind: output, shape index: {0}]
  %s20 = inlined_call_operand.hbm [shape: f32[16,32], index: 20, kind: output, shape index: {1}]
  %s21 = inlined_call_operand.vmem [shape: f32[16,32], index: 21, kind: output, shape index: {2}]
  %22 = xla_tuple %s19, %s20, %s21
  %s23 = sld [smem:[#allocation0]]
  $region138: #{gsrnet_forward.2} parent=0
    _
  %s25 = ssub.s32 1, %s23
  %s26 = scalar_select 0, %s25, %s23
  $region1: #{gsrnet_forward.2} parent=0
    #allocation2 [shape = 'u8[8192]{0}', space=vmem, size = 0x2000, scoped, tag = 'input window, operand 1, single buffered']
    #allocation3 [shape = 's32[1]{0}', space=sflag, size = 0x4, scoped, tag = 'scoped memory for gsrnet_forward.2']
    #allocation4 [shape = 's32[1]{0}', space=sflag, size = 0x4, scoped, tag = 'scoped memory for gsrnet_forward.2']
    #allocation5 [shape = 's32[1]{0}', space=sflag, size = 0x4, scoped, tag = 'scoped memory for gsrnet_forward.2']
    #allocation6 [shape = 'u8[512]{0}', space=vmem, size = 0x400, scoped, tag = 'input window, operand 5, single buffered']
    #allocation7 [shape = 's32[1]{0}', space=sflag, size = 0x4, scoped, tag = 'scoped memory for gsrnet_forward.2']
    #allocation8 [shape = 'u8[512]{0}', space=vmem, size = 0x400, scoped, tag = 'input window, operand 6, single buffered']
    #allocation9 [shape = 'u8[512]{0}', space=smem, size = 0x200, scoped, tag = 'input window, operand 9, single buffered']
    #allocation10 [shape = 'u8[512]{0}', space=vmem, size = 0x400, scoped, tag = 'input window, operand 11, single buffered']
    #allocation11 [shape = 's32[1]{0}', space=sflag, size = 0x4, scoped, tag = 'scoped memory for gsrnet_forward.2']
    #allocation12 [shape = 'u8[512]{0}', space=vmem, size = 0x400, scoped, tag = 'input window, operand 15, single buffered']
    #allocation13 [shape = 'u8[16384]{0}', space=vmem, size = 0x4000, scoped, tag = 'input window, operand 16, single buffered']
    #allocation14 [shape = 's32[1]{0}', space=sflag, size = 0x4, scoped, tag = 'scoped memory for gsrnet_forward.2']
    #allocation15 [shape = 'u8[16384]{0}', space=vmem, size = 0x4000, scoped, tag = 'input window, operand 17, single buffered']
    #allocation16 [shape = 'u8[512]{0}', space=vmem, size = 0x400, scoped, tag = 'input window, operand 18, single buffered']
    #allocation17 [shape = 's32[1]{0}', space=sflag, size = 0x4, scoped, tag = 'scoped memory for gsrnet_forward.2']
    #allocation18 [shape = 'u8[8192]{0}', space=vmem, size = 0x2000, scoped, tag = 'output window, operand 1, single buffered']
    %27 = vsyncpa [#allocation3], 0
    %28 = vsyncpa [#allocation7], 0
    %29 = vsyncpa [#allocation5], 0
    %30 = vsyncpa [#allocation11], 0
    %31 = vsyncpa [#allocation14], 0
    %32 = vsyncpa [#allocation17], 0
    %33 = vsyncpa [#allocation4], 0
    // Predicated region
    $region2: #{gsrnet_forward.2} parent=1 // pred_check
      _
    $region3: #{gsrnet_forward.2} parent=1 // pred_check_branch
      %35 = sbr.rel (0) target = $region5
    $region4: #{gsrnet_forward.2} parent=1 // pred_region
      _
    $region5: #{gsrnet_forward.2} parent=1 // pred_fallthru
      _
    // Predicated region
    $region6: #{gsrnet_forward.2} parent=1 // pred_check
      _
    $region7: #{gsrnet_forward.2} parent=1 // pred_check_branch
      %37 = sbr.rel (0) target = $region9
    $region8: #{gsrnet_forward.2} parent=1 // pred_region
      %s39 = ssub.s32 256, 256
      %40 = vsyncadd [#allocation3], %s39
      %s41 = sshll.u32 [#allocation2], 4
      %s42 = int_to_ptr.vmem [resolvable:$true] %s41
      %47 = dma.hbm_to_vmem [thread:$0]  %s1, 256, %s42, [#allocation3], 128, 128, 8
    $region9: #{gsrnet_forward.2} parent=1 // pred_fallthru
      _
    // Predicated region
    $region10: #{gsrnet_forward.2} parent=1 // pred_check
      _
    $region11: #{gsrnet_forward.2} parent=1 // pred_check_branch
      %49 = sbr.rel (0) target = $region13
    $region12: #{gsrnet_forward.2} parent=1 // pred_region
      _
    $region13: #{gsrnet_forward.2} parent=1 // pred_fallthru
      _
    // Predicated region
    $region14: #{gsrnet_forward.2} parent=1 // pred_check
      _
    $region15: #{gsrnet_forward.2} parent=1 // pred_check_branch
      %51 = sbr.rel (0) target = $region17
    $region16: #{gsrnet_forward.2} parent=1 // pred_region
      _
    $region17: #{gsrnet_forward.2} parent=1 // pred_fallthru
      _
    // Predicated region
    $region18: #{gsrnet_forward.2} parent=1 // pred_check
      _
    $region19: #{gsrnet_forward.2} parent=1 // pred_check_branch
      %53 = sbr.rel (0) target = $region21
    $region20: #{gsrnet_forward.2} parent=1 // pred_region
      _
    $region21: #{gsrnet_forward.2} parent=1 // pred_fallthru
      _
    // Predicated region
    $region22: #{gsrnet_forward.2} parent=1 // pred_check
      _
    $region23: #{gsrnet_forward.2} parent=1 // pred_check_branch
      %55 = sbr.rel (0) target = $region25
    $region24: #{gsrnet_forward.2} parent=1 // pred_region
      %s57 = ssub.s32 16, 16
      %58 = vsyncadd [#allocation7], %s57
      %s60 = sshll.u32 [#allocation6], 4
      %s61 = int_to_ptr.vmem [resolvable:$true] %s60
      %63 = dma.hbm_to_vmem [thread:$0]  %s5, 16, %s61, [#allocation7]
    $region25: #{gsrnet_forward.2} parent=1 // pred_fallthru
      _
    // Predicated region
    $region26: #{gsrnet_forward.2} parent=1 // pred_check
      _
    $region27: #{gsrnet_forward.2} parent=1 // pred_check_branch
      %65 = sbr.rel (0) target = $region29
    $region28: #{gsrnet_forward.2} parent=1 // pred_region
      %s67 = ssub.s32 16, 16
      %68 = vsyncadd [#allocation7], %s67
      %s70 = sshll.u32 [#allocation8], 4
      %s71 = int_to_ptr.vmem [resolvable:$true] %s70
      %73 = dma.hbm_to_vmem [thread:$0]  %s6, 16, %s71, [#allocation7]
    $region29: #{gsrnet_forward.2} parent=1 // pred_fallthru
      _
    // Predicated region
    $region30: #{gsrnet_forward.2} parent=1 // pred_check
      _
    $region31: #{gsrnet_forward.2} parent=1 // pred_check_branch
      %75 = sbr.rel (0) target = $region33
    $region32: #{gsrnet_forward.2} parent=1 // pred_region
      _
    $region33: #{gsrnet_forward.2} parent=1 // pred_fallthru
      _
    // Predicated region
    $region34: #{gsrnet_forward.2} parent=1 // pred_check
      _
    $region35: #{gsrnet_forward.2} parent=1 // pred_check_branch
      %77 = sbr.rel (0) target = $region37
    $region36: #{gsrnet_forward.2} parent=1 // pred_region
      _
    $region37: #{gsrnet_forward.2} parent=1 // pred_fallthru
      _
    // Predicated region
    $region38: #{gsrnet_forward.2} parent=1 // pred_check
      _
    $region39: #{gsrnet_forward.2} parent=1 // pred_check_branch
      %79 = sbr.rel (0) target = $region41
    $region40: #{gsrnet_forward.2} parent=1 // pred_region
      %s81 = ssub.s32 16, 16
      %82 = vsyncadd [#allocation5], %s81
      %85 = dma.hbm_to_smem %s9, 16, [#allocation9], [#allocation5]
    $region41: #{gsrnet_forward.2} parent=1 // pred_fallthru
      _
    // Predicated region
    $region42: #{gsrnet_forward.2} parent=1 // pred_check
      _
    $region43: #{gsrnet_forward.2} parent=1 // pred_check_branch
      %87 = sbr.rel (0) target = $region45
    $region44: #{gsrnet_forward.2} parent=1 // pred_region
      _
    $region45: #{gsrnet_forward.2} parent=1 // pred_fallthru
      _
    // Predicated region
    $region46: #{gsrnet_forward.2} parent=1 // pred_check
      _
    $region47: #{gsrnet_forward.2} parent=1 // pred_check_branch
      %89 = sbr.rel (0) target = $region49
    $region48: #{gsrnet_forward.2} parent=1 // pred_region
      %s91 = ssub.s32 16, 16
      %92 = vsyncadd [#allocation11], %s91
      %s94 = sshll.u32 [#allocation10], 4
      %s95 = int_to_ptr.vmem [resolvable:$true] %s94
      %97 = dma.hbm_to_vmem [thread:$0]  %s11, 16, %s95, [#allocation11]
    $region49: #{gsrnet_forward.2} parent=1 // pred_fallthru
      _
    // Predicated region
    $region50: #{gsrnet_forward.2} parent=1 // pred_check
      _
    $region51: #{gsrnet_forward.2} parent=1 // pred_check_branch
      %99 = sbr.rel (0) target = $region53
    $region52: #{gsrnet_forward.2} parent=1 // pred_region
      _
    $region53: #{gsrnet_forward.2} parent=1 // pred_fallthru
      _
    // Predicated region
    $region54: #{gsrnet_forward.2} parent=1 // pred_check
      _
    $region55: #{gsrnet_forward.2} parent=1 // pred_check_branch
      %101 = sbr.rel (0) target = $region57
    $region56: #{gsrnet_forward.2} parent=1 // pred_region
      _
    $region57: #{gsrnet_forward.2} parent=1 // pred_fallthru
      _
    // Predicated region
    $region58: #{gsrnet_forward.2} parent=1 // pred_check
      _
    $region59: #{gsrnet_forward.2} parent=1 // pred_check_branch
      %103 = sbr.rel (0) target = $region61
    $region60: #{gsrnet_forward.2} parent=1 // pred_region
      _
    $region61: #{gsrnet_forward.2} parent=1 // pred_fallthru
      _
    // Predicated region
    $region62: #{gsrnet_forward.2} parent=1 // pred_check
      _
    $region63: #{gsrnet_forward.2} parent=1 // pred_check_branch
      %105 = sbr.rel (0) target = $region65
    $region64: #{gsrnet_forward.2} parent=1 // pred_region
      %s107 = ssub.s32 16, 16
      %108 = vsyncadd [#allocation11], %s107
      %s110 = sshll.u32 [#allocation12], 4
      %s111 = int_to_ptr.vmem [resolvable:$true] %s110
      %113 = dma.hbm_to_vmem [thread:$0]  %s15, 16, %s111, [#allocation11]
    $region65: #{gsrnet_forward.2} parent=1 // pred_fallthru
      _
    // Predicated region
    $region66: #{gsrnet_forward.2} parent=1 // pred_check
      _
    $region67: #{gsrnet_forward.2} parent=1 // pred_check_branch
      %115 = sbr.rel (0) target = $region69
    $region68: #{gsrnet_forward.2} parent=1 // pred_region
      %s117 = ssub.s32 512, 512
      %118 = vsyncadd [#allocation14], %s117
      %s119 = sshll.u32 [#allocation13], 4
      %s120 = int_to_ptr.vmem [resolvable:$true] %s119
      %125 = dma.hbm_to_vmem [thread:$0]  %s16, 512, %s120, [#allocation14], 128, 128, 8
    $region69: #{gsrnet_forward.2} parent=1 // pred_fallthru
      _
    // Predicated region
    $region70: #{gsrnet_forward.2} parent=1 // pred_check
      _
    $region71: #{gsrnet_forward.2} parent=1 // pred_check_branch
      %127 = sbr.rel (0) target = $region73
    $region72: #{gsrnet_forward.2} parent=1 // pred_region
      %s129 = ssub.s32 512, 512
      %130 = vsyncadd [#allocation14], %s129
      %s131 = sshll.u32 [#allocation15], 4
      %s132 = int_to_ptr.vmem [resolvable:$true] %s131
      %137 = dma.hbm_to_vmem [thread:$0]  %s17, 512, %s132, [#allocation14], 128, 128, 8
    $region73: #{gsrnet_forward.2} parent=1 // pred_fallthru
      _
    // Predicated region
    $region74: #{gsrnet_forward.2} parent=1 // pred_check
      _
    $region75: #{gsrnet_forward.2} parent=1 // pred_check_branch
      %139 = sbr.rel (0) target = $region77
    $region76: #{gsrnet_forward.2} parent=1 // pred_region
      %s141 = ssub.s32 16, 16
      %142 = vsyncadd [#allocation17], %s141
      %s144 = sshll.u32 [#allocation16], 4
      %s145 = int_to_ptr.vmem [resolvable:$true] %s144
      %147 = dma.hbm_to_vmem [thread:$0]  %s18, 16, %s145, [#allocation17]
    $region77: #{gsrnet_forward.2} parent=1 // pred_fallthru
      _
    // Predicated region
    $region78: #{gsrnet_forward.2} parent=1 // pred_check
      _
    $region79: #{gsrnet_forward.2} parent=1 // pred_check_branch
      %149 = sbr.rel (0) target = $region81
    $region80: #{gsrnet_forward.2} parent=1 // pred_region
      %150 = dma.done [#allocation3], 256
    $region81: #{gsrnet_forward.2} parent=1 // pred_fallthru
      _
    // Predicated region
    $region82: #{gsrnet_forward.2} parent=1 // pred_check
      _
    $region83: #{gsrnet_forward.2} parent=1 // pred_check_branch
      %152 = sbr.rel (0) target = $region85
    $region84: #{gsrnet_forward.2} parent=1 // pred_region
      %153 = dma.done [#allocation7], 16
    $region85: #{gsrnet_forward.2} parent=1 // pred_fallthru
      _
    // Predicated region
    $region86: #{gsrnet_forward.2} parent=1 // pred_check
      _
    $region87: #{gsrnet_forward.2} parent=1 // pred_check_branch
      %155 = sbr.rel (0) target = $region89
    $region88: #{gsrnet_forward.2} parent=1 // pred_region
      %156 = dma.done [#allocation7], 16
    $region89: #{gsrnet_forward.2} parent=1 // pred_fallthru
      _
    // Predicated region
    $region90: #{gsrnet_forward.2} parent=1 // pred_check
      _
    $region91: #{gsrnet_forward.2} parent=1 // pred_check_branch
      %158 = sbr.rel (0) target = $region93
    $region92: #{gsrnet_forward.2} parent=1 // pred_region
      %159 = dma.done [#allocation5], 16
    $region93: #{gsrnet_forward.2} parent=1 // pred_fallthru
      _
    // Predicated region
    $region94: #{gsrnet_forward.2} parent=1 // pred_check
      _
    $region95: #{gsrnet_forward.2} parent=1 // pred_check_branch
      %161 = sbr.rel (0) target = $region97
    $region96: #{gsrnet_forward.2} parent=1 // pred_region
      %162 = dma.done [#allocation11], 16
    $region97: #{gsrnet_forward.2} parent=1 // pred_fallthru
      _
    // Predicated region
    $region98: #{gsrnet_forward.2} parent=1 // pred_check
      _
    $region99: #{gsrnet_forward.2} parent=1 // pred_check_branch
      %164 = sbr.rel (0) target = $region101
    $region100: #{gsrnet_forward.2} parent=1 // pred_region
      %165 = dma.done [#allocation11], 16
    $region101: #{gsrnet_forward.2} parent=1 // pred_fallthru
      _
    // Predicated region
    $region102: #{gsrnet_forward.2} parent=1 // pred_check
      _
    $region103: #{gsrnet_forward.2} parent=1 // pred_check_branch
      %167 = sbr.rel (0) target = $region105
    $region104: #{gsrnet_forward.2} parent=1 // pred_region
      %168 = dma.done [#allocation14], 512
    $region105: #{gsrnet_forward.2} parent=1 // pred_fallthru
      _
    // Predicated region
    $region106: #{gsrnet_forward.2} parent=1 // pred_check
      _
    $region107: #{gsrnet_forward.2} parent=1 // pred_check_branch
      %170 = sbr.rel (0) target = $region109
    $region108: #{gsrnet_forward.2} parent=1 // pred_region
      %171 = dma.done [#allocation14], 512
    $region109: #{gsrnet_forward.2} parent=1 // pred_fallthru
      _
    // Predicated region
    $region110: #{gsrnet_forward.2} parent=1 // pred_check
      _
    $region111: #{gsrnet_forward.2} parent=1 // pred_check_branch
      %173 = sbr.rel (0) target = $region113
    $region112: #{gsrnet_forward.2} parent=1 // pred_region
      %174 = dma.done [#allocation17], 16
    $region113: #{gsrnet_forward.2} parent=1 // pred_fallthru
      _
    %175 = sfence
    %v176 = vld [vmem:[%s0] sm:$0xff]
    %v177 = vld [vmem:[%s0 + $0x8] sm:$0xff]
    %vm178 = vcmask 130048
    %v179 = vsel %vm178, %v176, 0.0
    %180 = vadd.xlane.f32.xlu0 %v179
    %v181 = vpop.xlane.xlu0 %180
    %v182 = vsel %vm178, %v177, 0.0
    %183 = vadd.xlane.f32.xlu0 %v182
    %v184 = vpop.xlane.xlu0 %183
    %v185 = vrsqrt.pop %v181
    %v186 = vrsqrt.pop %v184
    %v187 = vand.u32 2147483647, %v185
    %v188 = vand.u32 2147483647, %v186
    %vm189 = vcmp.eq.f32.partialorder %v187, inf
    %vm190 = vcmp.eq.f32.partialorder %v188, inf
    %v191 = vsel %vm189, 0.0, %v185
    %v192 = vsel %vm190, 0.0, %v186
    %v193 = vmul.f32 %v176, %v191
    %v194 = vmul.f32 %v177, %v192
    %195 = vxpose.xlu0.b32.start [1/16] %v193, 128
    %196 = vxpose.xlu0.b32.cont [2/16] %v194, 128
    %197 = vxpose.xlu0.b32.cont [3/16] 0.0, 128
    %198 = vxpose.xlu0.b32.cont [4/16] 0.0, 128
    %199 = vxpose.xlu0.b32.cont [5/16] 0.0, 128
    %200 = vxpose.xlu0.b32.cont [6/16] 0.0, 128
    %201 = vxpose.xlu0.b32.cont [7/16] 0.0, 128
    %202 = vxpose.xlu0.b32.cont [8/16] 0.0, 128
    %203 = vxpose.xlu0.b32.cont [9/16] 0.0, 128
    %204 = vxpose.xlu0.b32.cont [10/16] 0.0, 128
    %205 = vxpose.xlu0.b32.cont [11/16] 0.0, 128
    %206 = vxpose.xlu0.b32.cont [12/16] 0.0, 128
    %207 = vxpose.xlu0.b32.cont [13/16] 0.0, 128
    %208 = vxpose.xlu0.b32.cont [14/16] 0.0, 128
    %209 = vxpose.xlu0.b32.cont [15/16] 0.0, 128
    %210 = vxpose.xlu0.b32.end [16/16] 0.0, 128
    %v211 = vpop.trf.xlu0
    %v212 = vpop.trf.xlu0
    %v213 = vpop.trf.xlu0
    %v214 = vpop.trf.xlu0
    %v215 = vpop.trf.xlu0
    %v216 = vpop.trf.xlu0
    %v217 = vpop.trf.xlu0
    %v218 = vpop.trf.xlu0
    %v219 = vpop.trf.xlu0
    %v220 = vpop.trf.xlu0
    %v221 = vpop.trf.xlu0
    %v222 = vpop.trf.xlu0
    %v223 = vpop.trf.xlu0
    %v224 = vpop.trf.xlu0
    %v225 = vpop.trf.xlu0
    %v226 = vpop.trf.xlu0
    %v227 = vmul.f32 %v211, %v191
    %v228 = vmul.f32 %v212, %v192
    %229 = vst.msk [vmem:[%s19] sm:$0xff] %vm178, %v227
    %230 = vst.msk [vmem:[%s19 + $0x8] sm:$0xff] %vm178, %v228
    %v231 = vld [vmem:[#allocation2] sm:$0xff]
    %v232 = vld [vmem:[#allocation2 + $0x8] sm:$0xff]
    %v233 = vld [vmem:[%s2] sm:$0x1]
    %v235 = vlaneseq
    %v236 = vshrl.u32 %v235, 7
    %v237 = vsub.s32 0, %v236
    %v238 = vrot.slane %v233, %v237
    %v241 = vsel %vm178, %v227, 0
    %v244 = vsel %vm178, %v228, 0
    %246 = vmatprep.subr.mxu0 0.0
    %247 = vmatpush1.msra.mxu0 %v231
    %248 = vmatprep.subr.mxu0 0.0
    %249 = vmatpush1.msra.mxu0 %v232
    %250 = vmatprep.subr.mxu0 0.0
    %251 = vmatpush1.msra.mxu0 0.0
    %252 = vmatprep.subr.mxu0 0.0
    %253 = vmatpush1.msra.mxu0 0.0
    %254 = vmatprep.subr.mxu0 0.0
    %255 = vmatpush1.msra.mxu0 0.0
    %256 = vmatprep.subr.mxu0 0.0
    %257 = vmatpush1.msra.mxu0 0.0
    %258 = vmatprep.subr.mxu0 0.0
    %259 = vmatpush1.msra.mxu0 0.0
    %260 = vmatprep.subr.mxu0 0.0
    %261 = vmatpush1.msra.mxu0 0.0
    %262 = vmatprep.subr.mxu0 0.0
    %263 = vmatpush1.msra.mxu0 0.0
    %264 = vmatprep.subr.mxu0 0.0
    %265 = vmatpush1.msra.mxu0 0.0
    %266 = vmatprep.subr.mxu0 0.0
    %267 = vmatpush1.msra.mxu0 0.0
    %268 = vmatprep.subr.mxu0 0.0
    %269 = vmatpush1.msra.mxu0 0.0
    %270 = vmatprep.subr.mxu0 0.0
    %271 = vmatpush1.msra.mxu0 0.0
    %272 = vmatprep.subr.mxu0 0.0
    %273 = vmatpush1.msra.mxu0 0.0
    %274 = vmatprep.subr.mxu0 0.0
    %275 = vmatpush1.msra.mxu0 0.0
    %276 = vmatprep.subr.mxu0 0.0
    %277 = vmatpush1.msra.mxu0 0.0
    %278 = vmatprep.subr.mxu0 0.0
    %279 = vmatpush1.msra.mxu0 0.0
    %280 = vmatprep.subr.mxu0 0.0
    %281 = vmatpush1.msra.mxu0 0.0
    %282 = vmatprep.subr.mxu0 0.0
    %283 = vmatpush1.msra.mxu0 0.0
    %284 = vmatprep.subr.mxu0 0.0
    %285 = vmatpush1.msra.mxu0 0.0
    %286 = vmatprep.subr.mxu0 0.0
    %287 = vmatpush1.msra.mxu0 0.0
    %288 = vmatprep.subr.mxu0 0.0
    %289 = vmatpush1.msra.mxu0 0.0
    %290 = vmatprep.subr.mxu0 0.0
    %291 = vmatpush1.msra.mxu0 0.0
    %292 = vmatprep.subr.mxu0 0.0
    %293 = vmatpush1.msra.mxu0 0.0
    %294 = vmatprep.subr.mxu0 0.0
    %295 = vmatpush1.msra.mxu0 0.0
    %296 = vmatprep.subr.mxu0 0.0
    %297 = vmatpush1.msra.mxu0 0.0
    %298 = vmatprep.subr.mxu0 0.0
    %299 = vmatpush1.msra.mxu0 0.0
    %300 = vmatprep.subr.mxu0 0.0
    %301 = vmatpush1.msra.mxu0 0.0
    %302 = vmatprep.subr.mxu0 0.0
    %303 = vmatpush1.msra.mxu0 0.0
    %304 = vmatprep.subr.mxu0 0.0
    %305 = vmatpush1.msra.mxu0 0.0
    %306 = vmatprep.subr.mxu0 0.0
    %307 = vmatpush1.msra.mxu0 0.0
    %308 = vmatprep.subr.mxu0 0.0
    %309 = vmatpush1.msra.mxu0 0.0
    %310 = vmatprep.mubr.f32.mxu0 0.0
    %311 = vmatmul.mubr.f32.gmra.mrb[0].mxu0 %v241
    %v312 = vpop.f32.mrb[0].mxu0
    %v313 = vadd.f32 %v238, %v312
    %v314 = vpop.f32.mrb[0].mxu0
    %315 = vmatprep.mubr.f32.mxu0 0.0
    %316 = vmatmul.mubr.f32.gmra.mrb[0].mxu0 %v244
    %v317 = vpop.f32.mrb[0].mxu0
    %v318 = vadd.f32 %v238, %v317
    %v319 = vpop.f32.mrb[0].mxu0
    %320 = vdwg.mxu0
    %vm321 = vcmask 261120
    %322 = vst.msk [vmem:[#allocation18] sm:$0xff] %vm321, %v313
    %323 = vst.msk [vmem:[#allocation18 + $0x8] sm:$0xff] %vm321, %v318
    %324 = vmatprep.subr.mxu0 0.0
    %325 = vmatpush1.msra.mxu0 %v313
    %326 = vmatprep.subr.mxu0 0.0
    %327 = vmatpush1.msra.mxu0 %v318
    %328 = vmatprep.subr.mxu0 0.0
    %329 = vmatpush1.msra.mxu0 0.0
    %330 = vmatprep.subr.mxu0 0.0
    %331 = vmatpush1.msra.mxu0 0.0
    %332 = vmatprep.subr.mxu0 0.0
    %333 = vmatpush1.msra.mxu0 0.0
    %334 = vmatprep.subr.mxu0 0.0
    %335 = vmatpush1.msra.mxu0 0.0
    %336 = vmatprep.subr.mxu0 0.0
    %337 = vmatpush1.msra.mxu0 0.0
    %338 = vmatprep.subr.mxu0 0.0
    %339 = vmatpush1.msra.mxu0 0.0
    %340 = vmatprep.subr.mxu0 0.0
    %341 = vmatpush1.msra.mxu0 0.0
    %342 = vmatprep.subr.mxu0 0.0
    %343 = vmatpush1.msra.mxu0 0.0
    %344 = vmatprep.subr.mxu0 0.0
    %345 = vmatpush1.msra.mxu0 0.0
    %346 = vmatprep.subr.mxu0 0.0
    %347 = vmatpush1.msra.mxu0 0.0
    %348 = vmatprep.subr.mxu0 0.0
    %349 = vmatpush1.msra.mxu0 0.0
    %350 = vmatprep.subr.mxu0 0.0
    %351 = vmatpush1.msra.mxu0 0.0
    %352 = vmatprep.subr.mxu0 0.0
    %353 = vmatpush1.msra.mxu0 0.0
    %354 = vmatprep.subr.mxu0 0.0
    %355 = vmatpush1.msra.mxu0 0.0
    %356 = vmatprep.subr.mxu0 0.0
    %357 = vmatpush1.msra.mxu0 0.0
    %358 = vmatprep.subr.mxu0 0.0
    %359 = vmatpush1.msra.mxu0 0.0
    %360 = vmatprep.subr.mxu0 0.0
    %361 = vmatpush1.msra.mxu0 0.0
    %362 = vmatprep.subr.mxu0 0.0
    %363 = vmatpush1.msra.mxu0 0.0
    %364 = vmatprep.subr.mxu0 0.0
    %365 = vmatpush1.msra.mxu0 0.0
    %366 = vmatprep.subr.mxu0 0.0
    %367 = vmatpush1.msra.mxu0 0.0
    %368 = vmatprep.subr.mxu0 0.0
    %369 = vmatpush1.msra.mxu0 0.0
    %370 = vmatprep.subr.mxu0 0.0
    %371 = vmatpush1.msra.mxu0 0.0
    %372 = vmatprep.subr.mxu0 0.0
    %373 = vmatpush1.msra.mxu0 0.0
    %374 = vmatprep.subr.mxu0 0.0
    %375 = vmatpush1.msra.mxu0 0.0
    %376 = vmatprep.subr.mxu0 0.0
    %377 = vmatpush1.msra.mxu0 0.0
    %378 = vmatprep.subr.mxu0 0.0
    %379 = vmatpush1.msra.mxu0 0.0
    %380 = vmatprep.subr.mxu0 0.0
    %381 = vmatpush1.msra.mxu0 0.0
    %382 = vmatprep.subr.mxu0 0.0
    %383 = vmatpush1.msra.mxu0 0.0
    %384 = vmatprep.subr.mxu0 0.0
    %385 = vmatpush1.msra.mxu0 0.0
    %386 = vmatprep.subr.mxu0 0.0
    %387 = vmatpush1.msra.mxu0 0.0
    %388 = vmatprep.mubr.f32.mxu0 0.0
    %389 = vmatmul.mubr.f32.gmra.mrb[0].mxu0 %v241
    %v390 = vpop.f32.mrb[0].mxu0
    %v391 = vadd.f32 0.0, %v390
    %v392 = vpop.f32.mrb[0].mxu0
    %393 = vmatprep.mubr.f32.mxu0 0.0
    %394 = vmatmul.mubr.f32.gmra.mrb[0].mxu0 %v244
    %v395 = vpop.f32.mrb[0].mxu0
    %v396 = vadd.f32 0.0, %v395
    %v397 = vpop.f32.mrb[0].mxu0
    %398 = vdwg.mxu0
    %v399 = vld [vmem:[%s3] sm:$0xff]
    %v400 = vld [vmem:[%s3 + $0x8] sm:$0xff]
    %v401 = vld [vmem:[%s3 + $0x10] sm:$0xff]
    %v402 = vld [vmem:[%s3 + $0x18] sm:$0xff]
    %v403 = vld [vmem:[#allocation6] sm:$0x1]
    %v405 = vlaneseq
    %v406 = vshrl.u32 %v405, 7
    %v407 = vsub.s32 0, %v406
    %v408 = vrot.slane %v403, %v407
    %v411 = vsel %vm321, %v391, 0
    %v414 = vsel %vm321, %v396, 0
    %416 = vmatprep.subr.mxu0 0.0
    %417 = vmatpush1.msra.mxu0 %v399
    %418 = vmatprep.subr.mxu0 0.0
    %419 = vmatpush1.msra.mxu0 %v400
    %420 = vmatprep.subr.mxu0 0.0
    %421 = vmatpush1.msra.mxu0 %v401
    %422 = vmatprep.subr.mxu0 0.0
    %423 = vmatpush1.msra.mxu0 %v402
    %424 = vmatprep.subr.mxu0 0.0
    %425 = vmatpush1.msra.mxu0 0.0
    %426 = vmatprep.subr.mxu0 0.0
    %427 = vmatpush1.msra.mxu0 0.0
    %428 = vmatprep.subr.mxu0 0.0
    %429 = vmatpush1.msra.mxu0 0.0
    %430 = vmatprep.subr.mxu0 0.0
    %431 = vmatpush1.msra.mxu0 0.0
    %432 = vmatprep.subr.mxu0 0.0
    %433 = vmatpush1.msra.mxu0 0.0
    %434 = vmatprep.subr.mxu0 0.0
    %435 = vmatpush1.msra.mxu0 0.0
    %436 = vmatprep.subr.mxu0 0.0
    %437 = vmatpush1.msra.mxu0 0.0
    %438 = vmatprep.subr.mxu0 0.0
    %439 = vmatpush1.msra.mxu0 0.0
    %440 = vmatprep.subr.mxu0 0.0
    %441 = vmatpush1.msra.mxu0 0.0
    %442 = vmatprep.subr.mxu0 0.0
    %443 = vmatpush1.msra.mxu0 0.0
    %444 = vmatprep.subr.mxu0 0.0
    %445 = vmatpush1.msra.mxu0 0.0
    %446 = vmatprep.subr.mxu0 0.0
    %447 = vmatpush1.msra.mxu0 0.0
    %448 = vmatprep.subr.mxu0 0.0
    %449 = vmatpush1.msra.mxu0 0.0
    %450 = vmatprep.subr.mxu0 0.0
    %451 = vmatpush1.msra.mxu0 0.0
    %452 = vmatprep.subr.mxu0 0.0
    %453 = vmatpush1.msra.mxu0 0.0
    %454 = vmatprep.subr.mxu0 0.0
    %455 = vmatpush1.msra.mxu0 0.0
    %456 = vmatprep.subr.mxu0 0.0
    %457 = vmatpush1.msra.mxu0 0.0
    %458 = vmatprep.subr.mxu0 0.0
    %459 = vmatpush1.msra.mxu0 0.0
    %460 = vmatprep.subr.mxu0 0.0
    %461 = vmatpush1.msra.mxu0 0.0
    %462 = vmatprep.subr.mxu0 0.0
    %463 = vmatpush1.msra.mxu0 0.0
    %464 = vmatprep.subr.mxu0 0.0
    %465 = vmatpush1.msra.mxu0 0.0
    %466 = vmatprep.subr.mxu0 0.0
    %467 = vmatpush1.msra.mxu0 0.0
    %468 = vmatprep.subr.mxu0 0.0
    %469 = vmatpush1.msra.mxu0 0.0
    %470 = vmatprep.subr.mxu0 0.0
    %471 = vmatpush1.msra.mxu0 0.0
    %472 = vmatprep.subr.mxu0 0.0
    %473 = vmatpush1.msra.mxu0 0.0
    %474 = vmatprep.subr.mxu0 0.0
    %475 = vmatpush1.msra.mxu0 0.0
    %476 = vmatprep.subr.mxu0 0.0
    %477 = vmatpush1.msra.mxu0 0.0
    %478 = vmatprep.subr.mxu0 0.0
    %479 = vmatpush1.msra.mxu0 0.0
    %480 = vmatprep.mubr.f32.mxu0 0.0
    %481 = vmatmul.mubr.f32.gmra.mrb[0].mxu0 %v411
    %v482 = vpop.f32.mrb[0].mxu0
    %v483 = vadd.f32 %v408, %v482
    %v484 = vpop.f32.mrb[0].mxu0
    %485 = vmatprep.mubr.f32.mxu0 0.0
    %486 = vmatmul.mubr.f32.gmra.mrb[0].mxu0 %v414
    %v487 = vpop.f32.mrb[0].mxu0
    %v488 = vadd.f32 %v408, %v487
    %v489 = vpop.f32.mrb[0].mxu0
    %490 = vdwg.mxu0
    %v491 = vld [vmem:[%s7] sm:$0xff]
    %v492 = vld [vmem:[%s7 + $0x8] sm:$0xff]
    %v493 = vld [vmem:[%s7 + $0x10] sm:$0xff]
    %v494 = vld [vmem:[%s7 + $0x18] sm:$0xff]
    %s495 = sld [smem:[#allocation9]]
    %v496 = vstv %s495
    %497 = vxpose.xlu0.b32.start [1/16] %v491, 128
    %498 = vxpose.xlu0.b32.cont [2/16] %v492, 128
    %499 = vxpose.xlu0.b32.cont [3/16] %v493, 128
    %500 = vxpose.xlu0.b32.cont [4/16] %v494, 128
    %501 = vxpose.xlu0.b32.cont [5/16] 0.0, 128
    %502 = vxpose.xlu0.b32.cont [6/16] 0.0, 128
    %503 = vxpose.xlu0.b32.cont [7/16] 0.0, 128
    %504 = vxpose.xlu0.b32.cont [8/16] 0.0, 128
    %505 = vxpose.xlu0.b32.cont [9/16] 0.0, 128
    %506 = vxpose.xlu0.b32.cont [10/16] 0.0, 128
    %507 = vxpose.xlu0.b32.cont [11/16] 0.0, 128
    %508 = vxpose.xlu0.b32.cont [12/16] 0.0, 128
    %509 = vxpose.xlu0.b32.cont [13/16] 0.0, 128
    %510 = vxpose.xlu0.b32.cont [14/16] 0.0, 128
    %511 = vxpose.xlu0.b32.cont [15/16] 0.0, 128
    %512 = vxpose.xlu0.b32.end [16/16] 0.0, 128
    %v513 = vpop.trf.xlu0
    %v514 = vpop.trf.xlu0
    %v515 = vpop.trf.xlu0
    %v516 = vpop.trf.xlu0
    %v517 = vpop.trf.xlu0
    %v518 = vpop.trf.xlu0
    %v519 = vpop.trf.xlu0
    %v520 = vpop.trf.xlu0
    %v521 = vpop.trf.xlu0
    %v522 = vpop.trf.xlu0
    %v523 = vpop.trf.xlu0
    %v524 = vpop.trf.xlu0
    %v525 = vpop.trf.xlu0
    %v526 = vpop.trf.xlu0
    %v527 = vpop.trf.xlu0
    %v528 = vpop.trf.xlu0
    %v530 = vsel %vm321, %v513, 0
    %v533 = vsel %vm321, %v483, 0
    %v536 = vsel %vm321, %v488, 0
    %538 = vmatprep.subr.mxu0 0.0
    %539 = vmatpush1.xpose.msra.mxu0 %v533
    %540 = vmatprep.subr.mxu0 0.0
    %541 = vmatpush1.xpose.msra.mxu0 %v536
    %542 = vmatprep.subr.mxu0 0.0
    %543 = vmatpush1.xpose.msra.mxu0 0.0
    %544 = vmatprep.subr.mxu0 0.0
    %545 = vmatpush1.xpose.msra.mxu0 0.0
    %546 = vmatprep.subr.mxu0 0.0
    %547 = vmatpush1.xpose.msra.mxu0 0.0
    %548 = vmatprep.subr.mxu0 0.0
    %549 = vmatpush1.xpose.msra.mxu0 0.0
    %550 = vmatprep.subr.mxu0 0.0
    %551 = vmatpush1.xpose.msra.mxu0 0.0
    %552 = vmatprep.subr.mxu0 0.0
    %553 = vmatpush1.xpose.msra.mxu0 0.0
    %554 = vmatprep.subr.mxu0 0.0
    %555 = vmatpush1.xpose.msra.mxu0 0.0
    %556 = vmatprep.subr.mxu0 0.0
    %557 = vmatpush1.xpose.msra.mxu0 0.0
    %558 = vmatprep.subr.mxu0 0.0
    %559 = vmatpush1.xpose.msra.mxu0 0.0
    %560 = vmatprep.subr.mxu0 0.0
    %561 = vmatpush1.xpose.msra.mxu0 0.0
    %562 = vmatprep.subr.mxu0 0.0
    %563 = vmatpush1.xpose.msra.mxu0 0.0
    %564 = vmatprep.subr.mxu0 0.0
    %565 = vmatpush1.xpose.msra.mxu0 0.0
    %566 = vmatprep.subr.mxu0 0.0
    %567 = vmatpush1.xpose.msra.mxu0 0.0
    %568 = vmatprep.subr.mxu0 0.0
    %569 = vmatpush1.xpose.msra.mxu0 0.0
    %570 = vmatprep.subr.mxu0 0.0
    %571 = vmatpush1.xpose.msra.mxu0 0.0
    %572 = vmatprep.subr.mxu0 0.0
    %573 = vmatpush1.xpose.msra.mxu0 0.0
    %574 = vmatprep.subr.mxu0 0.0
    %575 = vmatpush1.xpose.msra.mxu0 0.0
    %576 = vmatprep.subr.mxu0 0.0
    %577 = vmatpush1.xpose.msra.mxu0 0.0
    %578 = vmatprep.subr.mxu0 0.0
    %579 = vmatpush1.xpose.msra.mxu0 0.0
    %580 = vmatprep.subr.mxu0 0.0
    %581 = vmatpush1.xpose.msra.mxu0 0.0
    %582 = vmatprep.subr.mxu0 0.0
    %583 = vmatpush1.xpose.msra.mxu0 0.0
    %584 = vmatprep.subr.mxu0 0.0
    %585 = vmatpush1.xpose.msra.mxu0 0.0
    %586 = vmatprep.subr.mxu0 0.0
    %587 = vmatpush1.xpose.msra.mxu0 0.0
    %588 = vmatprep.subr.mxu0 0.0
    %589 = vmatpush1.xpose.msra.mxu0 0.0
    %590 = vmatprep.subr.mxu0 0.0
    %591 = vmatpush1.xpose.msra.mxu0 0.0
    %592 = vmatprep.subr.mxu0 0.0
    %593 = vmatpush1.xpose.msra.mxu0 0.0
    %594 = vmatprep.subr.mxu0 0.0
    %595 = vmatpush1.xpose.msra.mxu0 0.0
    %596 = vmatprep.subr.mxu0 0.0
    %597 = vmatpush1.xpose.msra.mxu0 0.0
    %598 = vmatprep.subr.mxu0 0.0
    %599 = vmatpush1.xpose.msra.mxu0 0.0
    %600 = vmatprep.subr.mxu0 0.0
    %601 = vmatpush1.xpose.msra.mxu0 0.0
    %602 = vmatprep.mubr.f32.mxu0 0.0
    %603 = vmatmul.mubr.f32.gmra.mrb[0].mxu0 %v530
    %v604 = vpop.f32.mrb[0].mxu0
    %v605 = vadd.f32 %v496, %v604
    %v606 = vpop.f32.mrb[0].mxu0
    %607 = vdwg.mxu0
    %v608 = vsub.f32 0.0, %v605
    %v609 = vmul.f32 %v608, 1.442695
    %v610 = vpow.pop %v609
    %v611 = vadd.f32 %v610, 1.0
    %v612 = vrcp.pop %v611
    %v613 = vmul.f32 1.0, %v612
    %v614 = vlaneseq
    %v615 = vshrl.u32 %v614, 7
    %v616 = vadd.s32 %v615, 8
    %v617 = vlaneseq
    %v618 = vand.u32 %v617, 127
    %vm619 = vcmp.eq.s32.totalorder %v615, %v618
    %vm620 = vcmp.eq.s32.totalorder %v616, %v618
    %v621 = vlaneseq
    %v622 = vshrl.u32 %v621, 7
    %v623 = vsub.s32 0, %v622
    %v624 = vrot.slane %v613, %v623
    %v625 = vsel %vm619, %v624, 0.0
    %v626 = vsel %vm620, %v624, 0.0
    %v627 = vsel %vm178, %v625, 0.0
    %628 = vadd.xlane.f32.xlu0 %v627
    %v629 = vpop.xlane.xlu0 %628
    %v630 = vsel %vm178, %v626, 0.0
    %631 = vadd.xlane.f32.xlu0 %v630
    %v632 = vpop.xlane.xlu0 %631
    %vm633 = vcmp.gt.f32.partialorder %v629, %v624
    %vm634 = vcmp.gt.f32.partialorder %v632, %v624
    %vm635 = vcmp.eq.f32.partialorder %v629, %v624
    %vm636 = vcmp.eq.f32.partialorder %v632, %v624
    %vm637 = vcmp.lt.s32.totalorder %v615, %v618
    %vm638 = vcmp.lt.s32.totalorder %v616, %v618
    %vm639 = vmand %vm635, %vm637
    %vm640 = vmand %vm636, %vm638
    %vm641 = vmor %vm633, %vm639
    %vm642 = vmor %vm634, %vm640
    %v643 = vsel %vm641, 1.0, 0.0
    %v644 = vsel %vm642, 1.0, 0.0
    %v645 = vsel %vm178, %v643, 0.0
    %v646 = vsel %vm178, %v644, 0.0
    %v647 = vadd.f32 %v645, %v646
    %v648 = vrot.slane %v647, 4
    %v649 = vadd.f32 %v647, %v648
    %v650 = vrot.slane %v649, 2
    %v651 = vadd.f32 %v649, %v650
    %v652 = vrot.slane %v651, 1
    %v653 = vadd.f32 %v651, %v652
    %v654 = vcvt.s32.f32 %v615
    %v655 = vcvt.s32.f32 %v616
    %vm656 = vcmp.eq.f32.partialorder %v654, %v653
    %vm657 = vcmp.eq.f32.partialorder %v655, %v653
    %v658 = vsel %vm656, 1.0, 0.0
    %v659 = vsel %vm657, 1.0, 0.0
    %v660 = vmul.f32 %v658, %v624
    %v661 = vmul.f32 %v659, %v624
    %vm662 = vcmp.ne.f32.partialorder %v227, 0.0
    %vm663 = vcmp.ne.f32.partialorder %v228, 0.0
    %v664 = vsel %vm662, 1.0, 0.0
    %v665 = vsel %vm663, 1.0, 0.0
    %v667 = vsel %vm178, %v664, 0
    %v670 = vsel %vm178, %v665, 0
    %672 = vmatprep.subr.mxu0 0.0
    %673 = vmatpush1.msra.mxu0 %v664
    %674 = vmatprep.subr.mxu0 0.0
    %675 = vmatpush1.msra.mxu0 %v665
    %676 = vmatprep.subr.mxu0 0.0
    %677 = vmatpush1.msra.mxu0 0.0
    %678 = vmatprep.subr.mxu0 0.0
    %679 = vmatpush1.msra.mxu0 0.0
    %680 = vmatprep.subr.mxu0 0.0
    %681 = vmatpush1.msra.mxu0 0.0
    %682 = vmatprep.subr.mxu0 0.0
    %683 = vmatpush1.msra.mxu0 0.0
    %684 = vmatprep.subr.mxu0 0.0
    %685 = vmatpush1.msra.mxu0 0.0
    %686 = vmatprep.subr.mxu0 0.0
    %687 = vmatpush1.msra.mxu0 0.0
    %688 = vmatprep.subr.mxu0 0.0
    %689 = vmatpush1.msra.mxu0 0.0
    %690 = vmatprep.subr.mxu0 0.0
    %691 = vmatpush1.msra.mxu0 0.0
    %692 = vmatprep.subr.mxu0 0.0
    %693 = vmatpush1.msra.mxu0 0.0
    %694 = vmatprep.subr.mxu0 0.0
    %695 = vmatpush1.msra.mxu0 0.0
    %696 = vmatprep.subr.mxu0 0.0
    %697 = vmatpush1.msra.mxu0 0.0
    %698 = vmatprep.subr.mxu0 0.0
    %699 = vmatpush1.msra.mxu0 0.0
    %700 = vmatprep.subr.mxu0 0.0
    %701 = vmatpush1.msra.mxu0 0.0
    %702 = vmatprep.subr.mxu0 0.0
    %703 = vmatpush1.msra.mxu0 0.0
    %704 = vmatprep.subr.mxu0 0.0
    %705 = vmatpush1.msra.mxu0 0.0
    %706 = vmatprep.subr.mxu0 0.0
    %707 = vmatpush1.msra.mxu0 0.0
    %708 = vmatprep.subr.mxu0 0.0
    %709 = vmatpush1.msra.mxu0 0.0
    %710 = vmatprep.subr.mxu0 0.0
    %711 = vmatpush1.msra.mxu0 0.0
    %712 = vmatprep.subr.mxu0 0.0
    %713 = vmatpush1.msra.mxu0 0.0
    %714 = vmatprep.subr.mxu0 0.0
    %715 = vmatpush1.msra.mxu0 0.0
    %716 = vmatprep.subr.mxu0 0.0
    %717 = vmatpush1.msra.mxu0 0.0
    %718 = vmatprep.subr.mxu0 0.0
    %719 = vmatpush1.msra.mxu0 0.0
    %720 = vmatprep.subr.mxu0 0.0
    %721 = vmatpush1.msra.mxu0 0.0
    %722 = vmatprep.subr.mxu0 0.0
    %723 = vmatpush1.msra.mxu0 0.0
    %724 = vmatprep.subr.mxu0 0.0
    %725 = vmatpush1.msra.mxu0 0.0
    %726 = vmatprep.subr.mxu0 0.0
    %727 = vmatpush1.msra.mxu0 0.0
    %728 = vmatprep.subr.mxu0 0.0
    %729 = vmatpush1.msra.mxu0 0.0
    %730 = vmatprep.subr.mxu0 0.0
    %731 = vmatpush1.msra.mxu0 0.0
    %732 = vmatprep.subr.mxu0 0.0
    %733 = vmatpush1.msra.mxu0 0.0
    %734 = vmatprep.subr.mxu0 0.0
    %735 = vmatpush1.msra.mxu0 0.0
    %736 = vmatprep.mubr.f32.mxu0 0.0
    %737 = vmatmul.mubr.f32.gmra.mrb[0].mxu0 %v667
    %v738 = vpop.f32.mrb[0].mxu0
    %v739 = vadd.f32 0.0, %v738
    %v740 = vpop.f32.mrb[0].mxu0
    %741 = vmatprep.mubr.f32.mxu0 0.0
    %742 = vmatmul.mubr.f32.gmra.mrb[0].mxu0 %v670
    %v743 = vpop.f32.mrb[0].mxu0
    %v744 = vadd.f32 0.0, %v743
    %v745 = vpop.f32.mrb[0].mxu0
    %746 = vdwg.mxu0
    %vm747 = vcmp.ne.f32.partialorder %v739, 0.0
    %vm748 = vcmp.ne.f32.partialorder %v744, 0.0
    %v749 = vsel %vm747, 1.0, 0.0
    %v750 = vsel %vm748, 1.0, 0.0
    %v752 = vsel %vm178, %v658, 0
    %v755 = vsel %vm178, %v659, 0
    %757 = vmatprep.subr.mxu0 0.0
    %758 = vmatpush1.msra.mxu0 %v749
    %759 = vmatprep.subr.mxu0 0.0
    %760 = vmatpush1.msra.mxu0 %v750
    %761 = vmatprep.subr.mxu0 0.0
    %762 = vmatpush1.msra.mxu0 0.0
    %763 = vmatprep.subr.mxu0 0.0
    %764 = vmatpush1.msra.mxu0 0.0
    %765 = vmatprep.subr.mxu0 0.0
    %766 = vmatpush1.msra.mxu0 0.0
    %767 = vmatprep.subr.mxu0 0.0
    %768 = vmatpush1.msra.mxu0 0.0
    %769 = vmatprep.subr.mxu0 0.0
    %770 = vmatpush1.msra.mxu0 0.0
    %771 = vmatprep.subr.mxu0 0.0
    %772 = vmatpush1.msra.mxu0 0.0
    %773 = vmatprep.subr.mxu0 0.0
    %774 = vmatpush1.msra.mxu0 0.0
    %775 = vmatprep.subr.mxu0 0.0
    %776 = vmatpush1.msra.mxu0 0.0
    %777 = vmatprep.subr.mxu0 0.0
    %778 = vmatpush1.msra.mxu0 0.0
    %779 = vmatprep.subr.mxu0 0.0
    %780 = vmatpush1.msra.mxu0 0.0
    %781 = vmatprep.subr.mxu0 0.0
    %782 = vmatpush1.msra.mxu0 0.0
    %783 = vmatprep.subr.mxu0 0.0
    %784 = vmatpush1.msra.mxu0 0.0
    %785 = vmatprep.subr.mxu0 0.0
    %786 = vmatpush1.msra.mxu0 0.0
    %787 = vmatprep.subr.mxu0 0.0
    %788 = vmatpush1.msra.mxu0 0.0
    %789 = vmatprep.subr.mxu0 0.0
    %790 = vmatpush1.msra.mxu0 0.0
    %791 = vmatprep.subr.mxu0 0.0
    %792 = vmatpush1.msra.mxu0 0.0
    %793 = vmatprep.subr.mxu0 0.0
    %794 = vmatpush1.msra.mxu0 0.0
    %795 = vmatprep.subr.mxu0 0.0
    %796 = vmatpush1.msra.mxu0 0.0
    %797 = vmatprep.subr.mxu0 0.0
    %798 = vmatpush1.msra.mxu0 0.0
    %799 = vmatprep.subr.mxu0 0.0
    %800 = vmatpush1.msra.mxu0 0.0
    %801 = vmatprep.subr.mxu0 0.0
    %802 = vmatpush1.msra.mxu0 0.0
    %803 = vmatprep.subr.mxu0 0.0
    %804 = vmatpush1.msra.mxu0 0.0
    %805 = vmatprep.subr.mxu0 0.0
    %806 = vmatpush1.msra.mxu0 0.0
    %807 = vmatprep.subr.mxu0 0.0
    %808 = vmatpush1.msra.mxu0 0.0
    %809 = vmatprep.subr.mxu0 0.0
    %810 = vmatpush1.msra.mxu0 0.0
    %811 = vmatprep.subr.mxu0 0.0
    %812 = vmatpush1.msra.mxu0 0.0
    %813 = vmatprep.subr.mxu0 0.0
    %814 = vmatpush1.msra.mxu0 0.0
    %815 = vmatprep.subr.mxu0 0.0
    %816 = vmatpush1.msra.mxu0 0.0
    %817 = vmatprep.subr.mxu0 0.0
    %818 = vmatpush1.msra.mxu0 0.0
    %819 = vmatprep.subr.mxu0 0.0
    %820 = vmatpush1.msra.mxu0 0.0
    %821 = vmatprep.mubr.f32.mxu0 0.0
    %822 = vmatmul.mubr.f32.gmra.mrb[0].mxu0 %v752
    %v823 = vpop.f32.mrb[0].mxu0
    %v824 = vadd.f32 0.0, %v823
    %v825 = vpop.f32.mrb[0].mxu0
    %826 = vmatprep.mubr.f32.mxu0 0.0
    %827 = vmatmul.mubr.f32.gmra.mrb[0].mxu0 %v755
    %v828 = vpop.f32.mrb[0].mxu0
    %v829 = vadd.f32 0.0, %v828
    %v830 = vpop.f32.mrb[0].mxu0
    %831 = vdwg.mxu0
    %v833 = vsel %vm178, %v824, 0
    %v836 = vsel %vm178, %v829, 0
    %838 = vmatprep.subr.mxu0 0.0
    %839 = vmatpush1.xpose.msra.mxu0 %v752
    %840 = vmatprep.subr.mxu0 0.0
    %841 = vmatpush1.xpose.msra.mxu0 %v755
    %842 = vmatprep.subr.mxu0 0.0
    %843 = vmatpush1.xpose.msra.mxu0 0.0
    %844 = vmatprep.subr.mxu0 0.0
    %845 = vmatpush1.xpose.msra.mxu0 0.0
    %846 = vmatprep.subr.mxu0 0.0
    %847 = vmatpush1.xpose.msra.mxu0 0.0
    %848 = vmatprep.subr.mxu0 0.0
    %849 = vmatpush1.xpose.msra.mxu0 0.0
    %850 = vmatprep.subr.mxu0 0.0
    %851 = vmatpush1.xpose.msra.mxu0 0.0
    %852 = vmatprep.subr.mxu0 0.0
    %853 = vmatpush1.xpose.msra.mxu0 0.0
    %854 = vmatprep.subr.mxu0 0.0
    %855 = vmatpush1.xpose.msra.mxu0 0.0
    %856 = vmatprep.subr.mxu0 0.0
    %857 = vmatpush1.xpose.msra.mxu0 0.0
    %858 = vmatprep.subr.mxu0 0.0
    %859 = vmatpush1.xpose.msra.mxu0 0.0
    %860 = vmatprep.subr.mxu0 0.0
    %861 = vmatpush1.xpose.msra.mxu0 0.0
    %862 = vmatprep.subr.mxu0 0.0
    %863 = vmatpush1.xpose.msra.mxu0 0.0
    %864 = vmatprep.subr.mxu0 0.0
    %865 = vmatpush1.xpose.msra.mxu0 0.0
    %866 = vmatprep.subr.mxu0 0.0
    %867 = vmatpush1.xpose.msra.mxu0 0.0
    %868 = vmatprep.subr.mxu0 0.0
    %869 = vmatpush1.xpose.msra.mxu0 0.0
    %870 = vmatprep.subr.mxu0 0.0
    %871 = vmatpush1.xpose.msra.mxu0 0.0
    %872 = vmatprep.subr.mxu0 0.0
    %873 = vmatpush1.xpose.msra.mxu0 0.0
    %874 = vmatprep.subr.mxu0 0.0
    %875 = vmatpush1.xpose.msra.mxu0 0.0
    %876 = vmatprep.subr.mxu0 0.0
    %877 = vmatpush1.xpose.msra.mxu0 0.0
    %878 = vmatprep.subr.mxu0 0.0
    %879 = vmatpush1.xpose.msra.mxu0 0.0
    %880 = vmatprep.subr.mxu0 0.0
    %881 = vmatpush1.xpose.msra.mxu0 0.0
    %882 = vmatprep.subr.mxu0 0.0
    %883 = vmatpush1.xpose.msra.mxu0 0.0
    %884 = vmatprep.subr.mxu0 0.0
    %885 = vmatpush1.xpose.msra.mxu0 0.0
    %886 = vmatprep.subr.mxu0 0.0
    %887 = vmatpush1.xpose.msra.mxu0 0.0
    %888 = vmatprep.subr.mxu0 0.0
    %889 = vmatpush1.xpose.msra.mxu0 0.0
    %890 = vmatprep.subr.mxu0 0.0
    %891 = vmatpush1.xpose.msra.mxu0 0.0
    %892 = vmatprep.subr.mxu0 0.0
    %893 = vmatpush1.xpose.msra.mxu0 0.0
    %894 = vmatprep.subr.mxu0 0.0
    %895 = vmatpush1.xpose.msra.mxu0 0.0
    %896 = vmatprep.subr.mxu0 0.0
    %897 = vmatpush1.xpose.msra.mxu0 0.0
    %898 = vmatprep.subr.mxu0 0.0
    %899 = vmatpush1.xpose.msra.mxu0 0.0
    %900 = vmatprep.subr.mxu0 0.0
    %901 = vmatpush1.xpose.msra.mxu0 0.0
    %902 = vmatprep.mubr.f32.mxu0 0.0
    %903 = vmatmul.mubr.f32.gmra.mrb[0].mxu0 %v833
    %v904 = vpop.f32.mrb[0].mxu0
    %v905 = vadd.f32 0.0, %v904
    %v906 = vpop.f32.mrb[0].mxu0
    %907 = vmatprep.mubr.f32.mxu0 0.0
    %908 = vmatmul.mubr.f32.gmra.mrb[0].mxu0 %v836
    %v909 = vpop.f32.mrb[0].mxu0
    %v910 = vadd.f32 0.0, %v909
    %v911 = vpop.f32.mrb[0].mxu0
    %912 = vdwg.mxu0
    %vm913 = vcmask 113664
    %v914 = vsel %vm913, %v905, 0.0
    %vm915 = vcmask 111616
    %v916 = vsel %vm915, %v910, 0.0
    %v917 = vadd.f32 %v914, %v916
    %v918 = vrot.slane %v917, 4
    %v919 = vadd.f32 %v917, %v918
    %v920 = vrot.slane %v919, 2
    %v921 = vadd.f32 %v919, %v920
    %v922 = vrot.slane %v921, 1
    %v923 = vadd.f32 %v921, %v922
    %v924 = vrcp.pop %v923
    %v925 = vmul.f32 %v905, %v924
    %v926 = vmul.f32 %v910, %v924
    %v928 = vsel %vm178, %v660, 0
    %v931 = vsel %vm178, %v661, 0
    %933 = vmatprep.subr.mxu0 0.0
    %934 = vmatpush1.msra.mxu0 %v483
    %935 = vmatprep.subr.mxu0 0.0
    %936 = vmatpush1.msra.mxu0 %v488
    %937 = vmatprep.subr.mxu0 0.0
    %938 = vmatpush1.msra.mxu0 0.0
    %939 = vmatprep.subr.mxu0 0.0
    %940 = vmatpush1.msra.mxu0 0.0
    %941 = vmatprep.subr.mxu0 0.0
    %942 = vmatpush1.msra.mxu0 0.0
    %943 = vmatprep.subr.mxu0 0.0
    %944 = vmatpush1.msra.mxu0 0.0
    %945 = vmatprep.subr.mxu0 0.0
    %946 = vmatpush1.msra.mxu0 0.0
    %947 = vmatprep.subr.mxu0 0.0
    %948 = vmatpush1.msra.mxu0 0.0
    %949 = vmatprep.subr.mxu0 0.0
    %950 = vmatpush1.msra.mxu0 0.0
    %951 = vmatprep.subr.mxu0 0.0
    %952 = vmatpush1.msra.mxu0 0.0
    %953 = vmatprep.subr.mxu0 0.0
    %954 = vmatpush1.msra.mxu0 0.0
    %955 = vmatprep.subr.mxu0 0.0
    %956 = vmatpush1.msra.mxu0 0.0
    %957 = vmatprep.subr.mxu0 0.0
    %958 = vmatpush1.msra.mxu0 0.0
    %959 = vmatprep.subr.mxu0 0.0
    %960 = vmatpush1.msra.mxu0 0.0
    %961 = vmatprep.subr.mxu0 0.0
    %962 = vmatpush1.msra.mxu0 0.0
    %963 = vmatprep.subr.mxu0 0.0
    %964 = vmatpush1.msra.mxu0 0.0
    %965 = vmatprep.subr.mxu0 0.0
    %966 = vmatpush1.msra.mxu0 0.0
    %967 = vmatprep.subr.mxu0 0.0
    %968 = vmatpush1.msra.mxu0 0.0
    %969 = vmatprep.subr.mxu0 0.0
    %970 = vmatpush1.msra.mxu0 0.0
    %971 = vmatprep.subr.mxu0 0.0
    %972 = vmatpush1.msra.mxu0 0.0
    %973 = vmatprep.subr.mxu0 0.0
    %974 = vmatpush1.msra.mxu0 0.0
    %975 = vmatprep.subr.mxu0 0.0
    %976 = vmatpush1.msra.mxu0 0.0
    %977 = vmatprep.subr.mxu0 0.0
    %978 = vmatpush1.msra.mxu0 0.0
    %979 = vmatprep.subr.mxu0 0.0
    %980 = vmatpush1.msra.mxu0 0.0
    %981 = vmatprep.subr.mxu0 0.0
    %982 = vmatpush1.msra.mxu0 0.0
    %983 = vmatprep.subr.mxu0 0.0
    %984 = vmatpush1.msra.mxu0 0.0
    %985 = vmatprep.subr.mxu0 0.0
    %986 = vmatpush1.msra.mxu0 0.0
    %987 = vmatprep.subr.mxu0 0.0
    %988 = vmatpush1.msra.mxu0 0.0
    %989 = vmatprep.subr.mxu0 0.0
    %990 = vmatpush1.msra.mxu0 0.0
    %991 = vmatprep.subr.mxu0 0.0
    %992 = vmatpush1.msra.mxu0 0.0
    %993 = vmatprep.subr.mxu0 0.0
    %994 = vmatpush1.msra.mxu0 0.0
    %995 = vmatprep.subr.mxu0 0.0
    %996 = vmatpush1.msra.mxu0 0.0
    %997 = vmatprep.mubr.f32.mxu0 0.0
    %998 = vmatmul.mubr.f32.gmra.mrb[0].mxu0 %v928
    %v999 = vpop.f32.mrb[0].mxu0
    %v1000 = vadd.f32 0.0, %v999
    %v1001 = vpop.f32.mrb[0].mxu0
    %1002 = vmatprep.mubr.f32.mxu0 0.0
    %1003 = vmatmul.mubr.f32.gmra.mrb[0].mxu0 %v931
    %v1004 = vpop.f32.mrb[0].mxu0
    %v1005 = vadd.f32 0.0, %v1004
    %v1006 = vpop.f32.mrb[0].mxu0
    %1007 = vdwg.mxu0
    %v1009 = vsel %vm913, %v925, 0
    %v1012 = vsel %vm913, %v926, 0
    %vm1014 = vcmask 1045504
    %v1016 = vsel %vm1014, %v1005, 0
    %1018 = vmatprep.subr.mxu0 0.0
    %1019 = vmatpush1.msra.mxu0 %v1000
    %1020 = vmatprep.subr.mxu0 0.0
    %1021 = vmatpush1.msra.mxu0 %v1016
    %1022 = vmatprep.subr.mxu0 0.0
    %1023 = vmatpush1.msra.mxu0 0.0
    %1024 = vmatprep.subr.mxu0 0.0
    %1025 = vmatpush1.msra.mxu0 0.0
    %1026 = vmatprep.subr.mxu0 0.0
    %1027 = vmatpush1.msra.mxu0 0.0
    %1028 = vmatprep.subr.mxu0 0.0
    %1029 = vmatpush1.msra.mxu0 0.0
    %1030 = vmatprep.subr.mxu0 0.0
    %1031 = vmatpush1.msra.mxu0 0.0
    %1032 = vmatprep.subr.mxu0 0.0
    %1033 = vmatpush1.msra.mxu0 0.0
    %1034 = vmatprep.subr.mxu0 0.0
    %1035 = vmatpush1.msra.mxu0 0.0
    %1036 = vmatprep.subr.mxu0 0.0
    %1037 = vmatpush1.msra.mxu0 0.0
    %1038 = vmatprep.subr.mxu0 0.0
    %1039 = vmatpush1.msra.mxu0 0.0
    %1040 = vmatprep.subr.mxu0 0.0
    %1041 = vmatpush1.msra.mxu0 0.0
    %1042 = vmatprep.subr.mxu0 0.0
    %1043 = vmatpush1.msra.mxu0 0.0
    %1044 = vmatprep.subr.mxu0 0.0
    %1045 = vmatpush1.msra.mxu0 0.0
    %1046 = vmatprep.subr.mxu0 0.0
    %1047 = vmatpush1.msra.mxu0 0.0
    %1048 = vmatprep.subr.mxu0 0.0
    %1049 = vmatpush1.msra.mxu0 0.0
    %1050 = vmatprep.subr.mxu0 0.0
    %1051 = vmatpush1.msra.mxu0 0.0
    %1052 = vmatprep.subr.mxu0 0.0
    %1053 = vmatpush1.msra.mxu0 0.0
    %1054 = vmatprep.subr.mxu0 0.0
    %1055 = vmatpush1.msra.mxu0 0.0
    %1056 = vmatprep.subr.mxu0 0.0
    %1057 = vmatpush1.msra.mxu0 0.0
    %1058 = vmatprep.subr.mxu0 0.0
    %1059 = vmatpush1.msra.mxu0 0.0
    %1060 = vmatprep.subr.mxu0 0.0
    %1061 = vmatpush1.msra.mxu0 0.0
    %1062 = vmatprep.subr.mxu0 0.0
    %1063 = vmatpush1.msra.mxu0 0.0
    %1064 = vmatprep.subr.mxu0 0.0
    %1065 = vmatpush1.msra.mxu0 0.0
    %1066 = vmatprep.subr.mxu0 0.0
    %1067 = vmatpush1.msra.mxu0 0.0
    %1068 = vmatprep.subr.mxu0 0.0
    %1069 = vmatpush1.msra.mxu0 0.0
    %1070 = vmatprep.subr.mxu0 0.0
    %1071 = vmatpush1.msra.mxu0 0.0
    %1072 = vmatprep.subr.mxu0 0.0
    %1073 = vmatpush1.msra.mxu0 0.0
    %1074 = vmatprep.subr.mxu0 0.0
    %1075 = vmatpush1.msra.mxu0 0.0
    %1076 = vmatprep.subr.mxu0 0.0
    %1077 = vmatpush1.msra.mxu0 0.0
    %1078 = vmatprep.subr.mxu0 0.0
    %1079 = vmatpush1.msra.mxu0 0.0
    %1080 = vmatprep.subr.mxu0 0.0
    %1081 = vmatpush1.msra.mxu0 0.0
    %1082 = vmatprep.mubr.f32.mxu0 0.0
    %1083 = vmatmul.mubr.f32.gmra.mrb[0].mxu0 %v1009
    %v1084 = vpop.f32.mrb[0].mxu0
    %v1085 = vadd.f32 0.0, %v1084
    %v1086 = vpop.f32.mrb[0].mxu0
    %1087 = vmatprep.mubr.f32.mxu0 0.0
    %1088 = vmatmul.mubr.f32.gmra.mrb[0].mxu0 %v1012
    %v1089 = vpop.f32.mrb[0].mxu0
    %v1090 = vadd.f32 0.0, %v1089
    %v1091 = vpop.f32.mrb[0].mxu0
    %1092 = vdwg.mxu0
    %v1093 = vld [vmem:[%s4] sm:$0xff]
    %v1094 = vld [vmem:[%s4 + $0x8] sm:$0xff]
    %v1095 = vld [vmem:[%s4 + $0x10] sm:$0xff]
    %v1096 = vld [vmem:[%s4 + $0x18] sm:$0xff]
    %v1097 = vld [vmem:[#allocation8] sm:$0x1]
    %v1099 = vlaneseq
    %v1100 = vshrl.u32 %v1099, 7
    %v1101 = vsub.s32 0, %v1100
    %v1102 = vrot.slane %v1097, %v1101
    %v1105 = vsel %vm321, %v1085, 0
    %v1108 = vsel %vm321, %v1090, 0
    %1110 = vmatprep.subr.mxu0 0.0
    %1111 = vmatpush1.msra.mxu0 %v1093
    %1112 = vmatprep.subr.mxu0 0.0
    %1113 = vmatpush1.msra.mxu0 %v1094
    %1114 = vmatprep.subr.mxu0 0.0
    %1115 = vmatpush1.msra.mxu0 %v1095
    %1116 = vmatprep.subr.mxu0 0.0
    %1117 = vmatpush1.msra.mxu0 %v1096
    %1118 = vmatprep.subr.mxu0 0.0
    %1119 = vmatpush1.msra.mxu0 0.0
    %1120 = vmatprep.subr.mxu0 0.0
    %1121 = vmatpush1.msra.mxu0 0.0
    %1122 = vmatprep.subr.mxu0 0.0
    %1123 = vmatpush1.msra.mxu0 0.0
    %1124 = vmatprep.subr.mxu0 0.0
    %1125 = vmatpush1.msra.mxu0 0.0
    %1126 = vmatprep.subr.mxu0 0.0
    %1127 = vmatpush1.msra.mxu0 0.0
    %1128 = vmatprep.subr.mxu0 0.0
    %1129 = vmatpush1.msra.mxu0 0.0
    %1130 = vmatprep.subr.mxu0 0.0
    %1131 = vmatpush1.msra.mxu0 0.0
    %1132 = vmatprep.subr.mxu0 0.0
    %1133 = vmatpush1.msra.mxu0 0.0
    %1134 = vmatprep.subr.mxu0 0.0
    %1135 = vmatpush1.msra.mxu0 0.0
    %1136 = vmatprep.subr.mxu0 0.0
    %1137 = vmatpush1.msra.mxu0 0.0
    %1138 = vmatprep.subr.mxu0 0.0
    %1139 = vmatpush1.msra.mxu0 0.0
    %1140 = vmatprep.subr.mxu0 0.0
    %1141 = vmatpush1.msra.mxu0 0.0
    %1142 = vmatprep.subr.mxu0 0.0
    %1143 = vmatpush1.msra.mxu0 0.0
    %1144 = vmatprep.subr.mxu0 0.0
    %1145 = vmatpush1.msra.mxu0 0.0
    %1146 = vmatprep.subr.mxu0 0.0
    %1147 = vmatpush1.msra.mxu0 0.0
    %1148 = vmatprep.subr.mxu0 0.0
    %1149 = vmatpush1.msra.mxu0 0.0
    %1150 = vmatprep.subr.mxu0 0.0
    %1151 = vmatpush1.msra.mxu0 0.0
    %1152 = vmatprep.subr.mxu0 0.0
    %1153 = vmatpush1.msra.mxu0 0.0
    %1154 = vmatprep.subr.mxu0 0.0
    %1155 = vmatpush1.msra.mxu0 0.0
    %1156 = vmatprep.subr.mxu0 0.0
    %1157 = vmatpush1.msra.mxu0 0.0
    %1158 = vmatprep.subr.mxu0 0.0
    %1159 = vmatpush1.msra.mxu0 0.0
    %1160 = vmatprep.subr.mxu0 0.0
    %1161 = vmatpush1.msra.mxu0 0.0
    %1162 = vmatprep.subr.mxu0 0.0
    %1163 = vmatpush1.msra.mxu0 0.0
    %1164 = vmatprep.subr.mxu0 0.0
    %1165 = vmatpush1.msra.mxu0 0.0
    %1166 = vmatprep.subr.mxu0 0.0
    %1167 = vmatpush1.msra.mxu0 0.0
    %1168 = vmatprep.subr.mxu0 0.0
    %1169 = vmatpush1.msra.mxu0 0.0
    %1170 = vmatprep.subr.mxu0 0.0
    %1171 = vmatpush1.msra.mxu0 0.0
    %1172 = vmatprep.subr.mxu0 0.0
    %1173 = vmatpush1.msra.mxu0 0.0
    %1174 = vmatprep.mubr.f32.mxu0 0.0
    %1175 = vmatmul.mubr.f32.gmra.mrb[0].mxu0 %v1105
    %v1176 = vpop.f32.mrb[0].mxu0
    %v1177 = vadd.f32 %v1102, %v1176
    %v1178 = vpop.f32.mrb[0].mxu0
    %1179 = vmatprep.mubr.f32.mxu0 0.0
    %1180 = vmatmul.mubr.f32.gmra.mrb[0].mxu0 %v1108
    %v1181 = vpop.f32.mrb[0].mxu0
    %v1182 = vadd.f32 %v1102, %v1181
    %v1183 = vpop.f32.mrb[0].mxu0
    %1184 = vdwg.mxu0
    %v1185 = vld [vmem:[%s8] sm:$0xff]
    %v1186 = vld [vmem:[%s8 + $0x8] sm:$0xff]
    %v1187 = vld [vmem:[%s8 + $0x10] sm:$0xff]
    %v1188 = vld [vmem:[%s8 + $0x18] sm:$0xff]
    %s1189 = sld [smem:[#allocation9 + $0x1]]
    %v1190 = vstv %s1189
    %1191 = vxpose.xlu0.b32.start [1/16] %v1185, 128
    %1192 = vxpose.xlu0.b32.cont [2/16] %v1186, 128
    %1193 = vxpose.xlu0.b32.cont [3/16] %v1187, 128
    %1194 = vxpose.xlu0.b32.cont [4/16] %v1188, 128
    %1195 = vxpose.xlu0.b32.cont [5/16] 0.0, 128
    %1196 = vxpose.xlu0.b32.cont [6/16] 0.0, 128
    %1197 = vxpose.xlu0.b32.cont [7/16] 0.0, 128
    %1198 = vxpose.xlu0.b32.cont [8/16] 0.0, 128
    %1199 = vxpose.xlu0.b32.cont [9/16] 0.0, 128
    %1200 = vxpose.xlu0.b32.cont [10/16] 0.0, 128
    %1201 = vxpose.xlu0.b32.cont [11/16] 0.0, 128
    %1202 = vxpose.xlu0.b32.cont [12/16] 0.0, 128
    %1203 = vxpose.xlu0.b32.cont [13/16] 0.0, 128
    %1204 = vxpose.xlu0.b32.cont [14/16] 0.0, 128
    %1205 = vxpose.xlu0.b32.cont [15/16] 0.0, 128
    %1206 = vxpose.xlu0.b32.end [16/16] 0.0, 128
    %v1207 = vpop.trf.xlu0
    %v1208 = vpop.trf.xlu0
    %v1209 = vpop.trf.xlu0
    %v1210 = vpop.trf.xlu0
    %v1211 = vpop.trf.xlu0
    %v1212 = vpop.trf.xlu0
    %v1213 = vpop.trf.xlu0
    %v1214 = vpop.trf.xlu0
    %v1215 = vpop.trf.xlu0
    %v1216 = vpop.trf.xlu0
    %v1217 = vpop.trf.xlu0
    %v1218 = vpop.trf.xlu0
    %v1219 = vpop.trf.xlu0
    %v1220 = vpop.trf.xlu0
    %v1221 = vpop.trf.xlu0
    %v1222 = vpop.trf.xlu0
    %v1224 = vsel %vm321, %v1207, 0
    %v1227 = vsel %vm321, %v1177, 0
    %v1230 = vsel %vm321, %v1182, 0
    %1232 = vmatprep.subr.mxu0 0.0
    %1233 = vmatpush1.xpose.msra.mxu0 %v1227
    %1234 = vmatprep.subr.mxu0 0.0
    %1235 = vmatpush1.xpose.msra.mxu0 %v1230
    %1236 = vmatprep.subr.mxu0 0.0
    %1237 = vmatpush1.xpose.msra.mxu0 0.0
    %1238 = vmatprep.subr.mxu0 0.0
    %1239 = vmatpush1.xpose.msra.mxu0 0.0
    %1240 = vmatprep.subr.mxu0 0.0
    %1241 = vmatpush1.xpose.msra.mxu0 0.0
    %1242 = vmatprep.subr.mxu0 0.0
    %1243 = vmatpush1.xpose.msra.mxu0 0.0
    %1244 = vmatprep.subr.mxu0 0.0
    %1245 = vmatpush1.xpose.msra.mxu0 0.0
    %1246 = vmatprep.subr.mxu0 0.0
    %1247 = vmatpush1.xpose.msra.mxu0 0.0
    %1248 = vmatprep.subr.mxu0 0.0
    %1249 = vmatpush1.xpose.msra.mxu0 0.0
    %1250 = vmatprep.subr.mxu0 0.0
    %1251 = vmatpush1.xpose.msra.mxu0 0.0
    %1252 = vmatprep.subr.mxu0 0.0
    %1253 = vmatpush1.xpose.msra.mxu0 0.0
    %1254 = vmatprep.subr.mxu0 0.0
    %1255 = vmatpush1.xpose.msra.mxu0 0.0
    %1256 = vmatprep.subr.mxu0 0.0
    %1257 = vmatpush1.xpose.msra.mxu0 0.0
    %1258 = vmatprep.subr.mxu0 0.0
    %1259 = vmatpush1.xpose.msra.mxu0 0.0
    %1260 = vmatprep.subr.mxu0 0.0
    %1261 = vmatpush1.xpose.msra.mxu0 0.0
    %1262 = vmatprep.subr.mxu0 0.0
    %1263 = vmatpush1.xpose.msra.mxu0 0.0
    %1264 = vmatprep.subr.mxu0 0.0
    %1265 = vmatpush1.xpose.msra.mxu0 0.0
    %1266 = vmatprep.subr.mxu0 0.0
    %1267 = vmatpush1.xpose.msra.mxu0 0.0
    %1268 = vmatprep.subr.mxu0 0.0
    %1269 = vmatpush1.xpose.msra.mxu0 0.0
    %1270 = vmatprep.subr.mxu0 0.0
    %1271 = vmatpush1.xpose.msra.mxu0 0.0
    %1272 = vmatprep.subr.mxu0 0.0
    %1273 = vmatpush1.xpose.msra.mxu0 0.0
    %1274 = vmatprep.subr.mxu0 0.0
    %1275 = vmatpush1.xpose.msra.mxu0 0.0
    %1276 = vmatprep.subr.mxu0 0.0
    %1277 = vmatpush1.xpose.msra.mxu0 0.0
    %1278 = vmatprep.subr.mxu0 0.0
    %1279 = vmatpush1.xpose.msra.mxu0 0.0
    %1280 = vmatprep.subr.mxu0 0.0
    %1281 = vmatpush1.xpose.msra.mxu0 0.0
    %1282 = vmatprep.subr.mxu0 0.0
    %1283 = vmatpush1.xpose.msra.mxu0 0.0
    %1284 = vmatprep.subr.mxu0 0.0
    %1285 = vmatpush1.xpose.msra.mxu0 0.0
    %1286 = vmatprep.subr.mxu0 0.0
    %1287 = vmatpush1.xpose.msra.mxu0 0.0
    %1288 = vmatprep.subr.mxu0 0.0
    %1289 = vmatpush1.xpose.msra.mxu0 0.0
    %1290 = vmatprep.subr.mxu0 0.0
    %1291 = vmatpush1.xpose.msra.mxu0 0.0
    %1292 = vmatprep.subr.mxu0 0.0
    %1293 = vmatpush1.xpose.msra.mxu0 0.0
    %1294 = vmatprep.subr.mxu0 0.0
    %1295 = vmatpush1.xpose.msra.mxu0 0.0
    %1296 = vmatprep.mubr.f32.mxu0 0.0
    %1297 = vmatmul.mubr.f32.gmra.mrb[0].mxu0 %v1224
    %v1298 = vpop.f32.mrb[0].mxu0
    %v1299 = vadd.f32 %v1190, %v1298
    %v1300 = vpop.f32.mrb[0].mxu0
    %1301 = vdwg.mxu0
    %v1302 = vsub.f32 0.0, %v1299
    %v1303 = vmul.f32 %v1302, 1.442695
    %v1304 = vpow.pop %v1303
    %v1305 = vadd.f32 %v1304, 1.0
    %v1306 = vrcp.pop %v1305
    %v1307 = vmul.f32 1.0, %v1306
    %v1308 = vlaneseq
    %v1309 = vshrl.u32 %v1308, 7
    %v1310 = vsub.s32 0, %v1309
    %v1311 = vrot.slane %v1307, %v1310
    %v1312 = vsel %vm619, %v1311, 0.0
    %v1313 = vsel %vm620, %v1311, 0.0
    %v1314 = vsel %vm913, %v1312, 0.0
    %1315 = vadd.xlane.f32.xlu0 %v1314
    %v1316 = vpop.xlane.xlu0 %1315
    %v1317 = vsel %vm915, %v1313, 0.0
    %1318 = vadd.xlane.f32.xlu0 %v1317
    %v1319 = vpop.xlane.xlu0 %1318
    %vm1320 = vcmp.gt.f32.partialorder %v1316, %v1311
    %vm1321 = vcmp.gt.f32.partialorder %v1319, %v1311
    %vm1322 = vcmp.eq.f32.partialorder %v1316, %v1311
    %vm1323 = vcmp.eq.f32.partialorder %v1319, %v1311
    %vm1324 = vmand %vm1322, %vm637
    %vm1325 = vmand %vm1323, %vm638
    %vm1326 = vmor %vm1320, %vm1324
    %vm1327 = vmor %vm1321, %vm1325
    %v1328 = vsel %vm1326, 1.0, 0.0
    %v1329 = vsel %vm1327, 1.0, 0.0
    %v1330 = vsel %vm913, %v1328, 0.0
    %v1331 = vsel %vm915, %v1329, 0.0
    %v1332 = vadd.f32 %v1330, %v1331
    %v1333 = vrot.slane %v1332, 4
    %v1334 = vadd.f32 %v1332, %v1333
    %v1335 = vrot.slane %v1334, 2
    %v1336 = vadd.f32 %v1334, %v1335
    %v1337 = vrot.slane %v1336, 1
    %v1338 = vadd.f32 %v1336, %v1337
    %vm1339 = vcmp.eq.f32.partialorder %v654, %v1338
    %vm1340 = vcmp.eq.f32.partialorder %v655, %v1338
    %v1341 = vsel %vm1339, 1.0, 0.0
    %v1342 = vsel %vm1340, 1.0, 0.0
    %v1343 = vmul.f32 %v1341, %v1311
    %v1344 = vmul.f32 %v1342, %v1311
    %vm1345 = vcmp.ne.f32.partialorder %v925, 0.0
    %vm1346 = vcmp.ne.f32.partialorder %v926, 0.0
    %v1347 = vsel %vm1345, 1.0, 0.0
    %v1348 = vsel %vm1346, 1.0, 0.0
    %v1350 = vsel %vm913, %v1347, 0
    %v1353 = vsel %vm913, %v1348, 0
    %v1355 = vsel %vm1014, %v1348, 0
    %1357 = vmatprep.subr.mxu0 0.0
    %1358 = vmatpush1.msra.mxu0 %v1347
    %1359 = vmatprep.subr.mxu0 0.0
    %1360 = vmatpush1.msra.mxu0 %v1355
    %1361 = vmatprep.subr.mxu0 0.0
    %1362 = vmatpush1.msra.mxu0 0.0
    %1363 = vmatprep.subr.mxu0 0.0
    %1364 = vmatpush1.msra.mxu0 0.0
    %1365 = vmatprep.subr.mxu0 0.0
    %1366 = vmatpush1.msra.mxu0 0.0
    %1367 = vmatprep.subr.mxu0 0.0
    %1368 = vmatpush1.msra.mxu0 0.0
    %1369 = vmatprep.subr.mxu0 0.0
    %1370 = vmatpush1.msra.mxu0 0.0
    %1371 = vmatprep.subr.mxu0 0.0
    %1372 = vmatpush1.msra.mxu0 0.0
    %1373 = vmatprep.subr.mxu0 0.0
    %1374 = vmatpush1.msra.mxu0 0.0
    %1375 = vmatprep.subr.mxu0 0.0
    %1376 = vmatpush1.msra.mxu0 0.0
    %1377 = vmatprep.subr.mxu0 0.0
    %1378 = vmatpush1.msra.mxu0 0.0
    %1379 = vmatprep.subr.mxu0 0.0
    %1380 = vmatpush1.msra.mxu0 0.0
    %1381 = vmatprep.subr.mxu0 0.0
    %1382 = vmatpush1.msra.mxu0 0.0
    %1383 = vmatprep.subr.mxu0 0.0
    %1384 = vmatpush1.msra.mxu0 0.0
    %1385 = vmatprep.subr.mxu0 0.0
    %1386 = vmatpush1.msra.mxu0 0.0
    %1387 = vmatprep.subr.mxu0 0.0
    %1388 = vmatpush1.msra.mxu0 0.0
    %1389 = vmatprep.subr.mxu0 0.0
    %1390 = vmatpush1.msra.mxu0 0.0
    %1391 = vmatprep.subr.mxu0 0.0
    %1392 = vmatpush1.msra.mxu0 0.0
    %1393 = vmatprep.subr.mxu0 0.0
    %1394 = vmatpush1.msra.mxu0 0.0
    %1395 = vmatprep.subr.mxu0 0.0
    %1396 = vmatpush1.msra.mxu0 0.0
    %1397 = vmatprep.subr.mxu0 0.0
    %1398 = vmatpush1.msra.mxu0 0.0
    %1399 = vmatprep.subr.mxu0 0.0
    %1400 = vmatpush1.msra.mxu0 0.0
    %1401 = vmatprep.subr.mxu0 0.0
    %1402 = vmatpush1.msra.mxu0 0.0
    %1403 = vmatprep.subr.mxu0 0.0
    %1404 = vmatpush1.msra.mxu0 0.0
    %1405 = vmatprep.subr.mxu0 0.0
    %1406 = vmatpush1.msra.mxu0 0.0
    %1407 = vmatprep.subr.mxu0 0.0
    %1408 = vmatpush1.msra.mxu0 0.0
    %1409 = vmatprep.subr.mxu0 0.0
    %1410 = vmatpush1.msra.mxu0 0.0
    %1411 = vmatprep.subr.mxu0 0.0
    %1412 = vmatpush1.msra.mxu0 0.0
    %1413 = vmatprep.subr.mxu0 0.0
    %1414 = vmatpush1.msra.mxu0 0.0
    %1415 = vmatprep.subr.mxu0 0.0
    %1416 = vmatpush1.msra.mxu0 0.0
    %1417 = vmatprep.subr.mxu0 0.0
    %1418 = vmatpush1.msra.mxu0 0.0
    %1419 = vmatprep.subr.mxu0 0.0
    %1420 = vmatpush1.msra.mxu0 0.0
    %1421 = vmatprep.mubr.f32.mxu0 0.0
    %1422 = vmatmul.mubr.f32.gmra.mrb[0].mxu0 %v1350
    %v1423 = vpop.f32.mrb[0].mxu0
    %v1424 = vadd.f32 0.0, %v1423
    %v1425 = vpop.f32.mrb[0].mxu0
    %1426 = vmatprep.mubr.f32.mxu0 0.0
    %1427 = vmatmul.mubr.f32.gmra.mrb[0].mxu0 %v1353
    %v1428 = vpop.f32.mrb[0].mxu0
    %v1429 = vadd.f32 0.0, %v1428
    %v1430 = vpop.f32.mrb[0].mxu0
    %1431 = vdwg.mxu0
    %vm1432 = vcmp.ne.f32.partialorder %v1424, 0.0
    %vm1433 = vcmp.ne.f32.partialorder %v1429, 0.0
    %v1434 = vsel %vm1432, 1.0, 0.0
    %v1435 = vsel %vm1433, 1.0, 0.0
    %v1437 = vsel %vm913, %v1341, 0
    %v1440 = vsel %vm913, %v1342, 0
    %v1443 = vsel %vm1014, %v1435, 0
    %1445 = vmatprep.subr.mxu0 0.0
    %1446 = vmatpush1.msra.mxu0 %v1434
    %1447 = vmatprep.subr.mxu0 0.0
    %1448 = vmatpush1.msra.mxu0 %v1443
    %1449 = vmatprep.subr.mxu0 0.0
    %1450 = vmatpush1.msra.mxu0 0.0
    %1451 = vmatprep.subr.mxu0 0.0
    %1452 = vmatpush1.msra.mxu0 0.0
    %1453 = vmatprep.subr.mxu0 0.0
    %1454 = vmatpush1.msra.mxu0 0.0
    %1455 = vmatprep.subr.mxu0 0.0
    %1456 = vmatpush1.msra.mxu0 0.0
    %1457 = vmatprep.subr.mxu0 0.0
    %1458 = vmatpush1.msra.mxu0 0.0
    %1459 = vmatprep.subr.mxu0 0.0
    %1460 = vmatpush1.msra.mxu0 0.0
    %1461 = vmatprep.subr.mxu0 0.0
    %1462 = vmatpush1.msra.mxu0 0.0
    %1463 = vmatprep.subr.mxu0 0.0
    %1464 = vmatpush1.msra.mxu0 0.0
    %1465 = vmatprep.subr.mxu0 0.0
    %1466 = vmatpush1.msra.mxu0 0.0
    %1467 = vmatprep.subr.mxu0 0.0
    %1468 = vmatpush1.msra.mxu0 0.0
    %1469 = vmatprep.subr.mxu0 0.0
    %1470 = vmatpush1.msra.mxu0 0.0
    %1471 = vmatprep.subr.mxu0 0.0
    %1472 = vmatpush1.msra.mxu0 0.0
    %1473 = vmatprep.subr.mxu0 0.0
    %1474 = vmatpush1.msra.mxu0 0.0
    %1475 = vmatprep.subr.mxu0 0.0
    %1476 = vmatpush1.msra.mxu0 0.0
    %1477 = vmatprep.subr.mxu0 0.0
    %1478 = vmatpush1.msra.mxu0 0.0
    %1479 = vmatprep.subr.mxu0 0.0
    %1480 = vmatpush1.msra.mxu0 0.0
    %1481 = vmatprep.subr.mxu0 0.0
    %1482 = vmatpush1.msra.mxu0 0.0
    %1483 = vmatprep.subr.mxu0 0.0
    %1484 = vmatpush1.msra.mxu0 0.0
    %1485 = vmatprep.subr.mxu0 0.0
    %1486 = vmatpush1.msra.mxu0 0.0
    %1487 = vmatprep.subr.mxu0 0.0
    %1488 = vmatpush1.msra.mxu0 0.0
    %1489 = vmatprep.subr.mxu0 0.0
    %1490 = vmatpush1.msra.mxu0 0.0
    %1491 = vmatprep.subr.mxu0 0.0
    %1492 = vmatpush1.msra.mxu0 0.0
    %1493 = vmatprep.subr.mxu0 0.0
    %1494 = vmatpush1.msra.mxu0 0.0
    %1495 = vmatprep.subr.mxu0 0.0
    %1496 = vmatpush1.msra.mxu0 0.0
    %1497 = vmatprep.subr.mxu0 0.0
    %1498 = vmatpush1.msra.mxu0 0.0
    %1499 = vmatprep.subr.mxu0 0.0
    %1500 = vmatpush1.msra.mxu0 0.0
    %1501 = vmatprep.subr.mxu0 0.0
    %1502 = vmatpush1.msra.mxu0 0.0
    %1503 = vmatprep.subr.mxu0 0.0
    %1504 = vmatpush1.msra.mxu0 0.0
    %1505 = vmatprep.subr.mxu0 0.0
    %1506 = vmatpush1.msra.mxu0 0.0
    %1507 = vmatprep.subr.mxu0 0.0
    %1508 = vmatpush1.msra.mxu0 0.0
    %1509 = vmatprep.mubr.f32.mxu0 0.0
    %1510 = vmatmul.mubr.f32.gmra.mrb[0].mxu0 %v1437
    %v1511 = vpop.f32.mrb[0].mxu0
    %v1512 = vadd.f32 0.0, %v1511
    %v1513 = vpop.f32.mrb[0].mxu0
    %1514 = vmatprep.mubr.f32.mxu0 0.0
    %1515 = vmatmul.mubr.f32.gmra.mrb[0].mxu0 %v1440
    %v1516 = vpop.f32.mrb[0].mxu0
    %v1517 = vadd.f32 0.0, %v1516
    %v1518 = vpop.f32.mrb[0].mxu0
    %1519 = vdwg.mxu0
    %v1521 = vsel %vm913, %v1512, 0
    %v1524 = vsel %vm913, %v1517, 0
    %1526 = vmatprep.subr.mxu0 0.0
    %1527 = vmatpush1.xpose.msra.mxu0 %v1437
    %1528 = vmatprep.subr.mxu0 0.0
    %1529 = vmatpush1.xpose.msra.mxu0 %v1440
    %1530 = vmatprep.subr.mxu0 0.0
    %1531 = vmatpush1.xpose.msra.mxu0 0.0
    %1532 = vmatprep.subr.mxu0 0.0
    %1533 = vmatpush1.xpose.msra.mxu0 0.0
    %1534 = vmatprep.subr.mxu0 0.0
    %1535 = vmatpush1.xpose.msra.mxu0 0.0
    %1536 = vmatprep.subr.mxu0 0.0
    %1537 = vmatpush1.xpose.msra.mxu0 0.0
    %1538 = vmatprep.subr.mxu0 0.0
    %1539 = vmatpush1.xpose.msra.mxu0 0.0
    %1540 = vmatprep.subr.mxu0 0.0
    %1541 = vmatpush1.xpose.msra.mxu0 0.0
    %1542 = vmatprep.subr.mxu0 0.0
    %1543 = vmatpush1.xpose.msra.mxu0 0.0
    %1544 = vmatprep.subr.mxu0 0.0
    %1545 = vmatpush1.xpose.msra.mxu0 0.0
    %1546 = vmatprep.subr.mxu0 0.0
    %1547 = vmatpush1.xpose.msra.mxu0 0.0
    %1548 = vmatprep.subr.mxu0 0.0
    %1549 = vmatpush1.xpose.msra.mxu0 0.0
    %1550 = vmatprep.subr.mxu0 0.0
    %1551 = vmatpush1.xpose.msra.mxu0 0.0
    %1552 = vmatprep.subr.mxu0 0.0
    %1553 = vmatpush1.xpose.msra.mxu0 0.0
    %1554 = vmatprep.subr.mxu0 0.0
    %1555 = vmatpush1.xpose.msra.mxu0 0.0
    %1556 = vmatprep.subr.mxu0 0.0
    %1557 = vmatpush1.xpose.msra.mxu0 0.0
    %1558 = vmatprep.subr.mxu0 0.0
    %1559 = vmatpush1.xpose.msra.mxu0 0.0
    %1560 = vmatprep.subr.mxu0 0.0
    %1561 = vmatpush1.xpose.msra.mxu0 0.0
    %1562 = vmatprep.subr.mxu0 0.0
    %1563 = vmatpush1.xpose.msra.mxu0 0.0
    %1564 = vmatprep.subr.mxu0 0.0
    %1565 = vmatpush1.xpose.msra.mxu0 0.0
    %1566 = vmatprep.subr.mxu0 0.0
    %1567 = vmatpush1.xpose.msra.mxu0 0.0
    %1568 = vmatprep.subr.mxu0 0.0
    %1569 = vmatpush1.xpose.msra.mxu0 0.0
    %1570 = vmatprep.subr.mxu0 0.0
    %1571 = vmatpush1.xpose.msra.mxu0 0.0
    %1572 = vmatprep.subr.mxu0 0.0
    %1573 = vmatpush1.xpose.msra.mxu0 0.0
    %1574 = vmatprep.subr.mxu0 0.0
    %1575 = vmatpush1.xpose.msra.mxu0 0.0
    %1576 = vmatprep.subr.mxu0 0.0
    %1577 = vmatpush1.xpose.msra.mxu0 0.0
    %1578 = vmatprep.subr.mxu0 0.0
    %1579 = vmatpush1.xpose.msra.mxu0 0.0
    %1580 = vmatprep.subr.mxu0 0.0
    %1581 = vmatpush1.xpose.msra.mxu0 0.0
    %1582 = vmatprep.subr.mxu0 0.0
    %1583 = vmatpush1.xpose.msra.mxu0 0.0
    %1584 = vmatprep.subr.mxu0 0.0
    %1585 = vmatpush1.xpose.msra.mxu0 0.0
    %1586 = vmatprep.subr.mxu0 0.0
    %1587 = vmatpush1.xpose.msra.mxu0 0.0
    %1588 = vmatprep.subr.mxu0 0.0
    %1589 = vmatpush1.xpose.msra.mxu0 0.0
    %1590 = vmatprep.mubr.f32.mxu0 0.0
    %1591 = vmatmul.mubr.f32.gmra.mrb[0].mxu0 %v1521
    %v1592 = vpop.f32.mrb[0].mxu0
    %v1593 = vadd.f32 0.0, %v1592
    %v1594 = vpop.f32.mrb[0].mxu0
    %1595 = vmatprep.mubr.f32.mxu0 0.0
    %1596 = vmatmul.mubr.f32.gmra.mrb[0].mxu0 %v1524
    %v1597 = vpop.f32.mrb[0].mxu0
    %v1598 = vadd.f32 0.0, %v1597
    %v1599 = vpop.f32.mrb[0].mxu0
    %1600 = vdwg.mxu0
    %vm1601 = vcmask 72704
    %v1602 = vsel %vm1601, %v1593, 0.0
    %vm1603 = vcmask 65536
    %v1604 = vsel %vm1603, %v1598, 0.0
    %v1605 = vadd.f32 %v1602, %v1604
    %v1606 = vrot.slane %v1605, 4
    %v1607 = vadd.f32 %v1605, %v1606
    %v1608 = vrot.slane %v1607, 2
    %v1609 = vadd.f32 %v1607, %v1608
    %v1610 = vrot.slane %v1609, 1
    %v1611 = vadd.f32 %v1609, %v1610
    %v1612 = vrcp.pop %v1611
    %v1613 = vmul.f32 %v1593, %v1612
    %v1614 = vmul.f32 %v1598, %v1612
    %v1616 = vsel %vm913, %v1343, 0
    %v1619 = vsel %vm913, %v1344, 0
    %v1621 = vsel %vm1014, %v1182, 0
    %1623 = vmatprep.subr.mxu0 0.0
    %1624 = vmatpush1.msra.mxu0 %v1177
    %1625 = vmatprep.subr.mxu0 0.0
    %1626 = vmatpush1.msra.mxu0 %v1621
    %1627 = vmatprep.subr.mxu0 0.0
    %1628 = vmatpush1.msra.mxu0 0.0
    %1629 = vmatprep.subr.mxu0 0.0
    %1630 = vmatpush1.msra.mxu0 0.0
    %1631 = vmatprep.subr.mxu0 0.0
    %1632 = vmatpush1.msra.mxu0 0.0
    %1633 = vmatprep.subr.mxu0 0.0
    %1634 = vmatpush1.msra.mxu0 0.0
    %1635 = vmatprep.subr.mxu0 0.0
    %1636 = vmatpush1.msra.mxu0 0.0
    %1637 = vmatprep.subr.mxu0 0.0
    %1638 = vmatpush1.msra.mxu0 0.0
    %1639 = vmatprep.subr.mxu0 0.0
    %1640 = vmatpush1.msra.mxu0 0.0
    %1641 = vmatprep.subr.mxu0 0.0
    %1642 = vmatpush1.msra.mxu0 0.0
    %1643 = vmatprep.subr.mxu0 0.0
    %1644 = vmatpush1.msra.mxu0 0.0
    %1645 = vmatprep.subr.mxu0 0.0
    %1646 = vmatpush1.msra.mxu0 0.0
    %1647 = vmatprep.subr.mxu0 0.0
    %1648 = vmatpush1.msra.mxu0 0.0
    %1649 = vmatprep.subr.mxu0 0.0
    %1650 = vmatpush1.msra.mxu0 0.0
    %1651 = vmatprep.subr.mxu0 0.0
    %1652 = vmatpush1.msra.mxu0 0.0
    %1653 = vmatprep.subr.mxu0 0.0
    %1654 = vmatpush1.msra.mxu0 0.0
    %1655 = vmatprep.subr.mxu0 0.0
    %1656 = vmatpush1.msra.mxu0 0.0
    %1657 = vmatprep.subr.mxu0 0.0
    %1658 = vmatpush1.msra.mxu0 0.0
    %1659 = vmatprep.subr.mxu0 0.0
    %1660 = vmatpush1.msra.mxu0 0.0
    %1661 = vmatprep.subr.mxu0 0.0
    %1662 = vmatpush1.msra.mxu0 0.0
    %1663 = vmatprep.subr.mxu0 0.0
    %1664 = vmatpush1.msra.mxu0 0.0
    %1665 = vmatprep.subr.mxu0 0.0
    %1666 = vmatpush1.msra.mxu0 0.0
    %1667 = vmatprep.subr.mxu0 0.0
    %1668 = vmatpush1.msra.mxu0 0.0
    %1669 = vmatprep.subr.mxu0 0.0
    %1670 = vmatpush1.msra.mxu0 0.0
    %1671 = vmatprep.subr.mxu0 0.0
    %1672 = vmatpush1.msra.mxu0 0.0
    %1673 = vmatprep.subr.mxu0 0.0
    %1674 = vmatpush1.msra.mxu0 0.0
    %1675 = vmatprep.subr.mxu0 0.0
    %1676 = vmatpush1.msra.mxu0 0.0
    %1677 = vmatprep.subr.mxu0 0.0
    %1678 = vmatpush1.msra.mxu0 0.0
    %1679 = vmatprep.subr.mxu0 0.0
    %1680 = vmatpush1.msra.mxu0 0.0
    %1681 = vmatprep.subr.mxu0 0.0
    %1682 = vmatpush1.msra.mxu0 0.0
    %1683 = vmatprep.subr.mxu0 0.0
    %1684 = vmatpush1.msra.mxu0 0.0
    %1685 = vmatprep.subr.mxu0 0.0
    %1686 = vmatpush1.msra.mxu0 0.0
    %1687 = vmatprep.mubr.f32.mxu0 0.0
    %1688 = vmatmul.mubr.f32.gmra.mrb[0].mxu0 %v1616
    %v1689 = vpop.f32.mrb[0].mxu0
    %v1690 = vadd.f32 0.0, %v1689
    %v1691 = vpop.f32.mrb[0].mxu0
    %1692 = vmatprep.mubr.f32.mxu0 0.0
    %1693 = vmatmul.mubr.f32.gmra.mrb[0].mxu0 %v1619
    %v1694 = vpop.f32.mrb[0].mxu0
    %v1695 = vadd.f32 0.0, %v1694
    %v1696 = vpop.f32.mrb[0].mxu0
    %1697 = vdwg.mxu0
    %v1699 = vsel %vm1601, %v1613, 0
    %v1702 = vsel %vm1601, %v1614, 0
    %vm1704 = vcmask 1040384
    %v1706 = vsel %vm1704, %v1695, 0
    %1708 = vmatprep.subr.mxu0 0.0
    %1709 = vmatpush1.msra.mxu0 %v1690
    %1710 = vmatprep.subr.mxu0 0.0
    %1711 = vmatpush1.msra.mxu0 %v1706
    %1712 = vmatprep.subr.mxu0 0.0
    %1713 = vmatpush1.msra.mxu0 0.0
    %1714 = vmatprep.subr.mxu0 0.0
    %1715 = vmatpush1.msra.mxu0 0.0
    %1716 = vmatprep.subr.mxu0 0.0
    %1717 = vmatpush1.msra.mxu0 0.0
    %1718 = vmatprep.subr.mxu0 0.0
    %1719 = vmatpush1.msra.mxu0 0.0
    %1720 = vmatprep.subr.mxu0 0.0
    %1721 = vmatpush1.msra.mxu0 0.0
    %1722 = vmatprep.subr.mxu0 0.0
    %1723 = vmatpush1.msra.mxu0 0.0
    %1724 = vmatprep.subr.mxu0 0.0
    %1725 = vmatpush1.msra.mxu0 0.0
    %1726 = vmatprep.subr.mxu0 0.0
    %1727 = vmatpush1.msra.mxu0 0.0
    %1728 = vmatprep.subr.mxu0 0.0
    %1729 = vmatpush1.msra.mxu0 0.0
    %1730 = vmatprep.subr.mxu0 0.0
    %1731 = vmatpush1.msra.mxu0 0.0
    %1732 = vmatprep.subr.mxu0 0.0
    %1733 = vmatpush1.msra.mxu0 0.0
    %1734 = vmatprep.subr.mxu0 0.0
    %1735 = vmatpush1.msra.mxu0 0.0
    %1736 = vmatprep.subr.mxu0 0.0
    %1737 = vmatpush1.msra.mxu0 0.0
    %1738 = vmatprep.subr.mxu0 0.0
    %1739 = vmatpush1.msra.mxu0 0.0
    %1740 = vmatprep.subr.mxu0 0.0
    %1741 = vmatpush1.msra.mxu0 0.0
    %1742 = vmatprep.subr.mxu0 0.0
    %1743 = vmatpush1.msra.mxu0 0.0
    %1744 = vmatprep.subr.mxu0 0.0
    %1745 = vmatpush1.msra.mxu0 0.0
    %1746 = vmatprep.subr.mxu0 0.0
    %1747 = vmatpush1.msra.mxu0 0.0
    %1748 = vmatprep.subr.mxu0 0.0
    %1749 = vmatpush1.msra.mxu0 0.0
    %1750 = vmatprep.subr.mxu0 0.0
    %1751 = vmatpush1.msra.mxu0 0.0
    %1752 = vmatprep.subr.mxu0 0.0
    %1753 = vmatpush1.msra.mxu0 0.0
    %1754 = vmatprep.subr.mxu0 0.0
    %1755 = vmatpush1.msra.mxu0 0.0
    %1756 = vmatprep.subr.mxu0 0.0
    %1757 = vmatpush1.msra.mxu0 0.0
    %1758 = vmatprep.subr.mxu0 0.0
    %1759 = vmatpush1.msra.mxu0 0.0
    %1760 = vmatprep.subr.mxu0 0.0
    %1761 = vmatpush1.msra.mxu0 0.0
    %1762 = vmatprep.subr.mxu0 0.0
    %1763 = vmatpush1.msra.mxu0 0.0
    %1764 = vmatprep.subr.mxu0 0.0
    %1765 = vmatpush1.msra.mxu0 0.0
    %1766 = vmatprep.subr.mxu0 0.0
    %1767 = vmatpush1.msra.mxu0 0.0
    %1768 = vmatprep.subr.mxu0 0.0
    %1769 = vmatpush1.msra.mxu0 0.0
    %1770 = vmatprep.subr.mxu0 0.0
    %1771 = vmatpush1.msra.mxu0 0.0
    %1772 = vmatprep.mubr.f32.mxu0 0.0
    %1773 = vmatmul.mubr.f32.gmra.mrb[0].mxu0 %v1699
    %v1774 = vpop.f32.mrb[0].mxu0
    %v1775 = vadd.f32 0.0, %v1774
    %v1776 = vpop.f32.mrb[0].mxu0
    %1777 = vmatprep.mubr.f32.mxu0 0.0
    %1778 = vmatmul.mubr.f32.gmra.mrb[0].mxu0 %v1702
    %v1779 = vpop.f32.mrb[0].mxu0
    %v1780 = vadd.f32 0.0, %v1779
    %v1781 = vpop.f32.mrb[0].mxu0
    %1782 = vdwg.mxu0
    %v1783 = vld [vmem:[%s10] sm:$0xff]
    %v1784 = vld [vmem:[%s10 + $0x8] sm:$0xff]
    %v1785 = vld [vmem:[%s10 + $0x10] sm:$0xff]
    %v1786 = vld [vmem:[%s10 + $0x18] sm:$0xff]
    %v1787 = vld [vmem:[#allocation10] sm:$0x1]
    %v1789 = vlaneseq
    %v1790 = vshrl.u32 %v1789, 7
    %v1791 = vsub.s32 0, %v1790
    %v1792 = vrot.slane %v1787, %v1791
    %v1795 = vsel %vm321, %v1775, 0
    %v1798 = vsel %vm321, %v1780, 0
    %1800 = vmatprep.subr.mxu0 0.0
    %1801 = vmatpush1.msra.mxu0 %v1783
    %1802 = vmatprep.subr.mxu0 0.0
    %1803 = vmatpush1.msra.mxu0 %v1784
    %1804 = vmatprep.subr.mxu0 0.0
    %1805 = vmatpush1.msra.mxu0 %v1785
    %1806 = vmatprep.subr.mxu0 0.0
    %1807 = vmatpush1.msra.mxu0 %v1786
    %1808 = vmatprep.subr.mxu0 0.0
    %1809 = vmatpush1.msra.mxu0 0.0
    %1810 = vmatprep.subr.mxu0 0.0
    %1811 = vmatpush1.msra.mxu0 0.0
    %1812 = vmatprep.subr.mxu0 0.0
    %1813 = vmatpush1.msra.mxu0 0.0
    %1814 = vmatprep.subr.mxu0 0.0
    %1815 = vmatpush1.msra.mxu0 0.0
    %1816 = vmatprep.subr.mxu0 0.0
    %1817 = vmatpush1.msra.mxu0 0.0
    %1818 = vmatprep.subr.mxu0 0.0
    %1819 = vmatpush1.msra.mxu0 0.0
    %1820 = vmatprep.subr.mxu0 0.0
    %1821 = vmatpush1.msra.mxu0 0.0
    %1822 = vmatprep.subr.mxu0 0.0
    %1823 = vmatpush1.msra.mxu0 0.0
    %1824 = vmatprep.subr.mxu0 0.0
    %1825 = vmatpush1.msra.mxu0 0.0
    %1826 = vmatprep.subr.mxu0 0.0
    %1827 = vmatpush1.msra.mxu0 0.0
    %1828 = vmatprep.subr.mxu0 0.0
    %1829 = vmatpush1.msra.mxu0 0.0
    %1830 = vmatprep.subr.mxu0 0.0
    %1831 = vmatpush1.msra.mxu0 0.0
    %1832 = vmatprep.subr.mxu0 0.0
    %1833 = vmatpush1.msra.mxu0 0.0
    %1834 = vmatprep.subr.mxu0 0.0
    %1835 = vmatpush1.msra.mxu0 0.0
    %1836 = vmatprep.subr.mxu0 0.0
    %1837 = vmatpush1.msra.mxu0 0.0
    %1838 = vmatprep.subr.mxu0 0.0
    %1839 = vmatpush1.msra.mxu0 0.0
    %1840 = vmatprep.subr.mxu0 0.0
    %1841 = vmatpush1.msra.mxu0 0.0
    %1842 = vmatprep.subr.mxu0 0.0
    %1843 = vmatpush1.msra.mxu0 0.0
    %1844 = vmatprep.subr.mxu0 0.0
    %1845 = vmatpush1.msra.mxu0 0.0
    %1846 = vmatprep.subr.mxu0 0.0
    %1847 = vmatpush1.msra.mxu0 0.0
    %1848 = vmatprep.subr.mxu0 0.0
    %1849 = vmatpush1.msra.mxu0 0.0
    %1850 = vmatprep.subr.mxu0 0.0
    %1851 = vmatpush1.msra.mxu0 0.0
    %1852 = vmatprep.subr.mxu0 0.0
    %1853 = vmatpush1.msra.mxu0 0.0
    %1854 = vmatprep.subr.mxu0 0.0
    %1855 = vmatpush1.msra.mxu0 0.0
    %1856 = vmatprep.subr.mxu0 0.0
    %1857 = vmatpush1.msra.mxu0 0.0
    %1858 = vmatprep.subr.mxu0 0.0
    %1859 = vmatpush1.msra.mxu0 0.0
    %1860 = vmatprep.subr.mxu0 0.0
    %1861 = vmatpush1.msra.mxu0 0.0
    %1862 = vmatprep.subr.mxu0 0.0
    %1863 = vmatpush1.msra.mxu0 0.0
    %1864 = vmatprep.mubr.f32.mxu0 0.0
    %1865 = vmatmul.mubr.f32.gmra.mrb[0].mxu0 %v1795
    %v1866 = vpop.f32.mrb[0].mxu0
    %v1867 = vadd.f32 %v1792, %v1866
    %v1868 = vpop.f32.mrb[0].mxu0
    %1869 = vmatprep.mubr.f32.mxu0 0.0
    %1870 = vmatmul.mubr.f32.gmra.mrb[0].mxu0 %v1798
    %v1871 = vpop.f32.mrb[0].mxu0
    %v1872 = vadd.f32 %v1792, %v1871
    %v1873 = vpop.f32.mrb[0].mxu0
    %1874 = vdwg.mxu0
    %1875 = vxpose.xlu0.b32.start [1/16] %v1341, 128
    %1876 = vxpose.xlu0.b32.cont [2/16] %v1342, 128
    %1877 = vxpose.xlu0.b32.cont [3/16] 0.0, 128
    %1878 = vxpose.xlu0.b32.cont [4/16] 0.0, 128
    %1879 = vxpose.xlu0.b32.cont [5/16] 0.0, 128
    %1880 = vxpose.xlu0.b32.cont [6/16] 0.0, 128
    %1881 = vxpose.xlu0.b32.cont [7/16] 0.0, 128
    %1882 = vxpose.xlu0.b32.cont [8/16] 0.0, 128
    %1883 = vxpose.xlu0.b32.cont [9/16] 0.0, 128
    %1884 = vxpose.xlu0.b32.cont [10/16] 0.0, 128
    %1885 = vxpose.xlu0.b32.cont [11/16] 0.0, 128
    %1886 = vxpose.xlu0.b32.cont [12/16] 0.0, 128
    %1887 = vxpose.xlu0.b32.cont [13/16] 0.0, 128
    %1888 = vxpose.xlu0.b32.cont [14/16] 0.0, 128
    %1889 = vxpose.xlu0.b32.cont [15/16] 0.0, 128
    %1890 = vxpose.xlu0.b32.end [16/16] 0.0, 128
    %v1891 = vpop.trf.xlu0
    %v1892 = vpop.trf.xlu0
    %v1893 = vpop.trf.xlu0
    %v1894 = vpop.trf.xlu0
    %v1895 = vpop.trf.xlu0
    %v1896 = vpop.trf.xlu0
    %v1897 = vpop.trf.xlu0
    %v1898 = vpop.trf.xlu0
    %v1899 = vpop.trf.xlu0
    %v1900 = vpop.trf.xlu0
    %v1901 = vpop.trf.xlu0
    %v1902 = vpop.trf.xlu0
    %v1903 = vpop.trf.xlu0
    %v1904 = vpop.trf.xlu0
    %v1905 = vpop.trf.xlu0
    %v1906 = vpop.trf.xlu0
    %v1908 = vsel %vm1601, %v1891, 0
    %v1911 = vsel %vm1601, %v1892, 0
    %v1914 = vsel %vm1704, %v1872, 0
    %1916 = vmatprep.subr.mxu0 0.0
    %1917 = vmatpush1.msra.mxu0 %v1867
    %1918 = vmatprep.subr.mxu0 0.0
    %1919 = vmatpush1.msra.mxu0 %v1914
    %1920 = vmatprep.subr.mxu0 0.0
    %1921 = vmatpush1.msra.mxu0 0.0
    %1922 = vmatprep.subr.mxu0 0.0
    %1923 = vmatpush1.msra.mxu0 0.0
    %1924 = vmatprep.subr.mxu0 0.0
    %1925 = vmatpush1.msra.mxu0 0.0
    %1926 = vmatprep.subr.mxu0 0.0
    %1927 = vmatpush1.msra.mxu0 0.0
    %1928 = vmatprep.subr.mxu0 0.0
    %1929 = vmatpush1.msra.mxu0 0.0
    %1930 = vmatprep.subr.mxu0 0.0
    %1931 = vmatpush1.msra.mxu0 0.0
    %1932 = vmatprep.subr.mxu0 0.0
    %1933 = vmatpush1.msra.mxu0 0.0
    %1934 = vmatprep.subr.mxu0 0.0
    %1935 = vmatpush1.msra.mxu0 0.0
    %1936 = vmatprep.subr.mxu0 0.0
    %1937 = vmatpush1.msra.mxu0 0.0
    %1938 = vmatprep.subr.mxu0 0.0
    %1939 = vmatpush1.msra.mxu0 0.0
    %1940 = vmatprep.subr.mxu0 0.0
    %1941 = vmatpush1.msra.mxu0 0.0
    %1942 = vmatprep.subr.mxu0 0.0
    %1943 = vmatpush1.msra.mxu0 0.0
    %1944 = vmatprep.subr.mxu0 0.0
    %1945 = vmatpush1.msra.mxu0 0.0
    %1946 = vmatprep.subr.mxu0 0.0
    %1947 = vmatpush1.msra.mxu0 0.0
    %1948 = vmatprep.subr.mxu0 0.0
    %1949 = vmatpush1.msra.mxu0 0.0
    %1950 = vmatprep.subr.mxu0 0.0
    %1951 = vmatpush1.msra.mxu0 0.0
    %1952 = vmatprep.subr.mxu0 0.0
    %1953 = vmatpush1.msra.mxu0 0.0
    %1954 = vmatprep.subr.mxu0 0.0
    %1955 = vmatpush1.msra.mxu0 0.0
    %1956 = vmatprep.subr.mxu0 0.0
    %1957 = vmatpush1.msra.mxu0 0.0
    %1958 = vmatprep.subr.mxu0 0.0
    %1959 = vmatpush1.msra.mxu0 0.0
    %1960 = vmatprep.subr.mxu0 0.0
    %1961 = vmatpush1.msra.mxu0 0.0
    %1962 = vmatprep.subr.mxu0 0.0
    %1963 = vmatpush1.msra.mxu0 0.0
    %1964 = vmatprep.subr.mxu0 0.0
    %1965 = vmatpush1.msra.mxu0 0.0
    %1966 = vmatprep.subr.mxu0 0.0
    %1967 = vmatpush1.msra.mxu0 0.0
    %1968 = vmatprep.subr.mxu0 0.0
    %1969 = vmatpush1.msra.mxu0 0.0
    %1970 = vmatprep.subr.mxu0 0.0
    %1971 = vmatpush1.msra.mxu0 0.0
    %1972 = vmatprep.subr.mxu0 0.0
    %1973 = vmatpush1.msra.mxu0 0.0
    %1974 = vmatprep.subr.mxu0 0.0
    %1975 = vmatpush1.msra.mxu0 0.0
    %1976 = vmatprep.subr.mxu0 0.0
    %1977 = vmatpush1.msra.mxu0 0.0
    %1978 = vmatprep.subr.mxu0 0.0
    %1979 = vmatpush1.msra.mxu0 0.0
    %1980 = vmatprep.mubr.f32.mxu0 0.0
    %1981 = vmatmul.mubr.f32.gmra.mrb[0].mxu0 %v1908
    %v1982 = vpop.f32.mrb[0].mxu0
    %v1983 = vadd.f32 0.0, %v1982
    %v1984 = vpop.f32.mrb[0].mxu0
    %1985 = vmatprep.mubr.f32.mxu0 0.0
    %1986 = vmatmul.mubr.f32.gmra.mrb[0].mxu0 %v1911
    %v1987 = vpop.f32.mrb[0].mxu0
    %v1988 = vadd.f32 0.0, %v1987
    %v1989 = vpop.f32.mrb[0].mxu0
    %1990 = vdwg.mxu0
    %v1992 = vsel %vm1014, %v1988, 0
    %1994 = vmatprep.subr.mxu0 0.0
    %1995 = vmatpush1.msra.mxu0 %v1983
    %1996 = vmatprep.subr.mxu0 0.0
    %1997 = vmatpush1.msra.mxu0 %v1992
    %1998 = vmatprep.subr.mxu0 0.0
    %1999 = vmatpush1.msra.mxu0 0.0
    %2000 = vmatprep.subr.mxu0 0.0
    %2001 = vmatpush1.msra.mxu0 0.0
    %2002 = vmatprep.subr.mxu0 0.0
    %2003 = vmatpush1.msra.mxu0 0.0
    %2004 = vmatprep.subr.mxu0 0.0
    %2005 = vmatpush1.msra.mxu0 0.0
    %2006 = vmatprep.subr.mxu0 0.0
    %2007 = vmatpush1.msra.mxu0 0.0
    %2008 = vmatprep.subr.mxu0 0.0
    %2009 = vmatpush1.msra.mxu0 0.0
    %2010 = vmatprep.subr.mxu0 0.0
    %2011 = vmatpush1.msra.mxu0 0.0
    %2012 = vmatprep.subr.mxu0 0.0
    %2013 = vmatpush1.msra.mxu0 0.0
    %2014 = vmatprep.subr.mxu0 0.0
    %2015 = vmatpush1.msra.mxu0 0.0
    %2016 = vmatprep.subr.mxu0 0.0
    %2017 = vmatpush1.msra.mxu0 0.0
    %2018 = vmatprep.subr.mxu0 0.0
    %2019 = vmatpush1.msra.mxu0 0.0
    %2020 = vmatprep.subr.mxu0 0.0
    %2021 = vmatpush1.msra.mxu0 0.0
    %2022 = vmatprep.subr.mxu0 0.0
    %2023 = vmatpush1.msra.mxu0 0.0
    %2024 = vmatprep.subr.mxu0 0.0
    %2025 = vmatpush1.msra.mxu0 0.0
    %2026 = vmatprep.subr.mxu0 0.0
    %2027 = vmatpush1.msra.mxu0 0.0
    %2028 = vmatprep.subr.mxu0 0.0
    %2029 = vmatpush1.msra.mxu0 0.0
    %2030 = vmatprep.subr.mxu0 0.0
    %2031 = vmatpush1.msra.mxu0 0.0
    %2032 = vmatprep.subr.mxu0 0.0
    %2033 = vmatpush1.msra.mxu0 0.0
    %2034 = vmatprep.subr.mxu0 0.0
    %2035 = vmatpush1.msra.mxu0 0.0
    %2036 = vmatprep.subr.mxu0 0.0
    %2037 = vmatpush1.msra.mxu0 0.0
    %2038 = vmatprep.subr.mxu0 0.0
    %2039 = vmatpush1.msra.mxu0 0.0
    %2040 = vmatprep.subr.mxu0 0.0
    %2041 = vmatpush1.msra.mxu0 0.0
    %2042 = vmatprep.subr.mxu0 0.0
    %2043 = vmatpush1.msra.mxu0 0.0
    %2044 = vmatprep.subr.mxu0 0.0
    %2045 = vmatpush1.msra.mxu0 0.0
    %2046 = vmatprep.subr.mxu0 0.0
    %2047 = vmatpush1.msra.mxu0 0.0
    %2048 = vmatprep.subr.mxu0 0.0
    %2049 = vmatpush1.msra.mxu0 0.0
    %2050 = vmatprep.subr.mxu0 0.0
    %2051 = vmatpush1.msra.mxu0 0.0
    %2052 = vmatprep.subr.mxu0 0.0
    %2053 = vmatpush1.msra.mxu0 0.0
    %2054 = vmatprep.subr.mxu0 0.0
    %2055 = vmatpush1.msra.mxu0 0.0
    %2056 = vmatprep.subr.mxu0 0.0
    %2057 = vmatpush1.msra.mxu0 0.0
    %2058 = vmatprep.mubr.f32.mxu0 0.0
    %2059 = vmatmul.mubr.f32.gmra.mrb[0].mxu0 %v1009
    %v2060 = vpop.f32.mrb[0].mxu0
    %v2061 = vadd.f32 0.0, %v2060
    %v2062 = vpop.f32.mrb[0].mxu0
    %2063 = vmatprep.mubr.f32.mxu0 0.0
    %2064 = vmatmul.mubr.f32.gmra.mrb[0].mxu0 %v1012
    %v2065 = vpop.f32.mrb[0].mxu0
    %v2066 = vadd.f32 0.0, %v2065
    %v2067 = vpop.f32.mrb[0].mxu0
    %2068 = vdwg.mxu0
    %v2069 = vld [vmem:[%s12] sm:$0xff]
    %v2070 = vld [vmem:[%s12 + $0x8] sm:$0xff]
    %v2071 = vld [vmem:[%s12 + $0x10] sm:$0xff]
    %v2072 = vld [vmem:[%s12 + $0x18] sm:$0xff]
    %v2073 = vld [vmem:[%s14] sm:$0x1]
    %v2075 = vlaneseq
    %v2076 = vshrl.u32 %v2075, 7
    %v2077 = vsub.s32 0, %v2076
    %v2078 = vrot.slane %v2073, %v2077
    %v2081 = vsel %vm321, %v2061, 0
    %v2084 = vsel %vm321, %v2066, 0
    %2086 = vmatprep.subr.mxu0 0.0
    %2087 = vmatpush1.msra.mxu0 %v2069
    %2088 = vmatprep.subr.mxu0 0.0
    %2089 = vmatpush1.msra.mxu0 %v2070
    %2090 = vmatprep.subr.mxu0 0.0
    %2091 = vmatpush1.msra.mxu0 %v2071
    %2092 = vmatprep.subr.mxu0 0.0
    %2093 = vmatpush1.msra.mxu0 %v2072
    %2094 = vmatprep.subr.mxu0 0.0
    %2095 = vmatpush1.msra.mxu0 0.0
    %2096 = vmatprep.subr.mxu0 0.0
    %2097 = vmatpush1.msra.mxu0 0.0
    %2098 = vmatprep.subr.mxu0 0.0
    %2099 = vmatpush1.msra.mxu0 0.0
    %2100 = vmatprep.subr.mxu0 0.0
    %2101 = vmatpush1.msra.mxu0 0.0
    %2102 = vmatprep.subr.mxu0 0.0
    %2103 = vmatpush1.msra.mxu0 0.0
    %2104 = vmatprep.subr.mxu0 0.0
    %2105 = vmatpush1.msra.mxu0 0.0
    %2106 = vmatprep.subr.mxu0 0.0
    %2107 = vmatpush1.msra.mxu0 0.0
    %2108 = vmatprep.subr.mxu0 0.0
    %2109 = vmatpush1.msra.mxu0 0.0
    %2110 = vmatprep.subr.mxu0 0.0
    %2111 = vmatpush1.msra.mxu0 0.0
    %2112 = vmatprep.subr.mxu0 0.0
    %2113 = vmatpush1.msra.mxu0 0.0
    %2114 = vmatprep.subr.mxu0 0.0
    %2115 = vmatpush1.msra.mxu0 0.0
    %2116 = vmatprep.subr.mxu0 0.0
    %2117 = vmatpush1.msra.mxu0 0.0
    %2118 = vmatprep.subr.mxu0 0.0
    %2119 = vmatpush1.msra.mxu0 0.0
    %2120 = vmatprep.subr.mxu0 0.0
    %2121 = vmatpush1.msra.mxu0 0.0
    %2122 = vmatprep.subr.mxu0 0.0
    %2123 = vmatpush1.msra.mxu0 0.0
    %2124 = vmatprep.subr.mxu0 0.0
    %2125 = vmatpush1.msra.mxu0 0.0
    %2126 = vmatprep.subr.mxu0 0.0
    %2127 = vmatpush1.msra.mxu0 0.0
    %2128 = vmatprep.subr.mxu0 0.0
    %2129 = vmatpush1.msra.mxu0 0.0
    %2130 = vmatprep.subr.mxu0 0.0
    %2131 = vmatpush1.msra.mxu0 0.0
    %2132 = vmatprep.subr.mxu0 0.0
    %2133 = vmatpush1.msra.mxu0 0.0
    %2134 = vmatprep.subr.mxu0 0.0
    %2135 = vmatpush1.msra.mxu0 0.0
    %2136 = vmatprep.subr.mxu0 0.0
    %2137 = vmatpush1.msra.mxu0 0.0
    %2138 = vmatprep.subr.mxu0 0.0
    %2139 = vmatpush1.msra.mxu0 0.0
    %2140 = vmatprep.subr.mxu0 0.0
    %2141 = vmatpush1.msra.mxu0 0.0
    %2142 = vmatprep.subr.mxu0 0.0
    %2143 = vmatpush1.msra.mxu0 0.0
    %2144 = vmatprep.subr.mxu0 0.0
    %2145 = vmatpush1.msra.mxu0 0.0
    %2146 = vmatprep.subr.mxu0 0.0
    %2147 = vmatpush1.msra.mxu0 0.0
    %2148 = vmatprep.subr.mxu0 0.0
    %2149 = vmatpush1.msra.mxu0 0.0
    %2150 = vmatprep.mubr.f32.mxu0 0.0
    %2151 = vmatmul.mubr.f32.gmra.mrb[0].mxu0 %v2081
    %v2152 = vpop.f32.mrb[0].mxu0
    %v2153 = vadd.f32 %v2078, %v2152
    %v2154 = vpop.f32.mrb[0].mxu0
    %2155 = vmatprep.mubr.f32.mxu0 0.0
    %2156 = vmatmul.mubr.f32.gmra.mrb[0].mxu0 %v2084
    %v2157 = vpop.f32.mrb[0].mxu0
    %v2158 = vadd.f32 %v2078, %v2157
    %v2159 = vpop.f32.mrb[0].mxu0
    %2160 = vdwg.mxu0
    %v2161 = vadd.f32 %v2153, %v1177
    %v2162 = vadd.f32 %v2158, %v1182
    %2163 = vxpose.xlu0.b32.start [1/16] %v658, 128
    %2164 = vxpose.xlu0.b32.cont [2/16] %v659, 128
    %2165 = vxpose.xlu0.b32.cont [3/16] 0.0, 128
    %2166 = vxpose.xlu0.b32.cont [4/16] 0.0, 128
    %2167 = vxpose.xlu0.b32.cont [5/16] 0.0, 128
    %2168 = vxpose.xlu0.b32.cont [6/16] 0.0, 128
    %2169 = vxpose.xlu0.b32.cont [7/16] 0.0, 128
    %2170 = vxpose.xlu0.b32.cont [8/16] 0.0, 128
    %2171 = vxpose.xlu0.b32.cont [9/16] 0.0, 128
    %2172 = vxpose.xlu0.b32.cont [10/16] 0.0, 128
    %2173 = vxpose.xlu0.b32.cont [11/16] 0.0, 128
    %2174 = vxpose.xlu0.b32.cont [12/16] 0.0, 128
    %2175 = vxpose.xlu0.b32.cont [13/16] 0.0, 128
    %2176 = vxpose.xlu0.b32.cont [14/16] 0.0, 128
    %2177 = vxpose.xlu0.b32.cont [15/16] 0.0, 128
    %2178 = vxpose.xlu0.b32.end [16/16] 0.0, 128
    %v2179 = vpop.trf.xlu0
    %v2180 = vpop.trf.xlu0
    %v2181 = vpop.trf.xlu0
    %v2182 = vpop.trf.xlu0
    %v2183 = vpop.trf.xlu0
    %v2184 = vpop.trf.xlu0
    %v2185 = vpop.trf.xlu0
    %v2186 = vpop.trf.xlu0
    %v2187 = vpop.trf.xlu0
    %v2188 = vpop.trf.xlu0
    %v2189 = vpop.trf.xlu0
    %v2190 = vpop.trf.xlu0
    %v2191 = vpop.trf.xlu0
    %v2192 = vpop.trf.xlu0
    %v2193 = vpop.trf.xlu0
    %v2194 = vpop.trf.xlu0
    %v2196 = vsel %vm913, %v2179, 0
    %v2199 = vsel %vm913, %v2180, 0
    %v2202 = vsel %vm1014, %v2162, 0
    %2204 = vmatprep.subr.mxu0 0.0
    %2205 = vmatpush1.msra.mxu0 %v2161
    %2206 = vmatprep.subr.mxu0 0.0
    %2207 = vmatpush1.msra.mxu0 %v2202
    %2208 = vmatprep.subr.mxu0 0.0
    %2209 = vmatpush1.msra.mxu0 0.0
    %2210 = vmatprep.subr.mxu0 0.0
    %2211 = vmatpush1.msra.mxu0 0.0
    %2212 = vmatprep.subr.mxu0 0.0
    %2213 = vmatpush1.msra.mxu0 0.0
    %2214 = vmatprep.subr.mxu0 0.0
    %2215 = vmatpush1.msra.mxu0 0.0
    %2216 = vmatprep.subr.mxu0 0.0
    %2217 = vmatpush1.msra.mxu0 0.0
    %2218 = vmatprep.subr.mxu0 0.0
    %2219 = vmatpush1.msra.mxu0 0.0
    %2220 = vmatprep.subr.mxu0 0.0
    %2221 = vmatpush1.msra.mxu0 0.0
    %2222 = vmatprep.subr.mxu0 0.0
    %2223 = vmatpush1.msra.mxu0 0.0
    %2224 = vmatprep.subr.mxu0 0.0
    %2225 = vmatpush1.msra.mxu0 0.0
    %2226 = vmatprep.subr.mxu0 0.0
    %2227 = vmatpush1.msra.mxu0 0.0
    %2228 = vmatprep.subr.mxu0 0.0
    %2229 = vmatpush1.msra.mxu0 0.0
    %2230 = vmatprep.subr.mxu0 0.0
    %2231 = vmatpush1.msra.mxu0 0.0
    %2232 = vmatprep.subr.mxu0 0.0
    %2233 = vmatpush1.msra.mxu0 0.0
    %2234 = vmatprep.subr.mxu0 0.0
    %2235 = vmatpush1.msra.mxu0 0.0
    %2236 = vmatprep.subr.mxu0 0.0
    %2237 = vmatpush1.msra.mxu0 0.0
    %2238 = vmatprep.subr.mxu0 0.0
    %2239 = vmatpush1.msra.mxu0 0.0
    %2240 = vmatprep.subr.mxu0 0.0
    %2241 = vmatpush1.msra.mxu0 0.0
    %2242 = vmatprep.subr.mxu0 0.0
    %2243 = vmatpush1.msra.mxu0 0.0
    %2244 = vmatprep.subr.mxu0 0.0
    %2245 = vmatpush1.msra.mxu0 0.0
    %2246 = vmatprep.subr.mxu0 0.0
    %2247 = vmatpush1.msra.mxu0 0.0
    %2248 = vmatprep.subr.mxu0 0.0
    %2249 = vmatpush1.msra.mxu0 0.0
    %2250 = vmatprep.subr.mxu0 0.0
    %2251 = vmatpush1.msra.mxu0 0.0
    %2252 = vmatprep.subr.mxu0 0.0
    %2253 = vmatpush1.msra.mxu0 0.0
    %2254 = vmatprep.subr.mxu0 0.0
    %2255 = vmatpush1.msra.mxu0 0.0
    %2256 = vmatprep.subr.mxu0 0.0
    %2257 = vmatpush1.msra.mxu0 0.0
    %2258 = vmatprep.subr.mxu0 0.0
    %2259 = vmatpush1.msra.mxu0 0.0
    %2260 = vmatprep.subr.mxu0 0.0
    %2261 = vmatpush1.msra.mxu0 0.0
    %2262 = vmatprep.subr.mxu0 0.0
    %2263 = vmatpush1.msra.mxu0 0.0
    %2264 = vmatprep.subr.mxu0 0.0
    %2265 = vmatpush1.msra.mxu0 0.0
    %2266 = vmatprep.subr.mxu0 0.0
    %2267 = vmatpush1.msra.mxu0 0.0
    %2268 = vmatprep.mubr.f32.mxu0 0.0
    %2269 = vmatmul.mubr.f32.gmra.mrb[0].mxu0 %v2196
    %v2270 = vpop.f32.mrb[0].mxu0
    %v2271 = vadd.f32 0.0, %v2270
    %v2272 = vpop.f32.mrb[0].mxu0
    %2273 = vmatprep.mubr.f32.mxu0 0.0
    %2274 = vmatmul.mubr.f32.gmra.mrb[0].mxu0 %v2199
    %v2275 = vpop.f32.mrb[0].mxu0
    %v2276 = vadd.f32 0.0, %v2275
    %v2277 = vpop.f32.mrb[0].mxu0
    %2278 = vdwg.mxu0
    %2279 = vmatprep.subr.mxu0 0.0
    %2280 = vmatpush1.msra.mxu0 %v2271
    %2281 = vmatprep.subr.mxu0 0.0
    %2282 = vmatpush1.msra.mxu0 %v2276
    %2283 = vmatprep.subr.mxu0 0.0
    %2284 = vmatpush1.msra.mxu0 0.0
    %2285 = vmatprep.subr.mxu0 0.0
    %2286 = vmatpush1.msra.mxu0 0.0
    %2287 = vmatprep.subr.mxu0 0.0
    %2288 = vmatpush1.msra.mxu0 0.0
    %2289 = vmatprep.subr.mxu0 0.0
    %2290 = vmatpush1.msra.mxu0 0.0
    %2291 = vmatprep.subr.mxu0 0.0
    %2292 = vmatpush1.msra.mxu0 0.0
    %2293 = vmatprep.subr.mxu0 0.0
    %2294 = vmatpush1.msra.mxu0 0.0
    %2295 = vmatprep.subr.mxu0 0.0
    %2296 = vmatpush1.msra.mxu0 0.0
    %2297 = vmatprep.subr.mxu0 0.0
    %2298 = vmatpush1.msra.mxu0 0.0
    %2299 = vmatprep.subr.mxu0 0.0
    %2300 = vmatpush1.msra.mxu0 0.0
    %2301 = vmatprep.subr.mxu0 0.0
    %2302 = vmatpush1.msra.mxu0 0.0
    %2303 = vmatprep.subr.mxu0 0.0
    %2304 = vmatpush1.msra.mxu0 0.0
    %2305 = vmatprep.subr.mxu0 0.0
    %2306 = vmatpush1.msra.mxu0 0.0
    %2307 = vmatprep.subr.mxu0 0.0
    %2308 = vmatpush1.msra.mxu0 0.0
    %2309 = vmatprep.subr.mxu0 0.0
    %2310 = vmatpush1.msra.mxu0 0.0
    %2311 = vmatprep.subr.mxu0 0.0
    %2312 = vmatpush1.msra.mxu0 0.0
    %2313 = vmatprep.subr.mxu0 0.0
    %2314 = vmatpush1.msra.mxu0 0.0
    %2315 = vmatprep.subr.mxu0 0.0
    %2316 = vmatpush1.msra.mxu0 0.0
    %2317 = vmatprep.subr.mxu0 0.0
    %2318 = vmatpush1.msra.mxu0 0.0
    %2319 = vmatprep.subr.mxu0 0.0
    %2320 = vmatpush1.msra.mxu0 0.0
    %2321 = vmatprep.subr.mxu0 0.0
    %2322 = vmatpush1.msra.mxu0 0.0
    %2323 = vmatprep.subr.mxu0 0.0
    %2324 = vmatpush1.msra.mxu0 0.0
    %2325 = vmatprep.subr.mxu0 0.0
    %2326 = vmatpush1.msra.mxu0 0.0
    %2327 = vmatprep.subr.mxu0 0.0
    %2328 = vmatpush1.msra.mxu0 0.0
    %2329 = vmatprep.subr.mxu0 0.0
    %2330 = vmatpush1.msra.mxu0 0.0
    %2331 = vmatprep.subr.mxu0 0.0
    %2332 = vmatpush1.msra.mxu0 0.0
    %2333 = vmatprep.subr.mxu0 0.0
    %2334 = vmatpush1.msra.mxu0 0.0
    %2335 = vmatprep.subr.mxu0 0.0
    %2336 = vmatpush1.msra.mxu0 0.0
    %2337 = vmatprep.subr.mxu0 0.0
    %2338 = vmatpush1.msra.mxu0 0.0
    %2339 = vmatprep.subr.mxu0 0.0
    %2340 = vmatpush1.msra.mxu0 0.0
    %2341 = vmatprep.subr.mxu0 0.0
    %2342 = vmatpush1.msra.mxu0 0.0
    %2343 = vmatprep.mubr.f32.mxu0 0.0
    %2344 = vmatmul.mubr.f32.gmra.mrb[0].mxu0 %v241
    %v2345 = vpop.f32.mrb[0].mxu0
    %v2346 = vadd.f32 0.0, %v2345
    %v2347 = vpop.f32.mrb[0].mxu0
    %2348 = vmatprep.mubr.f32.mxu0 0.0
    %2349 = vmatmul.mubr.f32.gmra.mrb[0].mxu0 %v244
    %v2350 = vpop.f32.mrb[0].mxu0
    %v2351 = vadd.f32 0.0, %v2350
    %v2352 = vpop.f32.mrb[0].mxu0
    %2353 = vdwg.mxu0
    %v2354 = vld [vmem:[%s13] sm:$0xff]
    %v2355 = vld [vmem:[%s13 + $0x8] sm:$0xff]
    %v2356 = vld [vmem:[%s13 + $0x10] sm:$0xff]
    %v2357 = vld [vmem:[%s13 + $0x18] sm:$0xff]
    %v2358 = vld [vmem:[#allocation12] sm:$0x1]
    %v2360 = vlaneseq
    %v2361 = vshrl.u32 %v2360, 7
    %v2362 = vsub.s32 0, %v2361
    %v2363 = vrot.slane %v2358, %v2362
    %v2366 = vsel %vm321, %v2346, 0
    %v2369 = vsel %vm321, %v2351, 0
    %2371 = vmatprep.subr.mxu0 0.0
    %2372 = vmatpush1.msra.mxu0 %v2354
    %2373 = vmatprep.subr.mxu0 0.0
    %2374 = vmatpush1.msra.mxu0 %v2355
    %2375 = vmatprep.subr.mxu0 0.0
    %2376 = vmatpush1.msra.mxu0 %v2356
    %2377 = vmatprep.subr.mxu0 0.0
    %2378 = vmatpush1.msra.mxu0 %v2357
    %2379 = vmatprep.subr.mxu0 0.0
    %2380 = vmatpush1.msra.mxu0 0.0
    %2381 = vmatprep.subr.mxu0 0.0
    %2382 = vmatpush1.msra.mxu0 0.0
    %2383 = vmatprep.subr.mxu0 0.0
    %2384 = vmatpush1.msra.mxu0 0.0
    %2385 = vmatprep.subr.mxu0 0.0
    %2386 = vmatpush1.msra.mxu0 0.0
    %2387 = vmatprep.subr.mxu0 0.0
    %2388 = vmatpush1.msra.mxu0 0.0
    %2389 = vmatprep.subr.mxu0 0.0
    %2390 = vmatpush1.msra.mxu0 0.0
    %2391 = vmatprep.subr.mxu0 0.0
    %2392 = vmatpush1.msra.mxu0 0.0
    %2393 = vmatprep.subr.mxu0 0.0
    %2394 = vmatpush1.msra.mxu0 0.0
    %2395 = vmatprep.subr.mxu0 0.0
    %2396 = vmatpush1.msra.mxu0 0.0
    %2397 = vmatprep.subr.mxu0 0.0
    %2398 = vmatpush1.msra.mxu0 0.0
    %2399 = vmatprep.subr.mxu0 0.0
    %2400 = vmatpush1.msra.mxu0 0.0
    %2401 = vmatprep.subr.mxu0 0.0
    %2402 = vmatpush1.msra.mxu0 0.0
    %2403 = vmatprep.subr.mxu0 0.0
    %2404 = vmatpush1.msra.mxu0 0.0
    %2405 = vmatprep.subr.mxu0 0.0
    %2406 = vmatpush1.msra.mxu0 0.0
    %2407 = vmatprep.subr.mxu0 0.0
    %2408 = vmatpush1.msra.mxu0 0.0
    %2409 = vmatprep.subr.mxu0 0.0
    %2410 = vmatpush1.msra.mxu0 0.0
    %2411 = vmatprep.subr.mxu0 0.0
    %2412 = vmatpush1.msra.mxu0 0.0
    %2413 = vmatprep.subr.mxu0 0.0
    %2414 = vmatpush1.msra.mxu0 0.0
    %2415 = vmatprep.subr.mxu0 0.0
    %2416 = vmatpush1.msra.mxu0 0.0
    %2417 = vmatprep.subr.mxu0 0.0
    %2418 = vmatpush1.msra.mxu0 0.0
    %2419 = vmatprep.subr.mxu0 0.0
    %2420 = vmatpush1.msra.mxu0 0.0
    %2421 = vmatprep.subr.mxu0 0.0
    %2422 = vmatpush1.msra.mxu0 0.0
    %2423 = vmatprep.subr.mxu0 0.0
    %2424 = vmatpush1.msra.mxu0 0.0
    %2425 = vmatprep.subr.mxu0 0.0
    %2426 = vmatpush1.msra.mxu0 0.0
    %2427 = vmatprep.subr.mxu0 0.0
    %2428 = vmatpush1.msra.mxu0 0.0
    %2429 = vmatprep.subr.mxu0 0.0
    %2430 = vmatpush1.msra.mxu0 0.0
    %2431 = vmatprep.subr.mxu0 0.0
    %2432 = vmatpush1.msra.mxu0 0.0
    %2433 = vmatprep.subr.mxu0 0.0
    %2434 = vmatpush1.msra.mxu0 0.0
    %2435 = vmatprep.mubr.f32.mxu0 0.0
    %2436 = vmatmul.mubr.f32.gmra.mrb[0].mxu0 %v2366
    %v2437 = vpop.f32.mrb[0].mxu0
    %v2438 = vadd.f32 %v2363, %v2437
    %v2439 = vpop.f32.mrb[0].mxu0
    %2440 = vmatprep.mubr.f32.mxu0 0.0
    %2441 = vmatmul.mubr.f32.gmra.mrb[0].mxu0 %v2369
    %v2442 = vpop.f32.mrb[0].mxu0
    %v2443 = vadd.f32 %v2363, %v2442
    %v2444 = vpop.f32.mrb[0].mxu0
    %2445 = vdwg.mxu0
    %v2446 = vadd.f32 %v2438, %v483
    %v2447 = vadd.f32 %v2443, %v488
    %2448 = vmatprep.subr.mxu0 0.0
    %2449 = vmatpush1.msra.mxu0 %v2446
    %2450 = vmatprep.subr.mxu0 0.0
    %2451 = vmatpush1.msra.mxu0 %v2447
    %2452 = vmatprep.subr.mxu0 0.0
    %2453 = vmatpush1.msra.mxu0 0.0
    %2454 = vmatprep.subr.mxu0 0.0
    %2455 = vmatpush1.msra.mxu0 0.0
    %2456 = vmatprep.subr.mxu0 0.0
    %2457 = vmatpush1.msra.mxu0 0.0
    %2458 = vmatprep.subr.mxu0 0.0
    %2459 = vmatpush1.msra.mxu0 0.0
    %2460 = vmatprep.subr.mxu0 0.0
    %2461 = vmatpush1.msra.mxu0 0.0
    %2462 = vmatprep.subr.mxu0 0.0
    %2463 = vmatpush1.msra.mxu0 0.0
    %2464 = vmatprep.subr.mxu0 0.0
    %2465 = vmatpush1.msra.mxu0 0.0
    %2466 = vmatprep.subr.mxu0 0.0
    %2467 = vmatpush1.msra.mxu0 0.0
    %2468 = vmatprep.subr.mxu0 0.0
    %2469 = vmatpush1.msra.mxu0 0.0
    %2470 = vmatprep.subr.mxu0 0.0
    %2471 = vmatpush1.msra.mxu0 0.0
    %2472 = vmatprep.subr.mxu0 0.0
    %2473 = vmatpush1.msra.mxu0 0.0
    %2474 = vmatprep.subr.mxu0 0.0
    %2475 = vmatpush1.msra.mxu0 0.0
    %2476 = vmatprep.subr.mxu0 0.0
    %2477 = vmatpush1.msra.mxu0 0.0
    %2478 = vmatprep.subr.mxu0 0.0
    %2479 = vmatpush1.msra.mxu0 0.0
    %2480 = vmatprep.subr.mxu0 0.0
    %2481 = vmatpush1.msra.mxu0 0.0
    %2482 = vmatprep.subr.mxu0 0.0
    %2483 = vmatpush1.msra.mxu0 0.0
    %2484 = vmatprep.subr.mxu0 0.0
    %2485 = vmatpush1.msra.mxu0 0.0
    %2486 = vmatprep.subr.mxu0 0.0
    %2487 = vmatpush1.msra.mxu0 0.0
    %2488 = vmatprep.subr.mxu0 0.0
    %2489 = vmatpush1.msra.mxu0 0.0
    %2490 = vmatprep.subr.mxu0 0.0
    %2491 = vmatpush1.msra.mxu0 0.0
    %2492 = vmatprep.subr.mxu0 0.0
    %2493 = vmatpush1.msra.mxu0 0.0
    %2494 = vmatprep.subr.mxu0 0.0
    %2495 = vmatpush1.msra.mxu0 0.0
    %2496 = vmatprep.subr.mxu0 0.0
    %2497 = vmatpush1.msra.mxu0 0.0
    %2498 = vmatprep.subr.mxu0 0.0
    %2499 = vmatpush1.msra.mxu0 0.0
    %2500 = vmatprep.subr.mxu0 0.0
    %2501 = vmatpush1.msra.mxu0 0.0
    %2502 = vmatprep.subr.mxu0 0.0
    %2503 = vmatpush1.msra.mxu0 0.0
    %2504 = vmatprep.subr.mxu0 0.0
    %2505 = vmatpush1.msra.mxu0 0.0
    %2506 = vmatprep.subr.mxu0 0.0
    %2507 = vmatpush1.msra.mxu0 0.0
    %2508 = vmatprep.subr.mxu0 0.0
    %2509 = vmatpush1.msra.mxu0 0.0
    %2510 = vmatprep.subr.mxu0 0.0
    %2511 = vmatpush1.msra.mxu0 0.0
    %2512 = vmatprep.mubr.f32.mxu0 0.0
    %2513 = vmatmul.mubr.f32.gmra.mrb[0].mxu0 %v241
    %v2514 = vpop.f32.mrb[0].mxu0
    %v2515 = vadd.f32 0.0, %v2514
    %v2516 = vpop.f32.mrb[0].mxu0
    %2517 = vmatprep.mubr.f32.mxu0 0.0
    %2518 = vmatmul.mubr.f32.gmra.mrb[0].mxu0 %v244
    %v2519 = vpop.f32.mrb[0].mxu0
    %v2520 = vadd.f32 0.0, %v2519
    %v2521 = vpop.f32.mrb[0].mxu0
    %2522 = vdwg.mxu0
    %v2523 = vld [vmem:[#allocation13] sm:$0xff]
    %v2524 = vld [vmem:[#allocation13 + $0x8] sm:$0xff]
    %v2525 = vld [vmem:[#allocation13 + $0x10] sm:$0xff]
    %v2526 = vld [vmem:[#allocation13 + $0x18] sm:$0xff]
    %v2527 = vld [vmem:[#allocation15] sm:$0xff]
    %v2528 = vld [vmem:[#allocation15 + $0x8] sm:$0xff]
    %v2529 = vld [vmem:[#allocation15 + $0x10] sm:$0xff]
    %v2530 = vld [vmem:[#allocation15 + $0x18] sm:$0xff]
    %2531 = vmatprep.subr.mxu0 0.0
    %2532 = vmatpush1.msra.mxu0 %v2527
    %2533 = vmatprep.subr.mxu0 0.0
    %2534 = vmatpush1.msra.mxu0 %v2528
    %2535 = vmatprep.subr.mxu0 0.0
    %2536 = vmatpush1.msra.mxu0 %v2529
    %2537 = vmatprep.subr.mxu0 0.0
    %2538 = vmatpush1.msra.mxu0 %v2530
    %2539 = vmatprep.subr.mxu0 0.0
    %2540 = vmatpush1.msra.mxu0 0.0
    %2541 = vmatprep.subr.mxu0 0.0
    %2542 = vmatpush1.msra.mxu0 0.0
    %2543 = vmatprep.subr.mxu0 0.0
    %2544 = vmatpush1.msra.mxu0 0.0
    %2545 = vmatprep.subr.mxu0 0.0
    %2546 = vmatpush1.msra.mxu0 0.0
    %2547 = vmatprep.subr.mxu0 0.0
    %2548 = vmatpush1.msra.mxu0 0.0
    %2549 = vmatprep.subr.mxu0 0.0
    %2550 = vmatpush1.msra.mxu0 0.0
    %2551 = vmatprep.subr.mxu0 0.0
    %2552 = vmatpush1.msra.mxu0 0.0
    %2553 = vmatprep.subr.mxu0 0.0
    %2554 = vmatpush1.msra.mxu0 0.0
    %2555 = vmatprep.subr.mxu0 0.0
    %2556 = vmatpush1.msra.mxu0 0.0
    %2557 = vmatprep.subr.mxu0 0.0
    %2558 = vmatpush1.msra.mxu0 0.0
    %2559 = vmatprep.subr.mxu0 0.0
    %2560 = vmatpush1.msra.mxu0 0.0
    %2561 = vmatprep.subr.mxu0 0.0
    %2562 = vmatpush1.msra.mxu0 0.0
    %2563 = vmatprep.subr.mxu0 0.0
    %2564 = vmatpush1.msra.mxu0 0.0
    %2565 = vmatprep.subr.mxu0 0.0
    %2566 = vmatpush1.msra.mxu0 0.0
    %2567 = vmatprep.subr.mxu0 0.0
    %2568 = vmatpush1.msra.mxu0 0.0
    %2569 = vmatprep.subr.mxu0 0.0
    %2570 = vmatpush1.msra.mxu0 0.0
    %2571 = vmatprep.subr.mxu0 0.0
    %2572 = vmatpush1.msra.mxu0 0.0
    %2573 = vmatprep.subr.mxu0 0.0
    %2574 = vmatpush1.msra.mxu0 0.0
    %2575 = vmatprep.subr.mxu0 0.0
    %2576 = vmatpush1.msra.mxu0 0.0
    %2577 = vmatprep.subr.mxu0 0.0
    %2578 = vmatpush1.msra.mxu0 0.0
    %2579 = vmatprep.subr.mxu0 0.0
    %2580 = vmatpush1.msra.mxu0 0.0
    %2581 = vmatprep.subr.mxu0 0.0
    %2582 = vmatpush1.msra.mxu0 0.0
    %2583 = vmatprep.subr.mxu0 0.0
    %2584 = vmatpush1.msra.mxu0 0.0
    %2585 = vmatprep.subr.mxu0 0.0
    %2586 = vmatpush1.msra.mxu0 0.0
    %2587 = vmatprep.subr.mxu0 0.0
    %2588 = vmatpush1.msra.mxu0 0.0
    %2589 = vmatprep.subr.mxu0 0.0
    %2590 = vmatpush1.msra.mxu0 0.0
    %2591 = vmatprep.subr.mxu0 0.0
    %2592 = vmatpush1.msra.mxu0 0.0
    %2593 = vmatprep.subr.mxu0 0.0
    %2594 = vmatpush1.msra.mxu0 0.0
    %2595 = vmatprep.mubr.f32.mxu0 0.0
    %2596 = vmatmul.mubr.f32.gmra.mrb[0].mxu0 %v411
    %v2597 = vpop.f32.mrb[0].mxu0
    %v2598 = vadd.f32 0.0, %v2597
    %v2599 = vpop.f32.mrb[0].mxu0
    %2600 = vmatprep.mubr.f32.mxu0 0.0
    %2601 = vmatmul.mubr.f32.gmra.mrb[0].mxu0 %v414
    %v2602 = vpop.f32.mrb[0].mxu0
    %v2603 = vadd.f32 0.0, %v2602
    %v2604 = vpop.f32.mrb[0].mxu0
    %2605 = vdwg.mxu0
    %v2607 = vsel %vm321, %v2515, 0
    %v2610 = vsel %vm321, %v2520, 0
    %2612 = vmatprep.subr.mxu0 0.0
    %2613 = vmatpush1.msra.mxu0 %v2523
    %2614 = vmatprep.subr.mxu0 0.0
    %2615 = vmatpush1.msra.mxu0 %v2524
    %2616 = vmatprep.subr.mxu0 0.0
    %2617 = vmatpush1.msra.mxu0 %v2525
    %2618 = vmatprep.subr.mxu0 0.0
    %2619 = vmatpush1.msra.mxu0 %v2526
    %2620 = vmatprep.subr.mxu0 0.0
    %2621 = vmatpush1.msra.mxu0 0.0
    %2622 = vmatprep.subr.mxu0 0.0
    %2623 = vmatpush1.msra.mxu0 0.0
    %2624 = vmatprep.subr.mxu0 0.0
    %2625 = vmatpush1.msra.mxu0 0.0
    %2626 = vmatprep.subr.mxu0 0.0
    %2627 = vmatpush1.msra.mxu0 0.0
    %2628 = vmatprep.subr.mxu0 0.0
    %2629 = vmatpush1.msra.mxu0 0.0
    %2630 = vmatprep.subr.mxu0 0.0
    %2631 = vmatpush1.msra.mxu0 0.0
    %2632 = vmatprep.subr.mxu0 0.0
    %2633 = vmatpush1.msra.mxu0 0.0
    %2634 = vmatprep.subr.mxu0 0.0
    %2635 = vmatpush1.msra.mxu0 0.0
    %2636 = vmatprep.subr.mxu0 0.0
    %2637 = vmatpush1.msra.mxu0 0.0
    %2638 = vmatprep.subr.mxu0 0.0
    %2639 = vmatpush1.msra.mxu0 0.0
    %2640 = vmatprep.subr.mxu0 0.0
    %2641 = vmatpush1.msra.mxu0 0.0
    %2642 = vmatprep.subr.mxu0 0.0
    %2643 = vmatpush1.msra.mxu0 0.0
    %2644 = vmatprep.subr.mxu0 0.0
    %2645 = vmatpush1.msra.mxu0 0.0
    %2646 = vmatprep.subr.mxu0 0.0
    %2647 = vmatpush1.msra.mxu0 0.0
    %2648 = vmatprep.subr.mxu0 0.0
    %2649 = vmatpush1.msra.mxu0 0.0
    %2650 = vmatprep.subr.mxu0 0.0
    %2651 = vmatpush1.msra.mxu0 0.0
    %2652 = vmatprep.subr.mxu0 0.0
    %2653 = vmatpush1.msra.mxu0 0.0
    %2654 = vmatprep.subr.mxu0 0.0
    %2655 = vmatpush1.msra.mxu0 0.0
    %2656 = vmatprep.subr.mxu0 0.0
    %2657 = vmatpush1.msra.mxu0 0.0
    %2658 = vmatprep.subr.mxu0 0.0
    %2659 = vmatpush1.msra.mxu0 0.0
    %2660 = vmatprep.subr.mxu0 0.0
    %2661 = vmatpush1.msra.mxu0 0.0
    %2662 = vmatprep.subr.mxu0 0.0
    %2663 = vmatpush1.msra.mxu0 0.0
    %2664 = vmatprep.subr.mxu0 0.0
    %2665 = vmatpush1.msra.mxu0 0.0
    %2666 = vmatprep.subr.mxu0 0.0
    %2667 = vmatpush1.msra.mxu0 0.0
    %2668 = vmatprep.subr.mxu0 0.0
    %2669 = vmatpush1.msra.mxu0 0.0
    %2670 = vmatprep.subr.mxu0 0.0
    %2671 = vmatpush1.msra.mxu0 0.0
    %2672 = vmatprep.subr.mxu0 0.0
    %2673 = vmatpush1.msra.mxu0 0.0
    %2674 = vmatprep.subr.mxu0 0.0
    %2675 = vmatpush1.msra.mxu0 0.0
    %2676 = vmatprep.mubr.f32.mxu0 0.0
    %2677 = vmatmul.mubr.f32.gmra.mrb[0].mxu0 %v2607
    %v2678 = vpop.f32.mrb[0].mxu0
    %v2679 = vadd.f32 %v2598, %v2678
    %v2680 = vpop.f32.mrb[0].mxu0
    %2681 = vmatprep.mubr.f32.mxu0 0.0
    %2682 = vmatmul.mubr.f32.gmra.mrb[0].mxu0 %v2610
    %v2683 = vpop.f32.mrb[0].mxu0
    %v2684 = vadd.f32 %v2603, %v2683
    %v2685 = vpop.f32.mrb[0].mxu0
    %2686 = vdwg.mxu0
    %v2687 = vld [vmem:[#allocation16] sm:$0x1]
    %v2689 = vlaneseq
    %v2690 = vshrl.u32 %v2689, 7
    %v2691 = vsub.s32 0, %v2690
    %v2692 = vrot.slane %v2687, %v2691
    %v2694 = vadd.f32 %v2679, %v2692
    %v2695 = vadd.f32 %v2684, %v2692
    %2696 = vst.msk [vmem:[%s21] sm:$0xff] %vm321, %v2694
    %2697 = vst.msk [vmem:[%s21 + $0x8] sm:$0xff] %vm321, %v2695
    // Predicated region
    $region114: #{gsrnet_forward.2} parent=1 // pred_check
      _
    $region115: #{gsrnet_forward.2} parent=1 // pred_check_branch
      %2699 = sbr.rel (0) target = $region117
    $region116: #{gsrnet_forward.2} parent=1 // pred_region
      _
    $region117: #{gsrnet_forward.2} parent=1 // pred_fallthru
      _
    // Predicated region
    $region118: #{gsrnet_forward.2} parent=1 // pred_check
      _
    $region119: #{gsrnet_forward.2} parent=1 // pred_check_branch
      %2701 = sbr.rel (0) target = $region121
    $region120: #{gsrnet_forward.2} parent=1 // pred_region
      %s2703 = ssub.s32 256, 256
      %2704 = vsyncadd [#allocation4], %s2703
      %s2705 = sshll.u32 [#allocation18], 4
      %s2706 = int_to_ptr.vmem [resolvable:$true] %s2705
      %2711 = dma.vmem_to_hbm [thread:$0]  %s2706, 256, %s20, [#allocation4], 128, 128, 8
    $region121: #{gsrnet_forward.2} parent=1 // pred_fallthru
      _
    // Predicated region
    $region122: #{gsrnet_forward.2} parent=1 // pred_check
      _
    $region123: #{gsrnet_forward.2} parent=1 // pred_check_branch
      %2713 = sbr.rel (0) target = $region125
    $region124: #{gsrnet_forward.2} parent=1 // pred_region
      _
    $region125: #{gsrnet_forward.2} parent=1 // pred_fallthru
      _
    // Predicated region
    $region126: #{gsrnet_forward.2} parent=1 // pred_check
      _
    $region127: #{gsrnet_forward.2} parent=1 // pred_check_branch
      %2715 = sbr.rel (0) target = $region129
    $region128: #{gsrnet_forward.2} parent=1 // pred_region
      _
    $region129: #{gsrnet_forward.2} parent=1 // pred_fallthru
      _
    // Predicated region
    $region130: #{gsrnet_forward.2} parent=1 // pred_check
      _
    $region131: #{gsrnet_forward.2} parent=1 // pred_check_branch
      %2717 = sbr.rel (0) target = $region133
    $region132: #{gsrnet_forward.2} parent=1 // pred_region
      %2718 = dma.done [#allocation4], 256
    $region133: #{gsrnet_forward.2} parent=1 // pred_fallthru
      _
    // Predicated region
    $region134: #{gsrnet_forward.2} parent=1 // pred_check
      _
    $region135: #{gsrnet_forward.2} parent=1 // pred_check_branch
      %2720 = sbr.rel (0) target = $region137
    $region136: #{gsrnet_forward.2} parent=1 // pred_region
      _
    $region137: #{gsrnet_forward.2} parent=1 // pred_fallthru
      _
    %2721 = vsyncpa [#allocation3], 1
    %2722 = vsyncpa [#allocation7], 1
    %2723 = vsyncpa [#allocation11], 1
    %2724 = vsyncpa [#allocation14], 1
    %2725 = vsyncpa [#allocation17], 1
    %2726 = vsyncpa [#allocation4], 1
    %2727 = vsyncpa [#allocation5], 1

</llo_original>
